<compile_context>
chip_gen: v7x
topology: tpu7x:2x2x1
jax: 0.10.0
libtpu: 0.0.40
codegen_flags: <defaults>
</compile_context>

<pallas_src>
import functools
import math

import jax
import jax.numpy as jnp
from jax.experimental import pallas as pl
from jax.experimental.pallas import tpu as pltpu

LN_EPS = 1e-5
NEG_INF = -1e20


def _decoder_unit_kernel(
    x_ref, mask1_ref, mask2_ref,
    wqkv1_ref, bqkv1_ref, wo1_ref, bo1_ref,
    wqkv2_ref, bqkv2_ref, wo2_ref, bo2_ref,
    g1_ref, be1_ref, g2_ref, be2_ref, g3_ref, be3_ref,
    wf1_ref, bf1_ref, wf2_ref, bf2_ref,
    out_ref,
    *, n_heads, head_dim, scale,
):
    x = x_ref[...]                      # (S, D): one batch element

    def layer_norm(h, gamma, beta):
        mu = jnp.mean(h, axis=-1, keepdims=True)
        hc = h - mu
        var = jnp.mean(hc * hc, axis=-1, keepdims=True)
        return hc * jax.lax.rsqrt(var + LN_EPS) * gamma + beta

    def mha(h, wqkv, bqkv, wo, bo, msk):
        s_len, d_model = h.shape
        qkv = jnp.dot(h, wqkv, preferred_element_type=jnp.float32) + bqkv   # (S, 3D)
        q = qkv[:, :d_model]
        k = qkv[:, d_model:2 * d_model]
        v = qkv[:, 2 * d_model:]
        acc = jnp.zeros((s_len, d_model), jnp.float32)
        for hh in range(n_heads):           # static unroll over heads
            lo = hh * head_dim
            hi = lo + head_dim
            qh, kh, vh = q[:, lo:hi], k[:, lo:hi], v[:, lo:hi]
            # scores = q @ k^T  (contract last dims; no explicit transpose)
            s = jax.lax.dot_general(
                qh, kh, (((1,), (1,)), ((), ())),
                preferred_element_type=jnp.float32) * scale
            s = jnp.where(msk == 0.0, jnp.float32(NEG_INF), s)
            s = s - jnp.max(s, axis=-1, keepdims=True)
            p = jnp.exp(s)
            w = p / jnp.sum(p, axis=-1, keepdims=True)
            oh = jnp.dot(w, vh, preferred_element_type=jnp.float32)          # (S, hd)
            # concat(heads) @ Wo  ==  sum_h  o_h @ Wo[h*hd:(h+1)*hd, :]
            acc = acc + jnp.dot(oh, wo[lo:hi, :],
                                preferred_element_type=jnp.float32)
        return acc + bo

    # self-attention (+ residual, norm1); dropout == identity (eval mode)
    sa = mha(x, wqkv1_ref[...], bqkv1_ref[...], wo1_ref[...], bo1_ref[...],
             mask1_ref[...])
    h1 = layer_norm(sa + x, g1_ref[...], be1_ref[...])

    # "enc-dec" attention: the module attends norm1_out with itself (src_mask)
    ca = mha(h1, wqkv2_ref[...], bqkv2_ref[...], wo2_ref[...], bo2_ref[...],
             mask2_ref[...])
    h2 = layer_norm(ca + h1, g2_ref[...], be2_ref[...])

    # feed-forward (+ residual, norm3)
    f = jnp.dot(h2, wf1_ref[...], preferred_element_type=jnp.float32) + bf1_ref[...]
    f = jnp.maximum(f, 0.0)
    f = jnp.dot(f, wf2_ref[...], preferred_element_type=jnp.float32) + bf2_ref[...]
    h3 = layer_norm(f + h2, g3_ref[...], be3_ref[...])

    out_ref[...] = h3.astype(out_ref.dtype)


def decoder_unit_forward(x, enc_output, tgt_mask, params, src_mask=None):
    """x: (B,S,D) f32, tgt_mask: (S,S) 0/1 -> (B,S,D) f32."""
    del enc_output  # the reference module's forward never uses it
    B, S, D = x.shape
    n_heads = params["n_heads"]
    head_dim = D // n_heads
    scale = 1.0 / math.sqrt(float(D))

    mask1 = tgt_mask.astype(jnp.float32)
    # mask=None <=> nothing masked; an all-ones mask is exactly equivalent.
    mask2 = (src_mask if src_mask is not None
             else jnp.ones((S, S), jnp.float32)).astype(jnp.float32)

    weights = [
        params["wqkv1"], params["bqkv1"], params["wo1"], params["bo1"],
        params["wqkv2"], params["bqkv2"], params["wo2"], params["bo2"],
        params["g1"], params["beta1"], params["g2"], params["beta2"],
        params["g3"], params["beta3"],
        params["wf1"], params["bf1"], params["wf2"], params["bf2"],
    ]

    def full2d(a):
        return pl.BlockSpec(a.shape, lambda b: (0, 0))

    kernel = functools.partial(
        _decoder_unit_kernel, n_heads=n_heads, head_dim=head_dim, scale=scale)

    out = pl.pallas_call(
        kernel,
        out_shape=jax.ShapeDtypeStruct((B, S, D), x.dtype),
        grid_spec=pltpu.PrefetchScalarGridSpec(
            num_scalar_prefetch=0,
            grid=(B,),
            in_specs=[
                pl.BlockSpec((None, S, D), lambda b: (b, 0, 0)),  # x row
                full2d(mask1), full2d(mask2),
            ] + [full2d(w) for w in weights],
            out_specs=pl.BlockSpec((None, S, D), lambda b: (b, 0, 0)),
        ),
        compiler_params=pltpu.CompilerParams(
            dimension_semantics=("parallel",),
            vmem_limit_bytes=32 * 1024 * 1024,
        ),
    )(x, mask1, mask2, *weights)
    return out


# ----------------------------- pure-JAX reference -----------------------------
def _layer_norm_ref(h, gamma, beta):
    mu = jnp.mean(h, axis=-1, keepdims=True)
    hc = h - mu
    var = jnp.mean(hc * hc, axis=-1, keepdims=True)
    return hc * jax.lax.rsqrt(var + LN_EPS) * gamma + beta


def _mha_ref(h, wqkv, bqkv, wo, bo, mask, n_heads):
    d = h.shape[-1]
    hd = d // n_heads
    scale = 1.0 / math.sqrt(float(d))
    qkv = h @ wqkv + bqkv
    q, k, v = qkv[..., :d], qkv[..., d:2 * d], qkv[..., 2 * d:]
    outs = []
    for i in range(n_heads):
        lo, hi = i * hd, (i + 1) * hd
        s = jnp.einsum("bqd,bkd->bqk", q[..., lo:hi], k[..., lo:hi]) * scale
        if mask is not None:
            s = jnp.where(mask == 0.0, NEG_INF, s)
        w = jax.nn.softmax(s, axis=-1)
        outs.append(jnp.einsum("bqk,bkd->bqd", w, v[..., lo:hi]))
    return jnp.concatenate(outs, axis=-1) @ wo + bo


def decoder_unit_ref(x, enc_output, tgt_mask, params, src_mask=None):
    del enc_output
    nh = params["n_heads"]
    sa = _mha_ref(x, params["wqkv1"], params["bqkv1"], params["wo1"],
                  params["bo1"], tgt_mask, nh)
    h1 = _layer_norm_ref(sa + x, params["g1"], params["beta1"])
    ca = _mha_ref(h1, params["wqkv2"], params["bqkv2"], params["wo2"],
                  params["bo2"], src_mask, nh)
    h2 = _layer_norm_ref(ca + h1, params["g2"], params["beta2"])
    f = jax.nn.relu(h2 @ params["wf1"] + params["bf1"]) @ params["wf2"] + params["bf2"]
    return _layer_norm_ref(f + h2, params["g3"], params["beta3"])


def init_params(key, d_model, n_heads, expansion_factor):
    hidden = expansion_factor * d_model
    keys = jax.random.split(key, 18)

    def linear(kw, kb, fan_in, fan_out):
        bound = 1.0 / math.sqrt(float(fan_in))
        w = jax.random.uniform(kw, (fan_in, fan_out), jnp.float32, -bound, bound)
        b = jax.random.uniform(kb, (1, fan_out), jnp.float32, -bound, bound)
        return w, b

    wqkv1, bqkv1 = linear(keys[0], keys[1], d_model, 3 * d_model)
    wo1, bo1 = linear(keys[2], keys[3], d_model, d_model)
    wqkv2, bqkv2 = linear(keys[4], keys[5], d_model, 3 * d_model)
    wo2, bo2 = linear(keys[6], keys[7], d_model, d_model)
    wf1, bf1 = linear(keys[8], keys[9], d_model, hidden)
    wf2, bf2 = linear(keys[10], keys[11], hidden, d_model)

    def ln(kg, kb):
        g = 1.0 + 0.1 * jax.random.normal(kg, (1, d_model), jnp.float32)
        b = 0.1 * jax.random.normal(kb, (1, d_model), jnp.float32)
        return g, b

    g1, beta1 = ln(keys[12], keys[13])
    g2, beta2 = ln(keys[14], keys[15])
    g3, beta3 = ln(keys[16], keys[17])

    return dict(n_heads=n_heads,
                wqkv1=wqkv1, bqkv1=bqkv1, wo1=wo1, bo1=bo1,
                wqkv2=wqkv2, bqkv2=bqkv2, wo2=wo2, bo2=bo2,
                g1=g1, beta1=beta1, g2=g2, beta2=beta2, g3=g3, beta3=beta3,
                wf1=wf1, bf1=bf1, wf2=wf2, bf2=bf2)


if __name__ == "__main__":
    embedding_dim, n_heads, expansion_factor = 32, 4, 4
    B, S = 2, 8

    key = jax.random.PRNGKey(0)
    k_par, k_x, k_enc = jax.random.split(key, 3)
    params = init_params(k_par, embedding_dim, n_heads, expansion_factor)

    x = jax.random.normal(k_x, (B, S, embedding_dim), jnp.float32)
    enc_output = jax.random.normal(k_enc, (B, S, embedding_dim), jnp.float32)
    tgt_mask = jnp.tril(jnp.ones((S, S), jnp.float32))   # causal mask

    # TODO(synk): dropout (p=0.2) is implemented as inference-mode identity.
    out = decoder_unit_forward(x, enc_output, tgt_mask, params)
    out = jax.block_until_ready(out)

    ref = decoder_unit_ref(x, enc_output, tgt_mask, params)
    assert out.shape == (B, S, embedding_dim)
    assert out.dtype == jnp.float32
    assert bool(jnp.all(jnp.isfinite(out)))
    # Tolerance covers MXU f32 pass-decomposition differences between the
    # Pallas matmuls and XLA's reference matmuls.
    assert jnp.allclose(out, ref, rtol=2e-2, atol=2e-2), \
        "Pallas DecoderUnit mismatch vs reference"

    print("KERNEL_OK")
</pallas_src>

<mosaic_0001>
module attributes {stable_mosaic.version = 11 : i64} {
  func.func @_decoder_unit_kernel(%arg0: i32, %arg1: memref<1x8x32xf32, #tpu.memory_space<vmem>>, %arg2: memref<8x8xf32, #tpu.memory_space<vmem>>, %arg3: memref<8x8xf32, #tpu.memory_space<vmem>>, %arg4: memref<32x96xf32, #tpu.memory_space<vmem>>, %arg5: memref<1x96xf32, #tpu.memory_space<vmem>>, %arg6: memref<32x32xf32, #tpu.memory_space<vmem>>, %arg7: memref<1x32xf32, #tpu.memory_space<vmem>>, %arg8: memref<32x96xf32, #tpu.memory_space<vmem>>, %arg9: memref<1x96xf32, #tpu.memory_space<vmem>>, %arg10: memref<32x32xf32, #tpu.memory_space<vmem>>, %arg11: memref<1x32xf32, #tpu.memory_space<vmem>>, %arg12: memref<1x32xf32, #tpu.memory_space<vmem>>, %arg13: memref<1x32xf32, #tpu.memory_space<vmem>>, %arg14: memref<1x32xf32, #tpu.memory_space<vmem>>, %arg15: memref<1x32xf32, #tpu.memory_space<vmem>>, %arg16: memref<1x32xf32, #tpu.memory_space<vmem>>, %arg17: memref<1x32xf32, #tpu.memory_space<vmem>>, %arg18: memref<32x128xf32, #tpu.memory_space<vmem>>, %arg19: memref<1x128xf32, #tpu.memory_space<vmem>>, %arg20: memref<128x32xf32, #tpu.memory_space<vmem>>, %arg21: memref<1x32xf32, #tpu.memory_space<vmem>>, %arg22: memref<1x8x32xf32, #tpu.memory_space<vmem>>) attributes {dimension_semantics = [#tpu.dimension_semantics<parallel>], iteration_bounds = array<i64: 2>, scalar_prefetch = 0 : i64, scratch_operands = 0 : i64, tpu.core_type = #tpu.core_type<tc>, window_params = [{transform_indices = @transform_0, window_bounds = array<i64: 1, 8, 32>}, {pipeline_mode = #tpu.pipeline_mode<synchronous>, transform_indices = @transform_1, window_bounds = array<i64: 8, 8>}, {pipeline_mode = #tpu.pipeline_mode<synchronous>, transform_indices = @transform_2, window_bounds = array<i64: 8, 8>}, {pipeline_mode = #tpu.pipeline_mode<synchronous>, transform_indices = @transform_3, window_bounds = array<i64: 32, 96>}, {pipeline_mode = #tpu.pipeline_mode<synchronous>, transform_indices = @transform_4, window_bounds = array<i64: 1, 96>}, {pipeline_mode = #tpu.pipeline_mode<synchronous>, transform_indices = @transform_5, window_bounds = array<i64: 32, 32>}, {pipeline_mode = #tpu.pipeline_mode<synchronous>, transform_indices = @transform_6, window_bounds = array<i64: 1, 32>}, {pipeline_mode = #tpu.pipeline_mode<synchronous>, transform_indices = @transform_7, window_bounds = array<i64: 32, 96>}, {pipeline_mode = #tpu.pipeline_mode<synchronous>, transform_indices = @transform_8, window_bounds = array<i64: 1, 96>}, {pipeline_mode = #tpu.pipeline_mode<synchronous>, transform_indices = @transform_9, window_bounds = array<i64: 32, 32>}, {pipeline_mode = #tpu.pipeline_mode<synchronous>, transform_indices = @transform_10, window_bounds = array<i64: 1, 32>}, {pipeline_mode = #tpu.pipeline_mode<synchronous>, transform_indices = @transform_11, window_bounds = array<i64: 1, 32>}, {pipeline_mode = #tpu.pipeline_mode<synchronous>, transform_indices = @transform_12, window_bounds = array<i64: 1, 32>}, {pipeline_mode = #tpu.pipeline_mode<synchronous>, transform_indices = @transform_13, window_bounds = array<i64: 1, 32>}, {pipeline_mode = #tpu.pipeline_mode<synchronous>, transform_indices = @transform_14, window_bounds = array<i64: 1, 32>}, {pipeline_mode = #tpu.pipeline_mode<synchronous>, transform_indices = @transform_15, window_bounds = array<i64: 1, 32>}, {pipeline_mode = #tpu.pipeline_mode<synchronous>, transform_indices = @transform_16, window_bounds = array<i64: 1, 32>}, {pipeline_mode = #tpu.pipeline_mode<synchronous>, transform_indices = @transform_17, window_bounds = array<i64: 32, 128>}, {pipeline_mode = #tpu.pipeline_mode<synchronous>, transform_indices = @transform_18, window_bounds = array<i64: 1, 128>}, {pipeline_mode = #tpu.pipeline_mode<synchronous>, transform_indices = @transform_19, window_bounds = array<i64: 128, 32>}, {pipeline_mode = #tpu.pipeline_mode<synchronous>, transform_indices = @transform_20, window_bounds = array<i64: 1, 32>}, {transform_indices = @transform_21, window_bounds = array<i64: 1, 8, 32>}]} {
    %c0 = arith.constant 0 : index
    %c0_0 = arith.constant 0 : index
    %c0_1 = arith.constant 0 : index
    %0 = vector.load %arg1[%c0, %c0_0, %c0_1] : memref<1x8x32xf32, #tpu.memory_space<vmem>>, vector<1x8x32xf32>
    %1 = vector.shape_cast %0 : vector<1x8x32xf32> to vector<8x32xf32>
    %c0_2 = arith.constant 0 : index
    %c0_3 = arith.constant 0 : index
    %2 = vector.load %arg4[%c0_2, %c0_3] : memref<32x96xf32, #tpu.memory_space<vmem>>, vector<32x96xf32>
    %c0_4 = arith.constant 0 : index
    %c0_5 = arith.constant 0 : index
    %3 = vector.load %arg5[%c0_4, %c0_5] : memref<1x96xf32, #tpu.memory_space<vmem>>, vector<1x96xf32>
    %c0_6 = arith.constant 0 : index
    %c0_7 = arith.constant 0 : index
    %4 = vector.load %arg6[%c0_6, %c0_7] : memref<32x32xf32, #tpu.memory_space<vmem>>, vector<32x32xf32>
    %c0_8 = arith.constant 0 : index
    %c0_9 = arith.constant 0 : index
    %5 = vector.load %arg7[%c0_8, %c0_9] : memref<1x32xf32, #tpu.memory_space<vmem>>, vector<1x32xf32>
    %c0_10 = arith.constant 0 : index
    %c0_11 = arith.constant 0 : index
    %6 = vector.load %arg2[%c0_10, %c0_11] : memref<8x8xf32, #tpu.memory_space<vmem>>, vector<8x8xf32>
    %cst = arith.constant dense<0.000000e+00> : vector<8x96xf32>
    %7 = tpu.matmul %1, %2, %cst {dimension_numbers = #tpu.dot_dimension_numbers<[1], [0], [0], [1], [0, 0, 1, 1], [], []>} : vector<8x32xf32>, vector<32x96xf32>, vector<8x96xf32> -> vector<8x96xf32>
    %8 = vector.broadcast %3 : vector<1x96xf32> to vector<8x96xf32>
    %9 = arith.addf %7, %8 : vector<8x96xf32>
    %10 = vector.extract_strided_slice %9 {offsets = [0, 0], sizes = [8, 32], strides = [1, 1]} : vector<8x96xf32> to vector<8x32xf32>
    %11 = vector.extract_strided_slice %9 {offsets = [0, 32], sizes = [8, 32], strides = [1, 1]} : vector<8x96xf32> to vector<8x32xf32>
    %12 = vector.extract_strided_slice %9 {offsets = [0, 64], sizes = [8, 32], strides = [1, 1]} : vector<8x96xf32> to vector<8x32xf32>
    %cst_12 = arith.constant 0.000000e+00 : f32
    %13 = vector.broadcast %cst_12 : f32 to vector<8x32xf32>
    %14 = vector.extract_strided_slice %10 {offsets = [0, 0], sizes = [8, 8], strides = [1, 1]} : vector<8x32xf32> to vector<8x8xf32>
    %15 = vector.extract_strided_slice %11 {offsets = [0, 0], sizes = [8, 8], strides = [1, 1]} : vector<8x32xf32> to vector<8x8xf32>
    %16 = vector.extract_strided_slice %12 {offsets = [0, 0], sizes = [8, 8], strides = [1, 1]} : vector<8x32xf32> to vector<8x8xf32>
    %cst_13 = arith.constant dense<0.000000e+00> : vector<8x8xf32>
    %17 = tpu.matmul %14, %15, %cst_13 {dimension_numbers = #tpu.dot_dimension_numbers<[1], [1], [0], [0], [0, 0, 1, 0], [], []>} : vector<8x8xf32>, vector<8x8xf32>, vector<8x8xf32> -> vector<8x8xf32>
    %cst_14 = arith.constant 0.176776692 : f32
    %18 = vector.broadcast %cst_14 : f32 to vector<8x8xf32>
    %19 = arith.mulf %17, %18 : vector<8x8xf32>
    %cst_15 = arith.constant 0.000000e+00 : f32
    %20 = vector.broadcast %cst_15 : f32 to vector<8x8xf32>
    %21 = arith.cmpf oeq, %6, %20 : vector<8x8xf32>
    %cst_16 = arith.constant -1.000000e+20 : f32
    %22 = vector.broadcast %cst_16 : f32 to vector<8x8xf32>
    %23 = arith.select %21, %22, %19 : vector<8x8xi1>, vector<8x8xf32>
    %cst_17 = arith.constant dense<0xFF800000> : vector<8xf32>
    %24 = vector.multi_reduction <maximumf>, %23, %cst_17 [1] : vector<8x8xf32> to vector<8xf32>
    %25 = vector.shape_cast %24 : vector<8xf32> to vector<8x1xf32>
    %26 = vector.broadcast %25 : vector<8x1xf32> to vector<8x8xf32>
    %27 = arith.subf %23, %26 : vector<8x8xf32>
    %28 = math.exp %27 : vector<8x8xf32>
    %cst_18 = arith.constant dense<0.000000e+00> : vector<8xf32>
    %29 = vector.multi_reduction <add>, %28, %cst_18 [1] : vector<8x8xf32> to vector<8xf32>
    %30 = vector.shape_cast %29 : vector<8xf32> to vector<8x1xf32>
    %31 = vector.broadcast %30 : vector<8x1xf32> to vector<8x8xf32>
    %32 = arith.divf %28, %31 : vector<8x8xf32>
    %cst_19 = arith.constant dense<0.000000e+00> : vector<8x8xf32>
    %33 = tpu.matmul %32, %16, %cst_19 {dimension_numbers = #tpu.dot_dimension_numbers<[1], [0], [0], [1], [0, 0, 1, 1], [], []>} : vector<8x8xf32>, vector<8x8xf32>, vector<8x8xf32> -> vector<8x8xf32>
    %34 = vector.extract_strided_slice %4 {offsets = [0, 0], sizes = [8, 32], strides = [1, 1]} : vector<32x32xf32> to vector<8x32xf32>
    %cst_20 = arith.constant dense<0.000000e+00> : vector<8x32xf32>
    %35 = tpu.matmul %33, %34, %cst_20 {dimension_numbers = #tpu.dot_dimension_numbers<[1], [0], [0], [1], [0, 0, 1, 1], [], []>} : vector<8x8xf32>, vector<8x32xf32>, vector<8x32xf32> -> vector<8x32xf32>
    %36 = arith.addf %13, %35 : vector<8x32xf32>
    %37 = vector.extract_strided_slice %10 {offsets = [0, 8], sizes = [8, 8], strides = [1, 1]} : vector<8x32xf32> to vector<8x8xf32>
    %38 = vector.extract_strided_slice %11 {offsets = [0, 8], sizes = [8, 8], strides = [1, 1]} : vector<8x32xf32> to vector<8x8xf32>
    %39 = vector.extract_strided_slice %12 {offsets = [0, 8], sizes = [8, 8], strides = [1, 1]} : vector<8x32xf32> to vector<8x8xf32>
    %cst_21 = arith.constant dense<0.000000e+00> : vector<8x8xf32>
    %40 = tpu.matmul %37, %38, %cst_21 {dimension_numbers = #tpu.dot_dimension_numbers<[1], [1], [0], [0], [0, 0, 1, 0], [], []>} : vector<8x8xf32>, vector<8x8xf32>, vector<8x8xf32> -> vector<8x8xf32>
    %cst_22 = arith.constant 0.176776692 : f32
    %41 = vector.broadcast %cst_22 : f32 to vector<8x8xf32>
    %42 = arith.mulf %40, %41 : vector<8x8xf32>
    %cst_23 = arith.constant 0.000000e+00 : f32
    %43 = vector.broadcast %cst_23 : f32 to vector<8x8xf32>
    %44 = arith.cmpf oeq, %6, %43 : vector<8x8xf32>
    %cst_24 = arith.constant -1.000000e+20 : f32
    %45 = vector.broadcast %cst_24 : f32 to vector<8x8xf32>
    %46 = arith.select %44, %45, %42 : vector<8x8xi1>, vector<8x8xf32>
    %cst_25 = arith.constant dense<0xFF800000> : vector<8xf32>
    %47 = vector.multi_reduction <maximumf>, %46, %cst_25 [1] : vector<8x8xf32> to vector<8xf32>
    %48 = vector.shape_cast %47 : vector<8xf32> to vector<8x1xf32>
    %49 = vector.broadcast %48 : vector<8x1xf32> to vector<8x8xf32>
    %50 = arith.subf %46, %49 : vector<8x8xf32>
    %51 = math.exp %50 : vector<8x8xf32>
    %cst_26 = arith.constant dense<0.000000e+00> : vector<8xf32>
    %52 = vector.multi_reduction <add>, %51, %cst_26 [1] : vector<8x8xf32> to vector<8xf32>
    %53 = vector.shape_cast %52 : vector<8xf32> to vector<8x1xf32>
    %54 = vector.broadcast %53 : vector<8x1xf32> to vector<8x8xf32>
    %55 = arith.divf %51, %54 : vector<8x8xf32>
    %cst_27 = arith.constant dense<0.000000e+00> : vector<8x8xf32>
    %56 = tpu.matmul %55, %39, %cst_27 {dimension_numbers = #tpu.dot_dimension_numbers<[1], [0], [0], [1], [0, 0, 1, 1], [], []>} : vector<8x8xf32>, vector<8x8xf32>, vector<8x8xf32> -> vector<8x8xf32>
    %57 = vector.extract_strided_slice %4 {offsets = [8, 0], sizes = [8, 32], strides = [1, 1]} : vector<32x32xf32> to vector<8x32xf32>
    %cst_28 = arith.constant dense<0.000000e+00> : vector<8x32xf32>
    %58 = tpu.matmul %56, %57, %cst_28 {dimension_numbers = #tpu.dot_dimension_numbers<[1], [0], [0], [1], [0, 0, 1, 1], [], []>} : vector<8x8xf32>, vector<8x32xf32>, vector<8x32xf32> -> vector<8x32xf32>
    %59 = arith.addf %36, %58 : vector<8x32xf32>
    %60 = vector.extract_strided_slice %10 {offsets = [0, 16], sizes = [8, 8], strides = [1, 1]} : vector<8x32xf32> to vector<8x8xf32>
    %61 = vector.extract_strided_slice %11 {offsets = [0, 16], sizes = [8, 8], strides = [1, 1]} : vector<8x32xf32> to vector<8x8xf32>
    %62 = vector.extract_strided_slice %12 {offsets = [0, 16], sizes = [8, 8], strides = [1, 1]} : vector<8x32xf32> to vector<8x8xf32>
    %cst_29 = arith.constant dense<0.000000e+00> : vector<8x8xf32>
    %63 = tpu.matmul %60, %61, %cst_29 {dimension_numbers = #tpu.dot_dimension_numbers<[1], [1], [0], [0], [0, 0, 1, 0], [], []>} : vector<8x8xf32>, vector<8x8xf32>, vector<8x8xf32> -> vector<8x8xf32>
    %cst_30 = arith.constant 0.176776692 : f32
    %64 = vector.broadcast %cst_30 : f32 to vector<8x8xf32>
    %65 = arith.mulf %63, %64 : vector<8x8xf32>
    %cst_31 = arith.constant 0.000000e+00 : f32
    %66 = vector.broadcast %cst_31 : f32 to vector<8x8xf32>
    %67 = arith.cmpf oeq, %6, %66 : vector<8x8xf32>
    %cst_32 = arith.constant -1.000000e+20 : f32
    %68 = vector.broadcast %cst_32 : f32 to vector<8x8xf32>
    %69 = arith.select %67, %68, %65 : vector<8x8xi1>, vector<8x8xf32>
    %cst_33 = arith.constant dense<0xFF800000> : vector<8xf32>
    %70 = vector.multi_reduction <maximumf>, %69, %cst_33 [1] : vector<8x8xf32> to vector<8xf32>
    %71 = vector.shape_cast %70 : vector<8xf32> to vector<8x1xf32>
    %72 = vector.broadcast %71 : vector<8x1xf32> to vector<8x8xf32>
    %73 = arith.subf %69, %72 : vector<8x8xf32>
    %74 = math.exp %73 : vector<8x8xf32>
    %cst_34 = arith.constant dense<0.000000e+00> : vector<8xf32>
    %75 = vector.multi_reduction <add>, %74, %cst_34 [1] : vector<8x8xf32> to vector<8xf32>
    %76 = vector.shape_cast %75 : vector<8xf32> to vector<8x1xf32>
    %77 = vector.broadcast %76 : vector<8x1xf32> to vector<8x8xf32>
    %78 = arith.divf %74, %77 : vector<8x8xf32>
    %cst_35 = arith.constant dense<0.000000e+00> : vector<8x8xf32>
    %79 = tpu.matmul %78, %62, %cst_35 {dimension_numbers = #tpu.dot_dimension_numbers<[1], [0], [0], [1], [0, 0, 1, 1], [], []>} : vector<8x8xf32>, vector<8x8xf32>, vector<8x8xf32> -> vector<8x8xf32>
    %80 = vector.extract_strided_slice %4 {offsets = [16, 0], sizes = [8, 32], strides = [1, 1]} : vector<32x32xf32> to vector<8x32xf32>
    %cst_36 = arith.constant dense<0.000000e+00> : vector<8x32xf32>
    %81 = tpu.matmul %79, %80, %cst_36 {dimension_numbers = #tpu.dot_dimension_numbers<[1], [0], [0], [1], [0, 0, 1, 1], [], []>} : vector<8x8xf32>, vector<8x32xf32>, vector<8x32xf32> -> vector<8x32xf32>
    %82 = arith.addf %59, %81 : vector<8x32xf32>
    %83 = vector.extract_strided_slice %10 {offsets = [0, 24], sizes = [8, 8], strides = [1, 1]} : vector<8x32xf32> to vector<8x8xf32>
    %84 = vector.extract_strided_slice %11 {offsets = [0, 24], sizes = [8, 8], strides = [1, 1]} : vector<8x32xf32> to vector<8x8xf32>
    %85 = vector.extract_strided_slice %12 {offsets = [0, 24], sizes = [8, 8], strides = [1, 1]} : vector<8x32xf32> to vector<8x8xf32>
    %cst_37 = arith.constant dense<0.000000e+00> : vector<8x8xf32>
    %86 = tpu.matmul %83, %84, %cst_37 {dimension_numbers = #tpu.dot_dimension_numbers<[1], [1], [0], [0], [0, 0, 1, 0], [], []>} : vector<8x8xf32>, vector<8x8xf32>, vector<8x8xf32> -> vector<8x8xf32>
    %cst_38 = arith.constant 0.176776692 : f32
    %87 = vector.broadcast %cst_38 : f32 to vector<8x8xf32>
    %88 = arith.mulf %86, %87 : vector<8x8xf32>
    %cst_39 = arith.constant 0.000000e+00 : f32
    %89 = vector.broadcast %cst_39 : f32 to vector<8x8xf32>
    %90 = arith.cmpf oeq, %6, %89 : vector<8x8xf32>
    %cst_40 = arith.constant -1.000000e+20 : f32
    %91 = vector.broadcast %cst_40 : f32 to vector<8x8xf32>
    %92 = arith.select %90, %91, %88 : vector<8x8xi1>, vector<8x8xf32>
    %cst_41 = arith.constant dense<0xFF800000> : vector<8xf32>
    %93 = vector.multi_reduction <maximumf>, %92, %cst_41 [1] : vector<8x8xf32> to vector<8xf32>
    %94 = vector.shape_cast %93 : vector<8xf32> to vector<8x1xf32>
    %95 = vector.broadcast %94 : vector<8x1xf32> to vector<8x8xf32>
    %96 = arith.subf %92, %95 : vector<8x8xf32>
    %97 = math.exp %96 : vector<8x8xf32>
    %cst_42 = arith.constant dense<0.000000e+00> : vector<8xf32>
    %98 = vector.multi_reduction <add>, %97, %cst_42 [1] : vector<8x8xf32> to vector<8xf32>
    %99 = vector.shape_cast %98 : vector<8xf32> to vector<8x1xf32>
    %100 = vector.broadcast %99 : vector<8x1xf32> to vector<8x8xf32>
    %101 = arith.divf %97, %100 : vector<8x8xf32>
    %cst_43 = arith.constant dense<0.000000e+00> : vector<8x8xf32>
    %102 = tpu.matmul %101, %85, %cst_43 {dimension_numbers = #tpu.dot_dimension_numbers<[1], [0], [0], [1], [0, 0, 1, 1], [], []>} : vector<8x8xf32>, vector<8x8xf32>, vector<8x8xf32> -> vector<8x8xf32>
    %103 = vector.extract_strided_slice %4 {offsets = [24, 0], sizes = [8, 32], strides = [1, 1]} : vector<32x32xf32> to vector<8x32xf32>
    %cst_44 = arith.constant dense<0.000000e+00> : vector<8x32xf32>
    %104 = tpu.matmul %102, %103, %cst_44 {dimension_numbers = #tpu.dot_dimension_numbers<[1], [0], [0], [1], [0, 0, 1, 1], [], []>} : vector<8x8xf32>, vector<8x32xf32>, vector<8x32xf32> -> vector<8x32xf32>
    %105 = arith.addf %82, %104 : vector<8x32xf32>
    %106 = vector.broadcast %5 : vector<1x32xf32> to vector<8x32xf32>
    %107 = arith.addf %105, %106 : vector<8x32xf32>
    %108 = arith.addf %107, %1 : vector<8x32xf32>
    %c0_45 = arith.constant 0 : index
    %c0_46 = arith.constant 0 : index
    %109 = vector.load %arg12[%c0_45, %c0_46] : memref<1x32xf32, #tpu.memory_space<vmem>>, vector<1x32xf32>
    %c0_47 = arith.constant 0 : index
    %c0_48 = arith.constant 0 : index
    %110 = vector.load %arg13[%c0_47, %c0_48] : memref<1x32xf32, #tpu.memory_space<vmem>>, vector<1x32xf32>
    %cst_49 = arith.constant dense<0.000000e+00> : vector<8xf32>
    %111 = vector.multi_reduction <add>, %108, %cst_49 [1] : vector<8x32xf32> to vector<8xf32>
    %112 = vector.shape_cast %111 : vector<8xf32> to vector<8x1xf32>
    %cst_50 = arith.constant 3.200000e+01 : f32
    %113 = vector.broadcast %cst_50 : f32 to vector<8x1xf32>
    %114 = arith.divf %112, %113 : vector<8x1xf32>
    %115 = vector.broadcast %114 : vector<8x1xf32> to vector<8x32xf32>
    %116 = arith.subf %108, %115 : vector<8x32xf32>
    %117 = arith.mulf %116, %116 : vector<8x32xf32>
    %cst_51 = arith.constant dense<0.000000e+00> : vector<8xf32>
    %118 = vector.multi_reduction <add>, %117, %cst_51 [1] : vector<8x32xf32> to vector<8xf32>
    %119 = vector.shape_cast %118 : vector<8xf32> to vector<8x1xf32>
    %cst_52 = arith.constant 3.200000e+01 : f32
    %120 = vector.broadcast %cst_52 : f32 to vector<8x1xf32>
    %121 = arith.divf %119, %120 : vector<8x1xf32>
    %cst_53 = arith.constant 9.99999974E-6 : f32
    %122 = vector.broadcast %cst_53 : f32 to vector<8x1xf32>
    %123 = arith.addf %121, %122 : vector<8x1xf32>
    %124 = math.rsqrt %123 : vector<8x1xf32>
    %125 = vector.broadcast %124 : vector<8x1xf32> to vector<8x32xf32>
    %126 = arith.mulf %116, %125 : vector<8x32xf32>
    %127 = vector.broadcast %109 : vector<1x32xf32> to vector<8x32xf32>
    %128 = arith.mulf %126, %127 : vector<8x32xf32>
    %129 = vector.broadcast %110 : vector<1x32xf32> to vector<8x32xf32>
    %130 = arith.addf %128, %129 : vector<8x32xf32>
    %c0_54 = arith.constant 0 : index
    %c0_55 = arith.constant 0 : index
    %131 = vector.load %arg8[%c0_54, %c0_55] : memref<32x96xf32, #tpu.memory_space<vmem>>, vector<32x96xf32>
    %c0_56 = arith.constant 0 : index
    %c0_57 = arith.constant 0 : index
    %132 = vector.load %arg9[%c0_56, %c0_57] : memref<1x96xf32, #tpu.memory_space<vmem>>, vector<1x96xf32>
    %c0_58 = arith.constant 0 : index
    %c0_59 = arith.constant 0 : index
    %133 = vector.load %arg10[%c0_58, %c0_59] : memref<32x32xf32, #tpu.memory_space<vmem>>, vector<32x32xf32>
    %c0_60 = arith.constant 0 : index
    %c0_61 = arith.constant 0 : index
    %134 = vector.load %arg11[%c0_60, %c0_61] : memref<1x32xf32, #tpu.memory_space<vmem>>, vector<1x32xf32>
    %c0_62 = arith.constant 0 : index
    %c0_63 = arith.constant 0 : index
    %135 = vector.load %arg3[%c0_62, %c0_63] : memref<8x8xf32, #tpu.memory_space<vmem>>, vector<8x8xf32>
    %cst_64 = arith.constant dense<0.000000e+00> : vector<8x96xf32>
    %136 = tpu.matmul %130, %131, %cst_64 {dimension_numbers = #tpu.dot_dimension_numbers<[1], [0], [0], [1], [0, 0, 1, 1], [], []>} : vector<8x32xf32>, vector<32x96xf32>, vector<8x96xf32> -> vector<8x96xf32>
    %137 = vector.broadcast %132 : vector<1x96xf32> to vector<8x96xf32>
    %138 = arith.addf %136, %137 : vector<8x96xf32>
    %139 = vector.extract_strided_slice %138 {offsets = [0, 0], sizes = [8, 32], strides = [1, 1]} : vector<8x96xf32> to vector<8x32xf32>
    %140 = vector.extract_strided_slice %138 {offsets = [0, 32], sizes = [8, 32], strides = [1, 1]} : vector<8x96xf32> to vector<8x32xf32>
    %141 = vector.extract_strided_slice %138 {offsets = [0, 64], sizes = [8, 32], strides = [1, 1]} : vector<8x96xf32> to vector<8x32xf32>
    %cst_65 = arith.constant 0.000000e+00 : f32
    %142 = vector.broadcast %cst_65 : f32 to vector<8x32xf32>
    %143 = vector.extract_strided_slice %139 {offsets = [0, 0], sizes = [8, 8], strides = [1, 1]} : vector<8x32xf32> to vector<8x8xf32>
    %144 = vector.extract_strided_slice %140 {offsets = [0, 0], sizes = [8, 8], strides = [1, 1]} : vector<8x32xf32> to vector<8x8xf32>
    %145 = vector.extract_strided_slice %141 {offsets = [0, 0], sizes = [8, 8], strides = [1, 1]} : vector<8x32xf32> to vector<8x8xf32>
    %cst_66 = arith.constant dense<0.000000e+00> : vector<8x8xf32>
    %146 = tpu.matmul %143, %144, %cst_66 {dimension_numbers = #tpu.dot_dimension_numbers<[1], [1], [0], [0], [0, 0, 1, 0], [], []>} : vector<8x8xf32>, vector<8x8xf32>, vector<8x8xf32> -> vector<8x8xf32>
    %cst_67 = arith.constant 0.176776692 : f32
    %147 = vector.broadcast %cst_67 : f32 to vector<8x8xf32>
    %148 = arith.mulf %146, %147 : vector<8x8xf32>
    %cst_68 = arith.constant 0.000000e+00 : f32
    %149 = vector.broadcast %cst_68 : f32 to vector<8x8xf32>
    %150 = arith.cmpf oeq, %135, %149 : vector<8x8xf32>
    %cst_69 = arith.constant -1.000000e+20 : f32
    %151 = vector.broadcast %cst_69 : f32 to vector<8x8xf32>
    %152 = arith.select %150, %151, %148 : vector<8x8xi1>, vector<8x8xf32>
    %cst_70 = arith.constant dense<0xFF800000> : vector<8xf32>
    %153 = vector.multi_reduction <maximumf>, %152, %cst_70 [1] : vector<8x8xf32> to vector<8xf32>
    %154 = vector.shape_cast %153 : vector<8xf32> to vector<8x1xf32>
    %155 = vector.broadcast %154 : vector<8x1xf32> to vector<8x8xf32>
    %156 = arith.subf %152, %155 : vector<8x8xf32>
    %157 = math.exp %156 : vector<8x8xf32>
    %cst_71 = arith.constant dense<0.000000e+00> : vector<8xf32>
    %158 = vector.multi_reduction <add>, %157, %cst_71 [1] : vector<8x8xf32> to vector<8xf32>
    %159 = vector.shape_cast %158 : vector<8xf32> to vector<8x1xf32>
    %160 = vector.broadcast %159 : vector<8x1xf32> to vector<8x8xf32>
    %161 = arith.divf %157, %160 : vector<8x8xf32>
    %cst_72 = arith.constant dense<0.000000e+00> : vector<8x8xf32>
    %162 = tpu.matmul %161, %145, %cst_72 {dimension_numbers = #tpu.dot_dimension_numbers<[1], [0], [0], [1], [0, 0, 1, 1], [], []>} : vector<8x8xf32>, vector<8x8xf32>, vector<8x8xf32> -> vector<8x8xf32>
    %163 = vector.extract_strided_slice %133 {offsets = [0, 0], sizes = [8, 32], strides = [1, 1]} : vector<32x32xf32> to vector<8x32xf32>
    %cst_73 = arith.constant dense<0.000000e+00> : vector<8x32xf32>
    %164 = tpu.matmul %162, %163, %cst_73 {dimension_numbers = #tpu.dot_dimension_numbers<[1], [0], [0], [1], [0, 0, 1, 1], [], []>} : vector<8x8xf32>, vector<8x32xf32>, vector<8x32xf32> -> vector<8x32xf32>
    %165 = arith.addf %142, %164 : vector<8x32xf32>
    %166 = vector.extract_strided_slice %139 {offsets = [0, 8], sizes = [8, 8], strides = [1, 1]} : vector<8x32xf32> to vector<8x8xf32>
    %167 = vector.extract_strided_slice %140 {offsets = [0, 8], sizes = [8, 8], strides = [1, 1]} : vector<8x32xf32> to vector<8x8xf32>
    %168 = vector.extract_strided_slice %141 {offsets = [0, 8], sizes = [8, 8], strides = [1, 1]} : vector<8x32xf32> to vector<8x8xf32>
    %cst_74 = arith.constant dense<0.000000e+00> : vector<8x8xf32>
    %169 = tpu.matmul %166, %167, %cst_74 {dimension_numbers = #tpu.dot_dimension_numbers<[1], [1], [0], [0], [0, 0, 1, 0], [], []>} : vector<8x8xf32>, vector<8x8xf32>, vector<8x8xf32> -> vector<8x8xf32>
    %cst_75 = arith.constant 0.176776692 : f32
    %170 = vector.broadcast %cst_75 : f32 to vector<8x8xf32>
    %171 = arith.mulf %169, %170 : vector<8x8xf32>
    %cst_76 = arith.constant 0.000000e+00 : f32
    %172 = vector.broadcast %cst_76 : f32 to vector<8x8xf32>
    %173 = arith.cmpf oeq, %135, %172 : vector<8x8xf32>
    %cst_77 = arith.constant -1.000000e+20 : f32
    %174 = vector.broadcast %cst_77 : f32 to vector<8x8xf32>
    %175 = arith.select %173, %174, %171 : vector<8x8xi1>, vector<8x8xf32>
    %cst_78 = arith.constant dense<0xFF800000> : vector<8xf32>
    %176 = vector.multi_reduction <maximumf>, %175, %cst_78 [1] : vector<8x8xf32> to vector<8xf32>
    %177 = vector.shape_cast %176 : vector<8xf32> to vector<8x1xf32>
    %178 = vector.broadcast %177 : vector<8x1xf32> to vector<8x8xf32>
    %179 = arith.subf %175, %178 : vector<8x8xf32>
    %180 = math.exp %179 : vector<8x8xf32>
    %cst_79 = arith.constant dense<0.000000e+00> : vector<8xf32>
    %181 = vector.multi_reduction <add>, %180, %cst_79 [1] : vector<8x8xf32> to vector<8xf32>
    %182 = vector.shape_cast %181 : vector<8xf32> to vector<8x1xf32>
    %183 = vector.broadcast %182 : vector<8x1xf32> to vector<8x8xf32>
    %184 = arith.divf %180, %183 : vector<8x8xf32>
    %cst_80 = arith.constant dense<0.000000e+00> : vector<8x8xf32>
    %185 = tpu.matmul %184, %168, %cst_80 {dimension_numbers = #tpu.dot_dimension_numbers<[1], [0], [0], [1], [0, 0, 1, 1], [], []>} : vector<8x8xf32>, vector<8x8xf32>, vector<8x8xf32> -> vector<8x8xf32>
    %186 = vector.extract_strided_slice %133 {offsets = [8, 0], sizes = [8, 32], strides = [1, 1]} : vector<32x32xf32> to vector<8x32xf32>
    %cst_81 = arith.constant dense<0.000000e+00> : vector<8x32xf32>
    %187 = tpu.matmul %185, %186, %cst_81 {dimension_numbers = #tpu.dot_dimension_numbers<[1], [0], [0], [1], [0, 0, 1, 1], [], []>} : vector<8x8xf32>, vector<8x32xf32>, vector<8x32xf32> -> vector<8x32xf32>
    %188 = arith.addf %165, %187 : vector<8x32xf32>
    %189 = vector.extract_strided_slice %139 {offsets = [0, 16], sizes = [8, 8], strides = [1, 1]} : vector<8x32xf32> to vector<8x8xf32>
    %190 = vector.extract_strided_slice %140 {offsets = [0, 16], sizes = [8, 8], strides = [1, 1]} : vector<8x32xf32> to vector<8x8xf32>
    %191 = vector.extract_strided_slice %141 {offsets = [0, 16], sizes = [8, 8], strides = [1, 1]} : vector<8x32xf32> to vector<8x8xf32>
    %cst_82 = arith.constant dense<0.000000e+00> : vector<8x8xf32>
    %192 = tpu.matmul %189, %190, %cst_82 {dimension_numbers = #tpu.dot_dimension_numbers<[1], [1], [0], [0], [0, 0, 1, 0], [], []>} : vector<8x8xf32>, vector<8x8xf32>, vector<8x8xf32> -> vector<8x8xf32>
    %cst_83 = arith.constant 0.176776692 : f32
    %193 = vector.broadcast %cst_83 : f32 to vector<8x8xf32>
    %194 = arith.mulf %192, %193 : vector<8x8xf32>
    %cst_84 = arith.constant 0.000000e+00 : f32
    %195 = vector.broadcast %cst_84 : f32 to vector<8x8xf32>
    %196 = arith.cmpf oeq, %135, %195 : vector<8x8xf32>
    %cst_85 = arith.constant -1.000000e+20 : f32
    %197 = vector.broadcast %cst_85 : f32 to vector<8x8xf32>
    %198 = arith.select %196, %197, %194 : vector<8x8xi1>, vector<8x8xf32>
    %cst_86 = arith.constant dense<0xFF800000> : vector<8xf32>
    %199 = vector.multi_reduction <maximumf>, %198, %cst_86 [1] : vector<8x8xf32> to vector<8xf32>
    %200 = vector.shape_cast %199 : vector<8xf32> to vector<8x1xf32>
    %201 = vector.broadcast %200 : vector<8x1xf32> to vector<8x8xf32>
    %202 = arith.subf %198, %201 : vector<8x8xf32>
    %203 = math.exp %202 : vector<8x8xf32>
    %cst_87 = arith.constant dense<0.000000e+00> : vector<8xf32>
    %204 = vector.multi_reduction <add>, %203, %cst_87 [1] : vector<8x8xf32> to vector<8xf32>
    %205 = vector.shape_cast %204 : vector<8xf32> to vector<8x1xf32>
    %206 = vector.broadcast %205 : vector<8x1xf32> to vector<8x8xf32>
    %207 = arith.divf %203, %206 : vector<8x8xf32>
    %cst_88 = arith.constant dense<0.000000e+00> : vector<8x8xf32>
    %208 = tpu.matmul %207, %191, %cst_88 {dimension_numbers = #tpu.dot_dimension_numbers<[1], [0], [0], [1], [0, 0, 1, 1], [], []>} : vector<8x8xf32>, vector<8x8xf32>, vector<8x8xf32> -> vector<8x8xf32>
    %209 = vector.extract_strided_slice %133 {offsets = [16, 0], sizes = [8, 32], strides = [1, 1]} : vector<32x32xf32> to vector<8x32xf32>
    %cst_89 = arith.constant dense<0.000000e+00> : vector<8x32xf32>
    %210 = tpu.matmul %208, %209, %cst_89 {dimension_numbers = #tpu.dot_dimension_numbers<[1], [0], [0], [1], [0, 0, 1, 1], [], []>} : vector<8x8xf32>, vector<8x32xf32>, vector<8x32xf32> -> vector<8x32xf32>
    %211 = arith.addf %188, %210 : vector<8x32xf32>
    %212 = vector.extract_strided_slice %139 {offsets = [0, 24], sizes = [8, 8], strides = [1, 1]} : vector<8x32xf32> to vector<8x8xf32>
    %213 = vector.extract_strided_slice %140 {offsets = [0, 24], sizes = [8, 8], strides = [1, 1]} : vector<8x32xf32> to vector<8x8xf32>
    %214 = vector.extract_strided_slice %141 {offsets = [0, 24], sizes = [8, 8], strides = [1, 1]} : vector<8x32xf32> to vector<8x8xf32>
    %cst_90 = arith.constant dense<0.000000e+00> : vector<8x8xf32>
    %215 = tpu.matmul %212, %213, %cst_90 {dimension_numbers = #tpu.dot_dimension_numbers<[1], [1], [0], [0], [0, 0, 1, 0], [], []>} : vector<8x8xf32>, vector<8x8xf32>, vector<8x8xf32> -> vector<8x8xf32>
    %cst_91 = arith.constant 0.176776692 : f32
    %216 = vector.broadcast %cst_91 : f32 to vector<8x8xf32>
    %217 = arith.mulf %215, %216 : vector<8x8xf32>
    %cst_92 = arith.constant 0.000000e+00 : f32
    %218 = vector.broadcast %cst_92 : f32 to vector<8x8xf32>
    %219 = arith.cmpf oeq, %135, %218 : vector<8x8xf32>
    %cst_93 = arith.constant -1.000000e+20 : f32
    %220 = vector.broadcast %cst_93 : f32 to vector<8x8xf32>
    %221 = arith.select %219, %220, %217 : vector<8x8xi1>, vector<8x8xf32>
    %cst_94 = arith.constant dense<0xFF800000> : vector<8xf32>
    %222 = vector.multi_reduction <maximumf>, %221, %cst_94 [1] : vector<8x8xf32> to vector<8xf32>
    %223 = vector.shape_cast %222 : vector<8xf32> to vector<8x1xf32>
    %224 = vector.broadcast %223 : vector<8x1xf32> to vector<8x8xf32>
    %225 = arith.subf %221, %224 : vector<8x8xf32>
    %226 = math.exp %225 : vector<8x8xf32>
    %cst_95 = arith.constant dense<0.000000e+00> : vector<8xf32>
    %227 = vector.multi_reduction <add>, %226, %cst_95 [1] : vector<8x8xf32> to vector<8xf32>
    %228 = vector.shape_cast %227 : vector<8xf32> to vector<8x1xf32>
    %229 = vector.broadcast %228 : vector<8x1xf32> to vector<8x8xf32>
    %230 = arith.divf %226, %229 : vector<8x8xf32>
    %cst_96 = arith.constant dense<0.000000e+00> : vector<8x8xf32>
    %231 = tpu.matmul %230, %214, %cst_96 {dimension_numbers = #tpu.dot_dimension_numbers<[1], [0], [0], [1], [0, 0, 1, 1], [], []>} : vector<8x8xf32>, vector<8x8xf32>, vector<8x8xf32> -> vector<8x8xf32>
    %232 = vector.extract_strided_slice %133 {offsets = [24, 0], sizes = [8, 32], strides = [1, 1]} : vector<32x32xf32> to vector<8x32xf32>
    %cst_97 = arith.constant dense<0.000000e+00> : vector<8x32xf32>
    %233 = tpu.matmul %231, %232, %cst_97 {dimension_numbers = #tpu.dot_dimension_numbers<[1], [0], [0], [1], [0, 0, 1, 1], [], []>} : vector<8x8xf32>, vector<8x32xf32>, vector<8x32xf32> -> vector<8x32xf32>
    %234 = arith.addf %211, %233 : vector<8x32xf32>
    %235 = vector.broadcast %134 : vector<1x32xf32> to vector<8x32xf32>
    %236 = arith.addf %234, %235 : vector<8x32xf32>
    %237 = arith.addf %236, %130 : vector<8x32xf32>
    %c0_98 = arith.constant 0 : index
    %c0_99 = arith.constant 0 : index
    %238 = vector.load %arg14[%c0_98, %c0_99] : memref<1x32xf32, #tpu.memory_space<vmem>>, vector<1x32xf32>
    %c0_100 = arith.constant 0 : index
    %c0_101 = arith.constant 0 : index
    %239 = vector.load %arg15[%c0_100, %c0_101] : memref<1x32xf32, #tpu.memory_space<vmem>>, vector<1x32xf32>
    %cst_102 = arith.constant dense<0.000000e+00> : vector<8xf32>
    %240 = vector.multi_reduction <add>, %237, %cst_102 [1] : vector<8x32xf32> to vector<8xf32>
    %241 = vector.shape_cast %240 : vector<8xf32> to vector<8x1xf32>
    %cst_103 = arith.constant 3.200000e+01 : f32
    %242 = vector.broadcast %cst_103 : f32 to vector<8x1xf32>
    %243 = arith.divf %241, %242 : vector<8x1xf32>
    %244 = vector.broadcast %243 : vector<8x1xf32> to vector<8x32xf32>
    %245 = arith.subf %237, %244 : vector<8x32xf32>
    %246 = arith.mulf %245, %245 : vector<8x32xf32>
    %cst_104 = arith.constant dense<0.000000e+00> : vector<8xf32>
    %247 = vector.multi_reduction <add>, %246, %cst_104 [1] : vector<8x32xf32> to vector<8xf32>
    %248 = vector.shape_cast %247 : vector<8xf32> to vector<8x1xf32>
    %cst_105 = arith.constant 3.200000e+01 : f32
    %249 = vector.broadcast %cst_105 : f32 to vector<8x1xf32>
    %250 = arith.divf %248, %249 : vector<8x1xf32>
    %cst_106 = arith.constant 9.99999974E-6 : f32
    %251 = vector.broadcast %cst_106 : f32 to vector<8x1xf32>
    %252 = arith.addf %250, %251 : vector<8x1xf32>
    %253 = math.rsqrt %252 : vector<8x1xf32>
    %254 = vector.broadcast %253 : vector<8x1xf32> to vector<8x32xf32>
    %255 = arith.mulf %245, %254 : vector<8x32xf32>
    %256 = vector.broadcast %238 : vector<1x32xf32> to vector<8x32xf32>
    %257 = arith.mulf %255, %256 : vector<8x32xf32>
    %258 = vector.broadcast %239 : vector<1x32xf32> to vector<8x32xf32>
    %259 = arith.addf %257, %258 : vector<8x32xf32>
    %c0_107 = arith.constant 0 : index
    %c0_108 = arith.constant 0 : index
    %260 = vector.load %arg18[%c0_107, %c0_108] : memref<32x128xf32, #tpu.memory_space<vmem>>, vector<32x128xf32>
    %cst_109 = arith.constant dense<0.000000e+00> : vector<8x128xf32>
    %261 = tpu.matmul %259, %260, %cst_109 {dimension_numbers = #tpu.dot_dimension_numbers<[1], [0], [0], [1], [0, 0, 1, 1], [], []>} : vector<8x32xf32>, vector<32x128xf32>, vector<8x128xf32> -> vector<8x128xf32>
    %c0_110 = arith.constant 0 : index
    %c0_111 = arith.constant 0 : index
    %262 = vector.load %arg19[%c0_110, %c0_111] : memref<1x128xf32, #tpu.memory_space<vmem>>, vector<1x128xf32>
    %263 = vector.broadcast %262 : vector<1x128xf32> to vector<8x128xf32>
    %264 = arith.addf %261, %263 : vector<8x128xf32>
    %cst_112 = arith.constant 0.000000e+00 : f32
    %265 = vector.broadcast %cst_112 : f32 to vector<8x128xf32>
    %266 = arith.maximumf %264, %265 : vector<8x128xf32>
    %c0_113 = arith.constant 0 : index
    %c0_114 = arith.constant 0 : index
    %267 = vector.load %arg20[%c0_113, %c0_114] : memref<128x32xf32, #tpu.memory_space<vmem>>, vector<128x32xf32>
    %cst_115 = arith.constant dense<0.000000e+00> : vector<8x32xf32>
    %268 = tpu.matmul %266, %267, %cst_115 {dimension_numbers = #tpu.dot_dimension_numbers<[1], [0], [0], [1], [0, 0, 1, 1], [], []>} : vector<8x128xf32>, vector<128x32xf32>, vector<8x32xf32> -> vector<8x32xf32>
    %c0_116 = arith.constant 0 : index
    %c0_117 = arith.constant 0 : index
    %269 = vector.load %arg21[%c0_116, %c0_117] : memref<1x32xf32, #tpu.memory_space<vmem>>, vector<1x32xf32>
    %270 = vector.broadcast %269 : vector<1x32xf32> to vector<8x32xf32>
    %271 = arith.addf %268, %270 : vector<8x32xf32>
    %272 = arith.addf %271, %259 : vector<8x32xf32>
    %c0_118 = arith.constant 0 : index
    %c0_119 = arith.constant 0 : index
    %273 = vector.load %arg16[%c0_118, %c0_119] : memref<1x32xf32, #tpu.memory_space<vmem>>, vector<1x32xf32>
    %c0_120 = arith.constant 0 : index
    %c0_121 = arith.constant 0 : index
    %274 = vector.load %arg17[%c0_120, %c0_121] : memref<1x32xf32, #tpu.memory_space<vmem>>, vector<1x32xf32>
    %cst_122 = arith.constant dense<0.000000e+00> : vector<8xf32>
    %275 = vector.multi_reduction <add>, %272, %cst_122 [1] : vector<8x32xf32> to vector<8xf32>
    %276 = vector.shape_cast %275 : vector<8xf32> to vector<8x1xf32>
    %cst_123 = arith.constant 3.200000e+01 : f32
    %277 = vector.broadcast %cst_123 : f32 to vector<8x1xf32>
    %278 = arith.divf %276, %277 : vector<8x1xf32>
    %279 = vector.broadcast %278 : vector<8x1xf32> to vector<8x32xf32>
    %280 = arith.subf %272, %279 : vector<8x32xf32>
    %281 = arith.mulf %280, %280 : vector<8x32xf32>
    %cst_124 = arith.constant dense<0.000000e+00> : vector<8xf32>
    %282 = vector.multi_reduction <add>, %281, %cst_124 [1] : vector<8x32xf32> to vector<8xf32>
    %283 = vector.shape_cast %282 : vector<8xf32> to vector<8x1xf32>
    %cst_125 = arith.constant 3.200000e+01 : f32
    %284 = vector.broadcast %cst_125 : f32 to vector<8x1xf32>
    %285 = arith.divf %283, %284 : vector<8x1xf32>
    %cst_126 = arith.constant 9.99999974E-6 : f32
    %286 = vector.broadcast %cst_126 : f32 to vector<8x1xf32>
    %287 = arith.addf %285, %286 : vector<8x1xf32>
    %288 = math.rsqrt %287 : vector<8x1xf32>
    %289 = vector.broadcast %288 : vector<8x1xf32> to vector<8x32xf32>
    %290 = arith.mulf %280, %289 : vector<8x32xf32>
    %291 = vector.broadcast %273 : vector<1x32xf32> to vector<8x32xf32>
    %292 = arith.mulf %290, %291 : vector<8x32xf32>
    %293 = vector.broadcast %274 : vector<1x32xf32> to vector<8x32xf32>
    %294 = arith.addf %292, %293 : vector<8x32xf32>
    %c0_127 = arith.constant 0 : index
    %c0_128 = arith.constant 0 : index
    %c0_129 = arith.constant 0 : index
    %295 = vector.load %arg22[%c0_127, %c0_128, %c0_129] : memref<1x8x32xf32, #tpu.memory_space<vmem>>, vector<1x8x32xf32>
    %296 = vector.shape_cast %295 : vector<1x8x32xf32> to vector<8x32xf32>
    %297 = vector.shape_cast %294 : vector<8x32xf32> to vector<1x8x32xf32>
    tpu.vector_store %arg22[%c0_127, %c0_128, %c0_129], %297 {strides = array<i32>} : memref<1x8x32xf32, #tpu.memory_space<vmem>>, vector<1x8x32xf32>,
    return
  }
  func.func @transform_0(%arg0: i32) -> (i32, i32, i32) {
    %c0_i32 = arith.constant 0 : i32
    %c0_i32_0 = arith.constant 0 : i32
    %c0_i32_1 = arith.constant 0 : i32
    return %arg0, %c0_i32, %c0_i32_0 : i32, i32, i32
  }
  func.func @transform_1(%arg0: i32) -> (i32, i32) {
    %c0_i32 = arith.constant 0 : i32
    %c0_i32_0 = arith.constant 0 : i32
    %c0_i32_1 = arith.constant 0 : i32
    return %c0_i32, %c0_i32_0 : i32, i32
  }
  func.func @transform_2(%arg0: i32) -> (i32, i32) {
    %c0_i32 = arith.constant 0 : i32
    %c0_i32_0 = arith.constant 0 : i32
    %c0_i32_1 = arith.constant 0 : i32
    return %c0_i32, %c0_i32_0 : i32, i32
  }
  func.func @transform_3(%arg0: i32) -> (i32, i32) {
    %c0_i32 = arith.constant 0 : i32
    %c0_i32_0 = arith.constant 0 : i32
    %c0_i32_1 = arith.constant 0 : i32
    return %c0_i32, %c0_i32_0 : i32, i32
  }
  func.func @transform_4(%arg0: i32) -> (i32, i32) {
    %c0_i32 = arith.constant 0 : i32
    %c0_i32_0 = arith.constant 0 : i32
    %c0_i32_1 = arith.constant 0 : i32
    return %c0_i32, %c0_i32_0 : i32, i32
  }
  func.func @transform_5(%arg0: i32) -> (i32, i32) {
    %c0_i32 = arith.constant 0 : i32
    %c0_i32_0 = arith.constant 0 : i32
    %c0_i32_1 = arith.constant 0 : i32
    return %c0_i32, %c0_i32_0 : i32, i32
  }
  func.func @transform_6(%arg0: i32) -> (i32, i32) {
    %c0_i32 = arith.constant 0 : i32
    %c0_i32_0 = arith.constant 0 : i32
    %c0_i32_1 = arith.constant 0 : i32
    return %c0_i32, %c0_i32_0 : i32, i32
  }
  func.func @transform_7(%arg0: i32) -> (i32, i32) {
    %c0_i32 = arith.constant 0 : i32
    %c0_i32_0 = arith.constant 0 : i32
    %c0_i32_1 = arith.constant 0 : i32
    return %c0_i32, %c0_i32_0 : i32, i32
  }
  func.func @transform_8(%arg0: i32) -> (i32, i32) {
    %c0_i32 = arith.constant 0 : i32
    %c0_i32_0 = arith.constant 0 : i32
    %c0_i32_1 = arith.constant 0 : i32
    return %c0_i32, %c0_i32_0 : i32, i32
  }
  func.func @transform_9(%arg0: i32) -> (i32, i32) {
    %c0_i32 = arith.constant 0 : i32
    %c0_i32_0 = arith.constant 0 : i32
    %c0_i32_1 = arith.constant 0 : i32
    return %c0_i32, %c0_i32_0 : i32, i32
  }
  func.func @transform_10(%arg0: i32) -> (i32, i32) {
    %c0_i32 = arith.constant 0 : i32
    %c0_i32_0 = arith.constant 0 : i32
    %c0_i32_1 = arith.constant 0 : i32
    return %c0_i32, %c0_i32_0 : i32, i32
  }
  func.func @transform_11(%arg0: i32) -> (i32, i32) {
    %c0_i32 = arith.constant 0 : i32
    %c0_i32_0 = arith.constant 0 : i32
    %c0_i32_1 = arith.constant 0 : i32
    return %c0_i32, %c0_i32_0 : i32, i32
  }
  func.func @transform_12(%arg0: i32) -> (i32, i32) {
    %c0_i32 = arith.constant 0 : i32
    %c0_i32_0 = arith.constant 0 : i32
    %c0_i32_1 = arith.constant 0 : i32
    return %c0_i32, %c0_i32_0 : i32, i32
  }
  func.func @transform_13(%arg0: i32) -> (i32, i32) {
    %c0_i32 = arith.constant 0 : i32
    %c0_i32_0 = arith.constant 0 : i32
    %c0_i32_1 = arith.constant 0 : i32
    return %c0_i32, %c0_i32_0 : i32, i32
  }
  func.func @transform_14(%arg0: i32) -> (i32, i32) {
    %c0_i32 = arith.constant 0 : i32
    %c0_i32_0 = arith.constant 0 : i32
    %c0_i32_1 = arith.constant 0 : i32
    return %c0_i32, %c0_i32_0 : i32, i32
  }
  func.func @transform_15(%arg0: i32) -> (i32, i32) {
    %c0_i32 = arith.constant 0 : i32
    %c0_i32_0 = arith.constant 0 : i32
    %c0_i32_1 = arith.constant 0 : i32
    return %c0_i32, %c0_i32_0 : i32, i32
  }
  func.func @transform_16(%arg0: i32) -> (i32, i32) {
    %c0_i32 = arith.constant 0 : i32
    %c0_i32_0 = arith.constant 0 : i32
    %c0_i32_1 = arith.constant 0 : i32
    return %c0_i32, %c0_i32_0 : i32, i32
  }
  func.func @transform_17(%arg0: i32) -> (i32, i32) {
    %c0_i32 = arith.constant 0 : i32
    %c0_i32_0 = arith.constant 0 : i32
    %c0_i32_1 = arith.constant 0 : i32
    return %c0_i32, %c0_i32_0 : i32, i32
  }
  func.func @transform_18(%arg0: i32) -> (i32, i32) {
    %c0_i32 = arith.constant 0 : i32
    %c0_i32_0 = arith.constant 0 : i32
    %c0_i32_1 = arith.constant 0 : i32
    return %c0_i32, %c0_i32_0 : i32, i32
  }
  func.func @transform_19(%arg0: i32) -> (i32, i32) {
    %c0_i32 = arith.constant 0 : i32
    %c0_i32_0 = arith.constant 0 : i32
    %c0_i32_1 = arith.constant 0 : i32
    return %c0_i32, %c0_i32_0 : i32, i32
  }
  func.func @transform_20(%arg0: i32) -> (i32, i32) {
    %c0_i32 = arith.constant 0 : i32
    %c0_i32_0 = arith.constant 0 : i32
    %c0_i32_1 = arith.constant 0 : i32
    return %c0_i32, %c0_i32_0 : i32, i32
  }
  func.func @transform_21(%arg0: i32) -> (i32, i32, i32) {
    %c0_i32 = arith.constant 0 : i32
    %c0_i32_0 = arith.constant 0 : i32
    %c0_i32_1 = arith.constant 0 : i32
    return %arg0, %c0_i32, %c0_i32_0 : i32, i32, i32
  }
}

</mosaic_0001>

<llo_original>
// kernel: tpu_custom_call.1
$region0: #{tpu_custom_call.1}
  #allocation0 [shape = 'u32[]', space=smem, size = 0x4, offset = 0x4, fixed_abs, tag = 'smem constant byte address 0x4 - core index']
  #allocation1 [shape = 'u32[144,128]{1,0:T(1,128)}', space=vmem, size = 0x12000, scoped, tag = 'internal scratch']
  %s0 = inlined_call_operand.hbm [shape: f32[2,8,32], index: 0, kind: input, shape index: {}]
  %s1 = inlined_call_operand.hbm [shape: f32[8,8], index: 1, kind: input, shape index: {}]
  %s2 = inlined_call_operand.hbm [shape: f32[8,8], index: 2, kind: input, shape index: {}]
  %s3 = inlined_call_operand.vmem [shape: f32[32,96], index: 3, kind: input, shape index: {}]
  %s4 = inlined_call_operand.vmem [shape: f32[1,96], index: 4, kind: input, shape index: {}]
  %s5 = inlined_call_operand.vmem [shape: f32[32,32], index: 5, kind: input, shape index: {}]
  %s6 = inlined_call_operand.vmem [shape: f32[1,32], index: 6, kind: input, shape index: {}]
  %s7 = inlined_call_operand.vmem [shape: f32[32,96], index: 7, kind: input, shape index: {}]
  %s8 = inlined_call_operand.vmem [shape: f32[1,96], index: 8, kind: input, shape index: {}]
  %s9 = inlined_call_operand.vmem [shape: f32[32,32], index: 9, kind: input, shape index: {}]
  %s10 = inlined_call_operand.vmem [shape: f32[1,32], index: 10, kind: input, shape index: {}]
  %s11 = inlined_call_operand.vmem [shape: f32[1,32], index: 11, kind: input, shape index: {}]
  %s12 = inlined_call_operand.vmem [shape: f32[1,32], index: 12, kind: input, shape index: {}]
  %s13 = inlined_call_operand.vmem [shape: f32[1,32], index: 13, kind: input, shape index: {}]
  %s14 = inlined_call_operand.vmem [shape: f32[1,32], index: 14, kind: input, shape index: {}]
  %s15 = inlined_call_operand.vmem [shape: f32[1,32], index: 15, kind: input, shape index: {}]
  %s16 = inlined_call_operand.vmem [shape: f32[1,32], index: 16, kind: input, shape index: {}]
  %s17 = inlined_call_operand.vmem [shape: f32[32,128], index: 17, kind: input, shape index: {}]
  %s18 = inlined_call_operand.vmem [shape: f32[1,128], index: 18, kind: input, shape index: {}]
  %s19 = inlined_call_operand.vmem [shape: f32[128,32], index: 19, kind: input, shape index: {}]
  %s20 = inlined_call_operand.vmem [shape: f32[1,32], index: 20, kind: input, shape index: {}]
  %s21 = inlined_call_operand.hbm [shape: f32[2,8,32], index: 21, kind: output, shape index: {}]
  %s22 = sld [smem:[#allocation0]]
  $region129: #{tpu_custom_call.1} parent=0
    _
  %s24 = ssub.s32 1, %s22
  %s25 = scalar_select 0, %s24, %s22
  $region1: #{tpu_custom_call.1} parent=0
    #allocation2 [shape = 'u8[8192]{0}', space=vmem, size = 0x2000, scoped, tag = 'input window, operand 0']
    #allocation3 [shape = 's32[2]{0}', space=sflag, size = 0x8, scoped, tag = 'scoped memory for tpu_custom_call.1']
    #allocation4 [shape = 's32[2]{0}', space=sflag, size = 0x8, scoped, tag = 'scoped memory for tpu_custom_call.1']
    #allocation5 [shape = 'u8[4096]{0}', space=vmem, size = 0x1000, scoped, tag = 'input window, operand 1, single buffered']
    #allocation6 [shape = 's32[1]{0}', space=sflag, size = 0x4, scoped, tag = 'scoped memory for tpu_custom_call.1']
    #allocation7 [shape = 'u8[4096]{0}', space=vmem, size = 0x1000, scoped, tag = 'input window, operand 2, single buffered']
    #allocation8 [shape = 'u8[8192]{0}', space=vmem, size = 0x2000, scoped, tag = 'output window, operand 0']
    %26 = vsyncpa [#allocation3], 0
    %s27 = scalar_lea.sflag [#allocation3], 1
    %28 = vsyncpa %s27, 0
    %29 = vsyncpa [#allocation6], 0
    %30 = vsyncpa [#allocation4], 0
    %s31 = scalar_lea.sflag [#allocation4], 1
    %32 = vsyncpa %s31, 0
    loop: start=0, step=1, limit=4
    $region2: #{tpu_custom_call.1} parent=1 // loop_pre_header
      _
    $region3: #{tpu_custom_call.1} parent=1 // loop_header
      %s34 = sphi 0, %s38
      %p35 = scmp.ge.s32.totalorder %s34, 4
      %s44 = sphi 0, %s46
      %s47 = sphi 0, %s44
      %s48 = sphi 0, %s47
      %s64 = sphi 0, %s48
      %s68 = sphi 0, %s68
      %s70 = sphi 0, %s68
      %s71 = sphi 0, %s70
      %s85 = sphi 0, %s71
      %s89 = sphi 0, %s89
      %s91 = sphi 0, %s89
      %s92 = sphi 0, %s91
      %s106 = sphi 0, %s92
      %s110 = sphi 0, %s110
      %s112 = sphi 0, %s110
      %s113 = sphi 0, %s112
      %s127 = sphi 0, %s113
      %s131 = sphi 0, %s131
      %s133 = sphi 0, %s131
      %s134 = sphi 0, %s133
      %s148 = sphi 0, %s134
      %s152 = sphi 0, %s152
      %s154 = sphi 0, %s152
      %s155 = sphi 0, %s154
      %s169 = sphi 0, %s155
      %s173 = sphi 0, %s173
      %s175 = sphi 0, %s173
      %s176 = sphi 0, %s175
      %s190 = sphi 0, %s176
      %s194 = sphi 0, %s194
      %s196 = sphi 0, %s194
      %s197 = sphi 0, %s196
      %s211 = sphi 0, %s197
      %s215 = sphi 0, %s215
      %s217 = sphi 0, %s215
      %s218 = sphi 0, %s217
      %s232 = sphi 0, %s218
      %s236 = sphi 0, %s236
      %s238 = sphi 0, %s236
      %s239 = sphi 0, %s238
      %s253 = sphi 0, %s239
      %s257 = sphi 0, %s257
      %s259 = sphi 0, %s257
      %s260 = sphi 0, %s259
      %s274 = sphi 0, %s260
      %s278 = sphi 0, %s278
      %s280 = sphi 0, %s278
      %s281 = sphi 0, %s280
      %s295 = sphi 0, %s281
      %s299 = sphi 0, %s299
      %s301 = sphi 0, %s299
      %s302 = sphi 0, %s301
      %s316 = sphi 0, %s302
      %s320 = sphi 0, %s320
      %s322 = sphi 0, %s320
      %s323 = sphi 0, %s322
      %s337 = sphi 0, %s323
      %s341 = sphi 0, %s341
      %s343 = sphi 0, %s341
      %s344 = sphi 0, %s343
      %s358 = sphi 0, %s344
      %s362 = sphi 0, %s362
      %s364 = sphi 0, %s362
      %s365 = sphi 0, %s364
      %s379 = sphi 0, %s365
      %s383 = sphi 0, %s383
      %s385 = sphi 0, %s383
      %s386 = sphi 0, %s385
      %s400 = sphi 0, %s386
      %s404 = sphi 0, %s404
      %s406 = sphi 0, %s404
      %s407 = sphi 0, %s406
      %s421 = sphi 0, %s407
      %s425 = sphi 0, %s425
      %s427 = sphi 0, %s425
      %s428 = sphi 0, %s427
      %s442 = sphi 0, %s428
      %s446 = sphi 0, %s446
      %s448 = sphi 0, %s446
      %s449 = sphi 0, %s448
      %s463 = sphi 0, %s449
      %s467 = sphi 0, %s467
      %s469 = sphi 0, %s467
      %s470 = sphi 0, %s469
      %s484 = sphi 0, %s470
      %s490 = sphi 0, %s492
      %s493 = sphi 0, %s490
      %s494 = sphi 0, %s493
      %s510 = sphi 0, %s494
    $region4: #{tpu_custom_call.1} parent=1 // loop_header_branch
      %37 = sbr.rel (%p35) target = $region8
    $region5: #{tpu_custom_call.1} parent=1 // loop_body
      %s39 = ssub.s32 %s34, 1
      %s40 = ssub.s32 %s34, 2
      %s41 = sadd.s32 %s34, 1
      %s42 = ssub.s32 %s34, %s41
      %p43 = scmp.eq.s32.totalorder %s42, 0
      %s45 = sadd.s32 %s44, 1
      %s46 = scalar_select %p43, %s44, %s45
      %p49 = pneg %p43
      %p50 = scmp.eq.s32.totalorder %s34, 1
      %p51 = por %p49, %p50
      %p52 = scmp.ne.s32.totalorder %s44, %s47
      %p53 = scmp.eq.s32.totalorder %s34, 0
      %p54 = por %p52, %p53
      %p55 = scmp.ne.s32.totalorder %s44, %s47
      %p56 = scmp.eq.s32.totalorder %s39, 1
      %p57 = por %p55, %p56
      %p58 = scmp.ne.s32.totalorder %s47, %s48
      %p59 = scmp.eq.s32.totalorder %s39, 0
      %p60 = por %p58, %p59
      %p61 = scmp.ne.s32.totalorder %s47, %s48
      %p62 = scmp.eq.s32.totalorder %s40, 1
      %p63 = por %p61, %p62
      %p65 = scmp.ne.s32.totalorder %s48, %s64
      %p66 = scmp.eq.s32.totalorder %s40, 0
      %p67 = por %p65, %p66
      %s69 = sadd.s32 %s68, 1
      %p72 = scmp.eq.s32.totalorder %s34, 1
      %p73 = scmp.ne.s32.totalorder %s68, %s70
      %p74 = scmp.eq.s32.totalorder %s34, 0
      %p75 = por %p73, %p74
      %p76 = scmp.ne.s32.totalorder %s68, %s70
      %p77 = scmp.eq.s32.totalorder %s39, 1
      %p78 = por %p76, %p77
      %p79 = scmp.ne.s32.totalorder %s70, %s71
      %p80 = scmp.eq.s32.totalorder %s39, 0
      %p81 = por %p79, %p80
      %p82 = scmp.ne.s32.totalorder %s70, %s71
      %p83 = scmp.eq.s32.totalorder %s40, 1
      %p84 = por %p82, %p83
      %p86 = scmp.ne.s32.totalorder %s71, %s85
      %p87 = scmp.eq.s32.totalorder %s40, 0
      %p88 = por %p86, %p87
      %s90 = sadd.s32 %s89, 1
      %p93 = scmp.eq.s32.totalorder %s34, 1
      %p94 = scmp.ne.s32.totalorder %s89, %s91
      %p95 = scmp.eq.s32.totalorder %s34, 0
      %p96 = por %p94, %p95
      %p97 = scmp.ne.s32.totalorder %s89, %s91
      %p98 = scmp.eq.s32.totalorder %s39, 1
      %p99 = por %p97, %p98
      %p100 = scmp.ne.s32.totalorder %s91, %s92
      %p101 = scmp.eq.s32.totalorder %s39, 0
      %p102 = por %p100, %p101
      %p103 = scmp.ne.s32.totalorder %s91, %s92
      %p104 = scmp.eq.s32.totalorder %s40, 1
      %p105 = por %p103, %p104
      %p107 = scmp.ne.s32.totalorder %s92, %s106
      %p108 = scmp.eq.s32.totalorder %s40, 0
      %p109 = por %p107, %p108
      %s111 = sadd.s32 %s110, 1
      %p114 = scmp.eq.s32.totalorder %s34, 1
      %p115 = scmp.ne.s32.totalorder %s110, %s112
      %p116 = scmp.eq.s32.totalorder %s34, 0
      %p117 = por %p115, %p116
      %p118 = scmp.ne.s32.totalorder %s110, %s112
      %p119 = scmp.eq.s32.totalorder %s39, 1
      %p120 = por %p118, %p119
      %p121 = scmp.ne.s32.totalorder %s112, %s113
      %p122 = scmp.eq.s32.totalorder %s39, 0
      %p123 = por %p121, %p122
      %p124 = scmp.ne.s32.totalorder %s112, %s113
      %p125 = scmp.eq.s32.totalorder %s40, 1
      %p126 = por %p124, %p125
      %p128 = scmp.ne.s32.totalorder %s113, %s127
      %p129 = scmp.eq.s32.totalorder %s40, 0
      %p130 = por %p128, %p129
      %s132 = sadd.s32 %s131, 1
      %p135 = scmp.eq.s32.totalorder %s34, 1
      %p136 = scmp.ne.s32.totalorder %s131, %s133
      %p137 = scmp.eq.s32.totalorder %s34, 0
      %p138 = por %p136, %p137
      %p139 = scmp.ne.s32.totalorder %s131, %s133
      %p140 = scmp.eq.s32.totalorder %s39, 1
      %p141 = por %p139, %p140
      %p142 = scmp.ne.s32.totalorder %s133, %s134
      %p143 = scmp.eq.s32.totalorder %s39, 0
      %p144 = por %p142, %p143
      %p145 = scmp.ne.s32.totalorder %s133, %s134
      %p146 = scmp.eq.s32.totalorder %s40, 1
      %p147 = por %p145, %p146
      %p149 = scmp.ne.s32.totalorder %s134, %s148
      %p150 = scmp.eq.s32.totalorder %s40, 0
      %p151 = por %p149, %p150
      %s153 = sadd.s32 %s152, 1
      %p156 = scmp.eq.s32.totalorder %s34, 1
      %p157 = scmp.ne.s32.totalorder %s152, %s154
      %p158 = scmp.eq.s32.totalorder %s34, 0
      %p159 = por %p157, %p158
      %p160 = scmp.ne.s32.totalorder %s152, %s154
      %p161 = scmp.eq.s32.totalorder %s39, 1
      %p162 = por %p160, %p161
      %p163 = scmp.ne.s32.totalorder %s154, %s155
      %p164 = scmp.eq.s32.totalorder %s39, 0
      %p165 = por %p163, %p164
      %p166 = scmp.ne.s32.totalorder %s154, %s155
      %p167 = scmp.eq.s32.totalorder %s40, 1
      %p168 = por %p166, %p167
      %p170 = scmp.ne.s32.totalorder %s155, %s169
      %p171 = scmp.eq.s32.totalorder %s40, 0
      %p172 = por %p170, %p171
      %s174 = sadd.s32 %s173, 1
      %p177 = scmp.eq.s32.totalorder %s34, 1
      %p178 = scmp.ne.s32.totalorder %s173, %s175
      %p179 = scmp.eq.s32.totalorder %s34, 0
      %p180 = por %p178, %p179
      %p181 = scmp.ne.s32.totalorder %s173, %s175
      %p182 = scmp.eq.s32.totalorder %s39, 1
      %p183 = por %p181, %p182
      %p184 = scmp.ne.s32.totalorder %s175, %s176
      %p185 = scmp.eq.s32.totalorder %s39, 0
      %p186 = por %p184, %p185
      %p187 = scmp.ne.s32.totalorder %s175, %s176
      %p188 = scmp.eq.s32.totalorder %s40, 1
      %p189 = por %p187, %p188
      %p191 = scmp.ne.s32.totalorder %s176, %s190
      %p192 = scmp.eq.s32.totalorder %s40, 0
      %p193 = por %p191, %p192
      %s195 = sadd.s32 %s194, 1
      %p198 = scmp.eq.s32.totalorder %s34, 1
      %p199 = scmp.ne.s32.totalorder %s194, %s196
      %p200 = scmp.eq.s32.totalorder %s34, 0
      %p201 = por %p199, %p200
      %p202 = scmp.ne.s32.totalorder %s194, %s196
      %p203 = scmp.eq.s32.totalorder %s39, 1
      %p204 = por %p202, %p203
      %p205 = scmp.ne.s32.totalorder %s196, %s197
      %p206 = scmp.eq.s32.totalorder %s39, 0
      %p207 = por %p205, %p206
      %p208 = scmp.ne.s32.totalorder %s196, %s197
      %p209 = scmp.eq.s32.totalorder %s40, 1
      %p210 = por %p208, %p209
      %p212 = scmp.ne.s32.totalorder %s197, %s211
      %p213 = scmp.eq.s32.totalorder %s40, 0
      %p214 = por %p212, %p213
      %s216 = sadd.s32 %s215, 1
      %p219 = scmp.eq.s32.totalorder %s34, 1
      %p220 = scmp.ne.s32.totalorder %s215, %s217
      %p221 = scmp.eq.s32.totalorder %s34, 0
      %p222 = por %p220, %p221
      %p223 = scmp.ne.s32.totalorder %s215, %s217
      %p224 = scmp.eq.s32.totalorder %s39, 1
      %p225 = por %p223, %p224
      %p226 = scmp.ne.s32.totalorder %s217, %s218
      %p227 = scmp.eq.s32.totalorder %s39, 0
      %p228 = por %p226, %p227
      %p229 = scmp.ne.s32.totalorder %s217, %s218
      %p230 = scmp.eq.s32.totalorder %s40, 1
      %p231 = por %p229, %p230
      %p233 = scmp.ne.s32.totalorder %s218, %s232
      %p234 = scmp.eq.s32.totalorder %s40, 0
      %p235 = por %p233, %p234
      %s237 = sadd.s32 %s236, 1
      %p240 = scmp.eq.s32.totalorder %s34, 1
      %p241 = scmp.ne.s32.totalorder %s236, %s238
      %p242 = scmp.eq.s32.totalorder %s34, 0
      %p243 = por %p241, %p242
      %p244 = scmp.ne.s32.totalorder %s236, %s238
      %p245 = scmp.eq.s32.totalorder %s39, 1
      %p246 = por %p244, %p245
      %p247 = scmp.ne.s32.totalorder %s238, %s239
      %p248 = scmp.eq.s32.totalorder %s39, 0
      %p249 = por %p247, %p248
      %p250 = scmp.ne.s32.totalorder %s238, %s239
      %p251 = scmp.eq.s32.totalorder %s40, 1
      %p252 = por %p250, %p251
      %p254 = scmp.ne.s32.totalorder %s239, %s253
      %p255 = scmp.eq.s32.totalorder %s40, 0
      %p256 = por %p254, %p255
      %s258 = sadd.s32 %s257, 1
      %p261 = scmp.eq.s32.totalorder %s34, 1
      %p262 = scmp.ne.s32.totalorder %s257, %s259
      %p263 = scmp.eq.s32.totalorder %s34, 0
      %p264 = por %p262, %p263
      %p265 = scmp.ne.s32.totalorder %s257, %s259
      %p266 = scmp.eq.s32.totalorder %s39, 1
      %p267 = por %p265, %p266
      %p268 = scmp.ne.s32.totalorder %s259, %s260
      %p269 = scmp.eq.s32.totalorder %s39, 0
      %p270 = por %p268, %p269
      %p271 = scmp.ne.s32.totalorder %s259, %s260
      %p272 = scmp.eq.s32.totalorder %s40, 1
      %p273 = por %p271, %p272
      %p275 = scmp.ne.s32.totalorder %s260, %s274
      %p276 = scmp.eq.s32.totalorder %s40, 0
      %p277 = por %p275, %p276
      %s279 = sadd.s32 %s278, 1
      %p282 = scmp.eq.s32.totalorder %s34, 1
      %p283 = scmp.ne.s32.totalorder %s278, %s280
      %p284 = scmp.eq.s32.totalorder %s34, 0
      %p285 = por %p283, %p284
      %p286 = scmp.ne.s32.totalorder %s278, %s280
      %p287 = scmp.eq.s32.totalorder %s39, 1
      %p288 = por %p286, %p287
      %p289 = scmp.ne.s32.totalorder %s280, %s281
      %p290 = scmp.eq.s32.totalorder %s39, 0
      %p291 = por %p289, %p290
      %p292 = scmp.ne.s32.totalorder %s280, %s281
      %p293 = scmp.eq.s32.totalorder %s40, 1
      %p294 = por %p292, %p293
      %p296 = scmp.ne.s32.totalorder %s281, %s295
      %p297 = scmp.eq.s32.totalorder %s40, 0
      %p298 = por %p296, %p297
      %s300 = sadd.s32 %s299, 1
      %p303 = scmp.eq.s32.totalorder %s34, 1
      %p304 = scmp.ne.s32.totalorder %s299, %s301
      %p305 = scmp.eq.s32.totalorder %s34, 0
      %p306 = por %p304, %p305
      %p307 = scmp.ne.s32.totalorder %s299, %s301
      %p308 = scmp.eq.s32.totalorder %s39, 1
      %p309 = por %p307, %p308
      %p310 = scmp.ne.s32.totalorder %s301, %s302
      %p311 = scmp.eq.s32.totalorder %s39, 0
      %p312 = por %p310, %p311
      %p313 = scmp.ne.s32.totalorder %s301, %s302
      %p314 = scmp.eq.s32.totalorder %s40, 1
      %p315 = por %p313, %p314
      %p317 = scmp.ne.s32.totalorder %s302, %s316
      %p318 = scmp.eq.s32.totalorder %s40, 0
      %p319 = por %p317, %p318
      %s321 = sadd.s32 %s320, 1
      %p324 = scmp.eq.s32.totalorder %s34, 1
      %p325 = scmp.ne.s32.totalorder %s320, %s322
      %p326 = scmp.eq.s32.totalorder %s34, 0
      %p327 = por %p325, %p326
      %p328 = scmp.ne.s32.totalorder %s320, %s322
      %p329 = scmp.eq.s32.totalorder %s39, 1
      %p330 = por %p328, %p329
      %p331 = scmp.ne.s32.totalorder %s322, %s323
      %p332 = scmp.eq.s32.totalorder %s39, 0
      %p333 = por %p331, %p332
      %p334 = scmp.ne.s32.totalorder %s322, %s323
      %p335 = scmp.eq.s32.totalorder %s40, 1
      %p336 = por %p334, %p335
      %p338 = scmp.ne.s32.totalorder %s323, %s337
      %p339 = scmp.eq.s32.totalorder %s40, 0
      %p340 = por %p338, %p339
      %s342 = sadd.s32 %s341, 1
      %p345 = scmp.eq.s32.totalorder %s34, 1
      %p346 = scmp.ne.s32.totalorder %s341, %s343
      %p347 = scmp.eq.s32.totalorder %s34, 0
      %p348 = por %p346, %p347
      %p349 = scmp.ne.s32.totalorder %s341, %s343
      %p350 = scmp.eq.s32.totalorder %s39, 1
      %p351 = por %p349, %p350
      %p352 = scmp.ne.s32.totalorder %s343, %s344
      %p353 = scmp.eq.s32.totalorder %s39, 0
      %p354 = por %p352, %p353
      %p355 = scmp.ne.s32.totalorder %s343, %s344
      %p356 = scmp.eq.s32.totalorder %s40, 1
      %p357 = por %p355, %p356
      %p359 = scmp.ne.s32.totalorder %s344, %s358
      %p360 = scmp.eq.s32.totalorder %s40, 0
      %p361 = por %p359, %p360
      %s363 = sadd.s32 %s362, 1
      %p366 = scmp.eq.s32.totalorder %s34, 1
      %p367 = scmp.ne.s32.totalorder %s362, %s364
      %p368 = scmp.eq.s32.totalorder %s34, 0
      %p369 = por %p367, %p368
      %p370 = scmp.ne.s32.totalorder %s362, %s364
      %p371 = scmp.eq.s32.totalorder %s39, 1
      %p372 = por %p370, %p371
      %p373 = scmp.ne.s32.totalorder %s364, %s365
      %p374 = scmp.eq.s32.totalorder %s39, 0
      %p375 = por %p373, %p374
      %p376 = scmp.ne.s32.totalorder %s364, %s365
      %p377 = scmp.eq.s32.totalorder %s40, 1
      %p378 = por %p376, %p377
      %p380 = scmp.ne.s32.totalorder %s365, %s379
      %p381 = scmp.eq.s32.totalorder %s40, 0
      %p382 = por %p380, %p381
      %s384 = sadd.s32 %s383, 1
      %p387 = scmp.eq.s32.totalorder %s34, 1
      %p388 = scmp.ne.s32.totalorder %s383, %s385
      %p389 = scmp.eq.s32.totalorder %s34, 0
      %p390 = por %p388, %p389
      %p391 = scmp.ne.s32.totalorder %s383, %s385
      %p392 = scmp.eq.s32.totalorder %s39, 1
      %p393 = por %p391, %p392
      %p394 = scmp.ne.s32.totalorder %s385, %s386
      %p395 = scmp.eq.s32.totalorder %s39, 0
      %p396 = por %p394, %p395
      %p397 = scmp.ne.s32.totalorder %s385, %s386
      %p398 = scmp.eq.s32.totalorder %s40, 1
      %p399 = por %p397, %p398
      %p401 = scmp.ne.s32.totalorder %s386, %s400
      %p402 = scmp.eq.s32.totalorder %s40, 0
      %p403 = por %p401, %p402
      %s405 = sadd.s32 %s404, 1
      %p408 = scmp.eq.s32.totalorder %s34, 1
      %p409 = scmp.ne.s32.totalorder %s404, %s406
      %p410 = scmp.eq.s32.totalorder %s34, 0
      %p411 = por %p409, %p410
      %p412 = scmp.ne.s32.totalorder %s404, %s406
      %p413 = scmp.eq.s32.totalorder %s39, 1
      %p414 = por %p412, %p413
      %p415 = scmp.ne.s32.totalorder %s406, %s407
      %p416 = scmp.eq.s32.totalorder %s39, 0
      %p417 = por %p415, %p416
      %p418 = scmp.ne.s32.totalorder %s406, %s407
      %p419 = scmp.eq.s32.totalorder %s40, 1
      %p420 = por %p418, %p419
      %p422 = scmp.ne.s32.totalorder %s407, %s421
      %p423 = scmp.eq.s32.totalorder %s40, 0
      %p424 = por %p422, %p423
      %s426 = sadd.s32 %s425, 1
      %p429 = scmp.eq.s32.totalorder %s34, 1
      %p430 = scmp.ne.s32.totalorder %s425, %s427
      %p431 = scmp.eq.s32.totalorder %s34, 0
      %p432 = por %p430, %p431
      %p433 = scmp.ne.s32.totalorder %s425, %s427
      %p434 = scmp.eq.s32.totalorder %s39, 1
      %p435 = por %p433, %p434
      %p436 = scmp.ne.s32.totalorder %s427, %s428
      %p437 = scmp.eq.s32.totalorder %s39, 0
      %p438 = por %p436, %p437
      %p439 = scmp.ne.s32.totalorder %s427, %s428
      %p440 = scmp.eq.s32.totalorder %s40, 1
      %p441 = por %p439, %p440
      %p443 = scmp.ne.s32.totalorder %s428, %s442
      %p444 = scmp.eq.s32.totalorder %s40, 0
      %p445 = por %p443, %p444
      %s447 = sadd.s32 %s446, 1
      %p450 = scmp.eq.s32.totalorder %s34, 1
      %p451 = scmp.ne.s32.totalorder %s446, %s448
      %p452 = scmp.eq.s32.totalorder %s34, 0
      %p453 = por %p451, %p452
      %p454 = scmp.ne.s32.totalorder %s446, %s448
      %p455 = scmp.eq.s32.totalorder %s39, 1
      %p456 = por %p454, %p455
      %p457 = scmp.ne.s32.totalorder %s448, %s449
      %p458 = scmp.eq.s32.totalorder %s39, 0
      %p459 = por %p457, %p458
      %p460 = scmp.ne.s32.totalorder %s448, %s449
      %p461 = scmp.eq.s32.totalorder %s40, 1
      %p462 = por %p460, %p461
      %p464 = scmp.ne.s32.totalorder %s449, %s463
      %p465 = scmp.eq.s32.totalorder %s40, 0
      %p466 = por %p464, %p465
      %s468 = sadd.s32 %s467, 1
      %p471 = scmp.eq.s32.totalorder %s34, 1
      %p472 = scmp.ne.s32.totalorder %s467, %s469
      %p473 = scmp.eq.s32.totalorder %s34, 0
      %p474 = por %p472, %p473
      %p475 = scmp.ne.s32.totalorder %s467, %s469
      %p476 = scmp.eq.s32.totalorder %s39, 1
      %p477 = por %p475, %p476
      %p478 = scmp.ne.s32.totalorder %s469, %s470
      %p479 = scmp.eq.s32.totalorder %s39, 0
      %p480 = por %p478, %p479
      %p481 = scmp.ne.s32.totalorder %s469, %s470
      %p482 = scmp.eq.s32.totalorder %s40, 1
      %p483 = por %p481, %p482
      %p485 = scmp.ne.s32.totalorder %s470, %s484
      %p486 = scmp.eq.s32.totalorder %s40, 0
      %p487 = por %p485, %p486
      %s488 = ssub.s32 %s34, %s41
      %p489 = scmp.eq.s32.totalorder %s488, 0
      %s491 = sadd.s32 %s490, 1
      %s492 = scalar_select %p489, %s490, %s491
      %p495 = pneg %p489
      %p496 = scmp.eq.s32.totalorder %s34, 1
      %p497 = por %p495, %p496
      %p498 = scmp.ne.s32.totalorder %s490, %s493
      %p499 = scmp.eq.s32.totalorder %s34, 0
      %p500 = por %p498, %p499
      %p501 = scmp.ne.s32.totalorder %s490, %s493
      %p502 = scmp.eq.s32.totalorder %s39, 1
      %p503 = por %p501, %p502
      %p504 = scmp.ne.s32.totalorder %s493, %s494
      %p505 = scmp.eq.s32.totalorder %s39, 0
      %p506 = por %p504, %p505
      %p507 = scmp.ne.s32.totalorder %s493, %s494
      %p508 = scmp.eq.s32.totalorder %s40, 1
      %p509 = por %p507, %p508
      %p511 = scmp.ne.s32.totalorder %s494, %s510
      %p512 = scmp.eq.s32.totalorder %s40, 0
      %p513 = por %p511, %p512
      %p514 = scmp.le.s32.totalorder 1, %s34
      %p515 = scmp.lt.s32.totalorder %s34, 3
      %p516 = pnand %p514, %p515
      %p517 = pneg %p516
      // Predicated region
      $region9: #{tpu_custom_call.1} parent=5 // pred_check
        _
      $region10: #{tpu_custom_call.1} parent=5 // pred_check_branch
        %519 = sbr.rel (%p516) target = $region12
      $region11: #{tpu_custom_call.1} parent=5 // pred_region
        %s520 = ssub.s32 %s34, 1
        // Predicated region
        $region13: #{tpu_custom_call.1} parent=11 // pred_check
          %p521 = pneg %p81
        $region14: #{tpu_custom_call.1} parent=11 // pred_check_branch
          %523 = sbr.rel (%p521) target = $region16
        $region15: #{tpu_custom_call.1} parent=11 // pred_region
          %s525 = ssub.s32 128, 128
          %526 = vsyncadd [#allocation6], %s525
          %s528 = sshll.u32 [#allocation5], 4
          %s529 = int_to_ptr.vmem [resolvable:$true] %s528
          %531 = dma.hbm_to_vmem [thread:$0]  %s1, 128, %s529, [#allocation6]
        $region16: #{tpu_custom_call.1} parent=11 // pred_fallthru
          _
        // Predicated region
        $region17: #{tpu_custom_call.1} parent=11 // pred_check
          %p532 = pneg %p102
        $region18: #{tpu_custom_call.1} parent=11 // pred_check_branch
          %534 = sbr.rel (%p532) target = $region20
        $region19: #{tpu_custom_call.1} parent=11 // pred_region
          %s536 = ssub.s32 128, 128
          %537 = vsyncadd [#allocation6], %s536
          %s539 = sshll.u32 [#allocation7], 4
          %s540 = int_to_ptr.vmem [resolvable:$true] %s539
          %542 = dma.hbm_to_vmem [thread:$0]  %s2, 128, %s540, [#allocation6]
        $region20: #{tpu_custom_call.1} parent=11 // pred_fallthru
          _
        // Predicated region
        $region21: #{tpu_custom_call.1} parent=11 // pred_check
          %p543 = pneg %p123
        $region22: #{tpu_custom_call.1} parent=11 // pred_check_branch
          %545 = sbr.rel (%p543) target = $region24
        $region23: #{tpu_custom_call.1} parent=11 // pred_region
          _
        $region24: #{tpu_custom_call.1} parent=11 // pred_fallthru
          _
        // Predicated region
        $region25: #{tpu_custom_call.1} parent=11 // pred_check
          %p546 = pneg %p144
        $region26: #{tpu_custom_call.1} parent=11 // pred_check_branch
          %548 = sbr.rel (%p546) target = $region28
        $region27: #{tpu_custom_call.1} parent=11 // pred_region
          _
        $region28: #{tpu_custom_call.1} parent=11 // pred_fallthru
          _
        // Predicated region
        $region29: #{tpu_custom_call.1} parent=11 // pred_check
          %p549 = pneg %p165
        $region30: #{tpu_custom_call.1} parent=11 // pred_check_branch
          %551 = sbr.rel (%p549) target = $region32
        $region31: #{tpu_custom_call.1} parent=11 // pred_region
          _
        $region32: #{tpu_custom_call.1} parent=11 // pred_fallthru
          _
        // Predicated region
        $region33: #{tpu_custom_call.1} parent=11 // pred_check
          %p552 = pneg %p186
        $region34: #{tpu_custom_call.1} parent=11 // pred_check_branch
          %554 = sbr.rel (%p552) target = $region36
        $region35: #{tpu_custom_call.1} parent=11 // pred_region
          _
        $region36: #{tpu_custom_call.1} parent=11 // pred_fallthru
          _
        // Predicated region
        $region37: #{tpu_custom_call.1} parent=11 // pred_check
          %p555 = pneg %p207
        $region38: #{tpu_custom_call.1} parent=11 // pred_check_branch
          %557 = sbr.rel (%p555) target = $region40
        $region39: #{tpu_custom_call.1} parent=11 // pred_region
          _
        $region40: #{tpu_custom_call.1} parent=11 // pred_fallthru
          _
        // Predicated region
        $region41: #{tpu_custom_call.1} parent=11 // pred_check
          %p558 = pneg %p228
        $region42: #{tpu_custom_call.1} parent=11 // pred_check_branch
          %560 = sbr.rel (%p558) target = $region44
        $region43: #{tpu_custom_call.1} parent=11 // pred_region
          _
        $region44: #{tpu_custom_call.1} parent=11 // pred_fallthru
          _
        // Predicated region
        $region45: #{tpu_custom_call.1} parent=11 // pred_check
          %p561 = pneg %p249
        $region46: #{tpu_custom_call.1} parent=11 // pred_check_branch
          %563 = sbr.rel (%p561) target = $region48
        $region47: #{tpu_custom_call.1} parent=11 // pred_region
          _
        $region48: #{tpu_custom_call.1} parent=11 // pred_fallthru
          _
        // Predicated region
        $region49: #{tpu_custom_call.1} parent=11 // pred_check
          %p564 = pneg %p270
        $region50: #{tpu_custom_call.1} parent=11 // pred_check_branch
          %566 = sbr.rel (%p564) target = $region52
        $region51: #{tpu_custom_call.1} parent=11 // pred_region
          _
        $region52: #{tpu_custom_call.1} parent=11 // pred_fallthru
          _
        // Predicated region
        $region53: #{tpu_custom_call.1} parent=11 // pred_check
          %p567 = pneg %p291
        $region54: #{tpu_custom_call.1} parent=11 // pred_check_branch
          %569 = sbr.rel (%p567) target = $region56
        $region55: #{tpu_custom_call.1} parent=11 // pred_region
          _
        $region56: #{tpu_custom_call.1} parent=11 // pred_fallthru
          _
        // Predicated region
        $region57: #{tpu_custom_call.1} parent=11 // pred_check
          %p570 = pneg %p312
        $region58: #{tpu_custom_call.1} parent=11 // pred_check_branch
          %572 = sbr.rel (%p570) target = $region60
        $region59: #{tpu_custom_call.1} parent=11 // pred_region
          _
        $region60: #{tpu_custom_call.1} parent=11 // pred_fallthru
          _
        // Predicated region
        $region61: #{tpu_custom_call.1} parent=11 // pred_check
          %p573 = pneg %p333
        $region62: #{tpu_custom_call.1} parent=11 // pred_check_branch
          %575 = sbr.rel (%p573) target = $region64
        $region63: #{tpu_custom_call.1} parent=11 // pred_region
          _
        $region64: #{tpu_custom_call.1} parent=11 // pred_fallthru
          _
        // Predicated region
        $region65: #{tpu_custom_call.1} parent=11 // pred_check
          %p576 = pneg %p354
        $region66: #{tpu_custom_call.1} parent=11 // pred_check_branch
          %578 = sbr.rel (%p576) target = $region68
        $region67: #{tpu_custom_call.1} parent=11 // pred_region
          _
        $region68: #{tpu_custom_call.1} parent=11 // pred_fallthru
          _
        // Predicated region
        $region69: #{tpu_custom_call.1} parent=11 // pred_check
          %p579 = pneg %p375
        $region70: #{tpu_custom_call.1} parent=11 // pred_check_branch
          %581 = sbr.rel (%p579) target = $region72
        $region71: #{tpu_custom_call.1} parent=11 // pred_region
          _
        $region72: #{tpu_custom_call.1} parent=11 // pred_fallthru
          _
        // Predicated region
        $region73: #{tpu_custom_call.1} parent=11 // pred_check
          %p582 = pneg %p396
        $region74: #{tpu_custom_call.1} parent=11 // pred_check_branch
          %584 = sbr.rel (%p582) target = $region76
        $region75: #{tpu_custom_call.1} parent=11 // pred_region
          _
        $region76: #{tpu_custom_call.1} parent=11 // pred_fallthru
          _
        // Predicated region
        $region77: #{tpu_custom_call.1} parent=11 // pred_check
          %p585 = pneg %p417
        $region78: #{tpu_custom_call.1} parent=11 // pred_check_branch
          %587 = sbr.rel (%p585) target = $region80
        $region79: #{tpu_custom_call.1} parent=11 // pred_region
          _
        $region80: #{tpu_custom_call.1} parent=11 // pred_fallthru
          _
        // Predicated region
        $region81: #{tpu_custom_call.1} parent=11 // pred_check
          %p588 = pneg %p438
        $region82: #{tpu_custom_call.1} parent=11 // pred_check_branch
          %590 = sbr.rel (%p588) target = $region84
        $region83: #{tpu_custom_call.1} parent=11 // pred_region
          _
        $region84: #{tpu_custom_call.1} parent=11 // pred_fallthru
          _
        // Predicated region
        $region85: #{tpu_custom_call.1} parent=11 // pred_check
          %p591 = pneg %p459
        $region86: #{tpu_custom_call.1} parent=11 // pred_check_branch
          %593 = sbr.rel (%p591) target = $region88
        $region87: #{tpu_custom_call.1} parent=11 // pred_region
          _
        $region88: #{tpu_custom_call.1} parent=11 // pred_fallthru
          _
        // Predicated region
        $region89: #{tpu_custom_call.1} parent=11 // pred_check
          %p594 = pneg %p480
        $region90: #{tpu_custom_call.1} parent=11 // pred_check_branch
          %596 = sbr.rel (%p594) target = $region92
        $region91: #{tpu_custom_call.1} parent=11 // pred_region
          _
        $region92: #{tpu_custom_call.1} parent=11 // pred_fallthru
          _
      $region12: #{tpu_custom_call.1} parent=5 // pred_fallthru
        _
      %p597 = scmp.lt.s32.totalorder %s34, 2
      // Predicated region
      $region93: #{tpu_custom_call.1} parent=5 // pred_check
        %p598 = pneg %p597
      $region94: #{tpu_custom_call.1} parent=5 // pred_check_branch
        %600 = sbr.rel (%p598) target = $region96
      $region95: #{tpu_custom_call.1} parent=5 // pred_region
        // Predicated region
        $region97: #{tpu_custom_call.1} parent=95 // pred_check
          %p601 = pneg %p54
        $region98: #{tpu_custom_call.1} parent=95 // pred_check_branch
          %603 = sbr.rel (%p601) target = $region100
        $region99: #{tpu_custom_call.1} parent=95 // pred_region
          %s604 = sand.u32 %s44, 1
          %s605 = scalar_lea.sflag [#allocation3], %s604
          %s606 = sand.u32 %s44, 1
          %s607 = smul.addr %s606, 8
          %s608 = scalar_lea.vmem [#allocation2], %s607
          %s610 = ssub.s32 128, 128
          %611 = vsyncadd %s605, %s610
          %s612 = smul.addr %s34, 128
          %s613 = scalar_lea.hbm %s0, %s612
          %s615 = sshll.u32 %s608, 4
          %s616 = int_to_ptr.vmem [resolvable:$true] %s615
          %618 = dma.hbm_to_vmem [thread:$0]  %s613, 128, %s616, %s605
        $region100: #{tpu_custom_call.1} parent=95 // pred_fallthru
          _
      $region96: #{tpu_custom_call.1} parent=5 // pred_fallthru
        _
      %p619 = scmp.le.s32.totalorder 1, %s34
      %p620 = scmp.lt.s32.totalorder %s34, 3
      %p621 = pnand %p619, %p620
      %p622 = pneg %p621
      // Predicated region
      $region101: #{tpu_custom_call.1} parent=5 // pred_check
        _
      $region102: #{tpu_custom_call.1} parent=5 // pred_check_branch
        %624 = sbr.rel (%p621) target = $region104
      $region103: #{tpu_custom_call.1} parent=5 // pred_region
        %s625 = ssub.s32 %s34, 1
        %s626 = sand.u32 %s47, 1
        %s627 = scalar_lea.sflag [#allocation3], %s626
        %s628 = sand.u32 %s47, 1
        %s629 = smul.addr %s628, 8
        %s630 = scalar_lea.vmem [#allocation2], %s629
        // Predicated region
        $region105: #{tpu_custom_call.1} parent=103 // pred_check
          %p631 = pneg %p60
        $region106: #{tpu_custom_call.1} parent=103 // pred_check_branch
          %633 = sbr.rel (%p631) target = $region108
        $region107: #{tpu_custom_call.1} parent=103 // pred_region
          %634 = dma.done %s627, 128
        $region108: #{tpu_custom_call.1} parent=103 // pred_fallthru
          _
        // Predicated region
        $region109: #{tpu_custom_call.1} parent=103 // pred_check
          %p635 = pneg %p81
        $region110: #{tpu_custom_call.1} parent=103 // pred_check_branch
          %637 = sbr.rel (%p635) target = $region112
        $region111: #{tpu_custom_call.1} parent=103 // pred_region
          %638 = dma.done [#allocation6], 128
        $region112: #{tpu_custom_call.1} parent=103 // pred_fallthru
          _
        // Predicated region
        $region113: #{tpu_custom_call.1} parent=103 // pred_check
          %p639 = pneg %p102
        $region114: #{tpu_custom_call.1} parent=103 // pred_check_branch
          %641 = sbr.rel (%p639) target = $region116
        $region115: #{tpu_custom_call.1} parent=103 // pred_region
          %642 = dma.done [#allocation6], 128
        $region116: #{tpu_custom_call.1} parent=103 // pred_fallthru
          _
        %s643 = sand.u32 %s47, 1
        %s644 = scalar_lea.sflag [#allocation3], %s643
        %s645 = sand.u32 %s47, 1
        %s646 = smul.addr %s645, 8
        %s647 = scalar_lea.vmem [#allocation2], %s646
        %p648 = pneg %p60
        %p649 = pneg %p57
        %p650 = pneg %p81
        %p651 = pneg %p78
        %p652 = pneg %p102
        %p653 = pneg %p99
        %p654 = pneg %p123
        %p655 = pneg %p120
        %p656 = pneg %p144
        %p657 = pneg %p141
        %p658 = pneg %p165
        %p659 = pneg %p162
        %p660 = pneg %p186
        %p661 = pneg %p183
        %p662 = pneg %p207
        %p663 = pneg %p204
        %p664 = pneg %p228
        %p665 = pneg %p225
        %p666 = pneg %p249
        %p667 = pneg %p246
        %p668 = pneg %p270
        %p669 = pneg %p267
        %p670 = pneg %p291
        %p671 = pneg %p288
        %p672 = pneg %p312
        %p673 = pneg %p309
        %p674 = pneg %p333
        %p675 = pneg %p330
        %p676 = pneg %p354
        %p677 = pneg %p351
        %p678 = pneg %p375
        %p679 = pneg %p372
        %p680 = pneg %p396
        %p681 = pneg %p393
        %p682 = pneg %p417
        %p683 = pneg %p414
        %p684 = pneg %p438
        %p685 = pneg %p435
        %p686 = pneg %p459
        %p687 = pneg %p456
        %p688 = pneg %p480
        %p689 = pneg %p477
        %p690 = pneg %p506
        %p691 = pneg %p503
        %s692 = sand.u32 %s493, 1
        %s693 = scalar_lea.sflag [#allocation4], %s692
        %s694 = sand.u32 %s493, 1
        %s695 = smul.addr %s694, 8
        %s696 = scalar_lea.vmem [#allocation8], %s695
        %v697 = vld [vmem:[%s630] sm:$0xff]
        %v698 = vld [vmem:[%s3] sm:$0xff]
        %v699 = vld [vmem:[%s3 + $0x8] sm:$0xff]
        %v700 = vld [vmem:[%s3 + $0x10] sm:$0xff]
        %v701 = vld [vmem:[%s3 + $0x18] sm:$0xff]
        %v702 = vld [vmem:[%s4] sm:$0x1]
        %v703 = vld [vmem:[%s5] sm:$0xff]
        %v704 = vld [vmem:[%s5 + $0x8] sm:$0xff]
        %v705 = vld [vmem:[%s5 + $0x10] sm:$0xff]
        %v706 = vld [vmem:[%s5 + $0x18] sm:$0xff]
        %v707 = vld [vmem:[%s6] sm:$0x1]
        %v708 = vld [vmem:[#allocation5] sm:$0xff]
        %v710 = vlaneseq
        %v711 = vshrl.u32 %v710, 7
        %v712 = vsub.s32 0, %v711
        %v713 = vrot.slane %v702, %v712
        %vm715 = vcmask 261120
        %v717 = vsel %vm715, %v697, 0
        %719 = vmatprep.subr.mxu0 0.0
        %720 = vmatpush1.msra.mxu0 %v698
        %721 = vmatprep.subr.mxu0 0.0
        %722 = vmatpush1.msra.mxu0 %v699
        %723 = vmatprep.subr.mxu0 0.0
        %724 = vmatpush1.msra.mxu0 %v700
        %725 = vmatprep.subr.mxu0 0.0
        %726 = vmatpush1.msra.mxu0 %v701
        %727 = vmatprep.subr.mxu0 0.0
        %728 = vmatpush1.msra.mxu0 0.0
        %729 = vmatprep.subr.mxu0 0.0
        %730 = vmatpush1.msra.mxu0 0.0
        %731 = vmatprep.subr.mxu0 0.0
        %732 = vmatpush1.msra.mxu0 0.0
        %733 = vmatprep.subr.mxu0 0.0
        %734 = vmatpush1.msra.mxu0 0.0
        %735 = vmatprep.subr.mxu0 0.0
        %736 = vmatpush1.msra.mxu0 0.0
        %737 = vmatprep.subr.mxu0 0.0
        %738 = vmatpush1.msra.mxu0 0.0
        %739 = vmatprep.subr.mxu0 0.0
        %740 = vmatpush1.msra.mxu0 0.0
        %741 = vmatprep.subr.mxu0 0.0
        %742 = vmatpush1.msra.mxu0 0.0
        %743 = vmatprep.subr.mxu0 0.0
        %744 = vmatpush1.msra.mxu0 0.0
        %745 = vmatprep.subr.mxu0 0.0
        %746 = vmatpush1.msra.mxu0 0.0
        %747 = vmatprep.subr.mxu0 0.0
        %748 = vmatpush1.msra.mxu0 0.0
        %749 = vmatprep.subr.mxu0 0.0
        %750 = vmatpush1.msra.mxu0 0.0
        %751 = vmatprep.subr.mxu0 0.0
        %752 = vmatpush1.msra.mxu0 0.0
        %753 = vmatprep.subr.mxu0 0.0
        %754 = vmatpush1.msra.mxu0 0.0
        %755 = vmatprep.subr.mxu0 0.0
        %756 = vmatpush1.msra.mxu0 0.0
        %757 = vmatprep.subr.mxu0 0.0
        %758 = vmatpush1.msra.mxu0 0.0
        %759 = vmatprep.subr.mxu0 0.0
        %760 = vmatpush1.msra.mxu0 0.0
        %761 = vmatprep.subr.mxu0 0.0
        %762 = vmatpush1.msra.mxu0 0.0
        %763 = vmatprep.subr.mxu0 0.0
        %764 = vmatpush1.msra.mxu0 0.0
        %765 = vmatprep.subr.mxu0 0.0
        %766 = vmatpush1.msra.mxu0 0.0
        %767 = vmatprep.subr.mxu0 0.0
        %768 = vmatpush1.msra.mxu0 0.0
        %769 = vmatprep.subr.mxu0 0.0
        %770 = vmatpush1.msra.mxu0 0.0
        %771 = vmatprep.subr.mxu0 0.0
        %772 = vmatpush1.msra.mxu0 0.0
        %773 = vmatprep.subr.mxu0 0.0
        %774 = vmatpush1.msra.mxu0 0.0
        %775 = vmatprep.subr.mxu0 0.0
        %776 = vmatpush1.msra.mxu0 0.0
        %777 = vmatprep.subr.mxu0 0.0
        %778 = vmatpush1.msra.mxu0 0.0
        %779 = vmatprep.subr.mxu0 0.0
        %780 = vmatpush1.msra.mxu0 0.0
        %781 = vmatprep.subr.mxu0 0.0
        %782 = vmatpush1.msra.mxu0 0.0
        %783 = vmatprep.mubr.f32.mxu0 0.0
        %784 = vmatmul.mubr.f32.gmra.mrb[0].mxu0 %v717
        %v785 = vpop.f32.mrb[0].mxu0
        %v786 = vadd.f32 %v713, %v785
        %v787 = vpop.f32.mrb[0].mxu0
        %788 = vdwg.mxu0
        %790 = vrot.lane.b32.xlu0 %v786, 96
        %v791 = vpop.permute.xlu0 %790
        %vm792 = vcmask 64512
        %v793 = vsel %vm792, %v786, 0
        %v795 = vsel %vm792, %v791, 0
        %797 = vmatprep.subr.mxu0 0.0
        %798 = vmatpush1.xpose.msra.mxu0 %v795
        %799 = vmatprep.subr.mxu0 0.0
        %800 = vmatpush1.xpose.msra.mxu0 0.0
        %801 = vmatprep.subr.mxu0 0.0
        %802 = vmatpush1.xpose.msra.mxu0 0.0
        %803 = vmatprep.subr.mxu0 0.0
        %804 = vmatpush1.xpose.msra.mxu0 0.0
        %805 = vmatprep.subr.mxu0 0.0
        %806 = vmatpush1.xpose.msra.mxu0 0.0
        %807 = vmatprep.subr.mxu0 0.0
        %808 = vmatpush1.xpose.msra.mxu0 0.0
        %809 = vmatprep.subr.mxu0 0.0
        %810 = vmatpush1.xpose.msra.mxu0 0.0
        %811 = vmatprep.subr.mxu0 0.0
        %812 = vmatpush1.xpose.msra.mxu0 0.0
        %813 = vmatprep.subr.mxu0 0.0
        %814 = vmatpush1.xpose.msra.mxu0 0.0
        %815 = vmatprep.subr.mxu0 0.0
        %816 = vmatpush1.xpose.msra.mxu0 0.0
        %817 = vmatprep.subr.mxu0 0.0
        %818 = vmatpush1.xpose.msra.mxu0 0.0
        %819 = vmatprep.subr.mxu0 0.0
        %820 = vmatpush1.xpose.msra.mxu0 0.0
        %821 = vmatprep.subr.mxu0 0.0
        %822 = vmatpush1.xpose.msra.mxu0 0.0
        %823 = vmatprep.subr.mxu0 0.0
        %824 = vmatpush1.xpose.msra.mxu0 0.0
        %825 = vmatprep.subr.mxu0 0.0
        %826 = vmatpush1.xpose.msra.mxu0 0.0
        %827 = vmatprep.subr.mxu0 0.0
        %828 = vmatpush1.xpose.msra.mxu0 0.0
        %829 = vmatprep.subr.mxu0 0.0
        %830 = vmatpush1.xpose.msra.mxu0 0.0
        %831 = vmatprep.subr.mxu0 0.0
        %832 = vmatpush1.xpose.msra.mxu0 0.0
        %833 = vmatprep.subr.mxu0 0.0
        %834 = vmatpush1.xpose.msra.mxu0 0.0
        %835 = vmatprep.subr.mxu0 0.0
        %836 = vmatpush1.xpose.msra.mxu0 0.0
        %837 = vmatprep.subr.mxu0 0.0
        %838 = vmatpush1.xpose.msra.mxu0 0.0
        %839 = vmatprep.subr.mxu0 0.0
        %840 = vmatpush1.xpose.msra.mxu0 0.0
        %841 = vmatprep.subr.mxu0 0.0
        %842 = vmatpush1.xpose.msra.mxu0 0.0
        %843 = vmatprep.subr.mxu0 0.0
        %844 = vmatpush1.xpose.msra.mxu0 0.0
        %845 = vmatprep.subr.mxu0 0.0
        %846 = vmatpush1.xpose.msra.mxu0 0.0
        %847 = vmatprep.subr.mxu0 0.0
        %848 = vmatpush1.xpose.msra.mxu0 0.0
        %849 = vmatprep.subr.mxu0 0.0
        %850 = vmatpush1.xpose.msra.mxu0 0.0
        %851 = vmatprep.subr.mxu0 0.0
        %852 = vmatpush1.xpose.msra.mxu0 0.0
        %853 = vmatprep.subr.mxu0 0.0
        %854 = vmatpush1.xpose.msra.mxu0 0.0
        %855 = vmatprep.subr.mxu0 0.0
        %856 = vmatpush1.xpose.msra.mxu0 0.0
        %857 = vmatprep.subr.mxu0 0.0
        %858 = vmatpush1.xpose.msra.mxu0 0.0
        %859 = vmatprep.subr.mxu0 0.0
        %860 = vmatpush1.xpose.msra.mxu0 0.0
        %861 = vmatprep.mubr.f32.mxu0 0.0
        %862 = vmatmul.mubr.f32.gmra.mrb[0].mxu0 %v793
        %v863 = vpop.f32.mrb[0].mxu0
        %v864 = vadd.f32 0.0, %v863
        %v865 = vpop.f32.mrb[0].mxu0
        %866 = vdwg.mxu0
        %v867 = vmul.f32 %v864, 0.17677669
        %vm868 = vcmp.eq.f32.partialorder %v708, 0.0
        %v869 = vsel %vm868, -1e+20, %v867
        %v870 = vsel %vm792, %v869, -inf
        %871 = vmax.xlane.f32.xlu0 %v870
        %v872 = vpop.xlane.xlu0 %871
        %v873 = vsub.f32 %v869, %v872
        %v874 = vmul.f32 %v873, 1.442695
        %v875 = vpow.pop %v874
        %v876 = vsel %vm792, %v875, 0.0
        %877 = vadd.xlane.f32.xlu0 %v876
        %v878 = vpop.xlane.xlu0 %877
        %v879 = vrcp.pop %v878
        %v880 = vmul.f32 %v875, %v879
        %881 = vrot.lane.b32.xlu0 %v786, 64
        %v882 = vpop.permute.xlu0 %881
        %v885 = vsel %vm792, %v880, 0
        %887 = vmatprep.subr.mxu0 0.0
        %888 = vmatpush1.msra.mxu0 %v882
        %889 = vmatprep.subr.mxu0 0.0
        %890 = vmatpush1.msra.mxu0 0.0
        %891 = vmatprep.subr.mxu0 0.0
        %892 = vmatpush1.msra.mxu0 0.0
        %893 = vmatprep.subr.mxu0 0.0
        %894 = vmatpush1.msra.mxu0 0.0
        %895 = vmatprep.subr.mxu0 0.0
        %896 = vmatpush1.msra.mxu0 0.0
        %897 = vmatprep.subr.mxu0 0.0
        %898 = vmatpush1.msra.mxu0 0.0
        %899 = vmatprep.subr.mxu0 0.0
        %900 = vmatpush1.msra.mxu0 0.0
        %901 = vmatprep.subr.mxu0 0.0
        %902 = vmatpush1.msra.mxu0 0.0
        %903 = vmatprep.subr.mxu0 0.0
        %904 = vmatpush1.msra.mxu0 0.0
        %905 = vmatprep.subr.mxu0 0.0
        %906 = vmatpush1.msra.mxu0 0.0
        %907 = vmatprep.subr.mxu0 0.0
        %908 = vmatpush1.msra.mxu0 0.0
        %909 = vmatprep.subr.mxu0 0.0
        %910 = vmatpush1.msra.mxu0 0.0
        %911 = vmatprep.subr.mxu0 0.0
        %912 = vmatpush1.msra.mxu0 0.0
        %913 = vmatprep.subr.mxu0 0.0
        %914 = vmatpush1.msra.mxu0 0.0
        %915 = vmatprep.subr.mxu0 0.0
        %916 = vmatpush1.msra.mxu0 0.0
        %917 = vmatprep.subr.mxu0 0.0
        %918 = vmatpush1.msra.mxu0 0.0
        %919 = vmatprep.subr.mxu0 0.0
        %920 = vmatpush1.msra.mxu0 0.0
        %921 = vmatprep.subr.mxu0 0.0
        %922 = vmatpush1.msra.mxu0 0.0
        %923 = vmatprep.subr.mxu0 0.0
        %924 = vmatpush1.msra.mxu0 0.0
        %925 = vmatprep.subr.mxu0 0.0
        %926 = vmatpush1.msra.mxu0 0.0
        %927 = vmatprep.subr.mxu0 0.0
        %928 = vmatpush1.msra.mxu0 0.0
        %929 = vmatprep.subr.mxu0 0.0
        %930 = vmatpush1.msra.mxu0 0.0
        %931 = vmatprep.subr.mxu0 0.0
        %932 = vmatpush1.msra.mxu0 0.0
        %933 = vmatprep.subr.mxu0 0.0
        %934 = vmatpush1.msra.mxu0 0.0
        %935 = vmatprep.subr.mxu0 0.0
        %936 = vmatpush1.msra.mxu0 0.0
        %937 = vmatprep.subr.mxu0 0.0
        %938 = vmatpush1.msra.mxu0 0.0
        %939 = vmatprep.subr.mxu0 0.0
        %940 = vmatpush1.msra.mxu0 0.0
        %941 = vmatprep.subr.mxu0 0.0
        %942 = vmatpush1.msra.mxu0 0.0
        %943 = vmatprep.subr.mxu0 0.0
        %944 = vmatpush1.msra.mxu0 0.0
        %945 = vmatprep.subr.mxu0 0.0
        %946 = vmatpush1.msra.mxu0 0.0
        %947 = vmatprep.subr.mxu0 0.0
        %948 = vmatpush1.msra.mxu0 0.0
        %949 = vmatprep.subr.mxu0 0.0
        %950 = vmatpush1.msra.mxu0 0.0
        %951 = vmatprep.mubr.f32.mxu0 0.0
        %952 = vmatmul.mubr.f32.gmra.mrb[0].mxu0 %v885
        %v953 = vpop.f32.mrb[0].mxu0
        %v954 = vadd.f32 0.0, %v953
        %v955 = vpop.f32.mrb[0].mxu0
        %956 = vdwg.mxu0
        %957 = vrot.lane.b32.xlu0 %v786, 120
        %v958 = vpop.permute.xlu0 %957
        %959 = vrot.lane.b32.xlu0 %v786, 88
        %v960 = vpop.permute.xlu0 %959
        %v961 = vsel %vm792, %v958, 0
        %v963 = vsel %vm792, %v960, 0
        %965 = vmatprep.subr.mxu0 0.0
        %966 = vmatpush1.xpose.msra.mxu0 %v963
        %967 = vmatprep.subr.mxu0 0.0
        %968 = vmatpush1.xpose.msra.mxu0 0.0
        %969 = vmatprep.subr.mxu0 0.0
        %970 = vmatpush1.xpose.msra.mxu0 0.0
        %971 = vmatprep.subr.mxu0 0.0
        %972 = vmatpush1.xpose.msra.mxu0 0.0
        %973 = vmatprep.subr.mxu0 0.0
        %974 = vmatpush1.xpose.msra.mxu0 0.0
        %975 = vmatprep.subr.mxu0 0.0
        %976 = vmatpush1.xpose.msra.mxu0 0.0
        %977 = vmatprep.subr.mxu0 0.0
        %978 = vmatpush1.xpose.msra.mxu0 0.0
        %979 = vmatprep.subr.mxu0 0.0
        %980 = vmatpush1.xpose.msra.mxu0 0.0
        %981 = vmatprep.subr.mxu0 0.0
        %982 = vmatpush1.xpose.msra.mxu0 0.0
        %983 = vmatprep.subr.mxu0 0.0
        %984 = vmatpush1.xpose.msra.mxu0 0.0
        %985 = vmatprep.subr.mxu0 0.0
        %986 = vmatpush1.xpose.msra.mxu0 0.0
        %987 = vmatprep.subr.mxu0 0.0
        %988 = vmatpush1.xpose.msra.mxu0 0.0
        %989 = vmatprep.subr.mxu0 0.0
        %990 = vmatpush1.xpose.msra.mxu0 0.0
        %991 = vmatprep.subr.mxu0 0.0
        %992 = vmatpush1.xpose.msra.mxu0 0.0
        %993 = vmatprep.subr.mxu0 0.0
        %994 = vmatpush1.xpose.msra.mxu0 0.0
        %995 = vmatprep.subr.mxu0 0.0
        %996 = vmatpush1.xpose.msra.mxu0 0.0
        %997 = vmatprep.subr.mxu0 0.0
        %998 = vmatpush1.xpose.msra.mxu0 0.0
        %999 = vmatprep.subr.mxu0 0.0
        %1000 = vmatpush1.xpose.msra.mxu0 0.0
        %1001 = vmatprep.subr.mxu0 0.0
        %1002 = vmatpush1.xpose.msra.mxu0 0.0
        %1003 = vmatprep.subr.mxu0 0.0
        %1004 = vmatpush1.xpose.msra.mxu0 0.0
        %1005 = vmatprep.subr.mxu0 0.0
        %1006 = vmatpush1.xpose.msra.mxu0 0.0
        %1007 = vmatprep.subr.mxu0 0.0
        %1008 = vmatpush1.xpose.msra.mxu0 0.0
        %1009 = vmatprep.subr.mxu0 0.0
        %1010 = vmatpush1.xpose.msra.mxu0 0.0
        %1011 = vmatprep.subr.mxu0 0.0
        %1012 = vmatpush1.xpose.msra.mxu0 0.0
        %1013 = vmatprep.subr.mxu0 0.0
        %1014 = vmatpush1.xpose.msra.mxu0 0.0
        %1015 = vmatprep.subr.mxu0 0.0
        %1016 = vmatpush1.xpose.msra.mxu0 0.0
        %1017 = vmatprep.subr.mxu0 0.0
        %1018 = vmatpush1.xpose.msra.mxu0 0.0
        %1019 = vmatprep.subr.mxu0 0.0
        %1020 = vmatpush1.xpose.msra.mxu0 0.0
        %1021 = vmatprep.subr.mxu0 0.0
        %1022 = vmatpush1.xpose.msra.mxu0 0.0
        %1023 = vmatprep.subr.mxu0 0.0
        %1024 = vmatpush1.xpose.msra.mxu0 0.0
        %1025 = vmatprep.subr.mxu0 0.0
        %1026 = vmatpush1.xpose.msra.mxu0 0.0
        %1027 = vmatprep.subr.mxu0 0.0
        %1028 = vmatpush1.xpose.msra.mxu0 0.0
        %1029 = vmatprep.mubr.f32.mxu0 0.0
        %1030 = vmatmul.mubr.f32.gmra.mrb[0].mxu0 %v961
        %v1031 = vpop.f32.mrb[0].mxu0
        %v1032 = vadd.f32 0.0, %v1031
        %v1033 = vpop.f32.mrb[0].mxu0
        %1034 = vdwg.mxu0
        %v1035 = vmul.f32 %v1032, 0.17677669
        %v1036 = vsel %vm868, -1e+20, %v1035
        %v1037 = vsel %vm792, %v1036, -inf
        %1038 = vmax.xlane.f32.xlu0 %v1037
        %v1039 = vpop.xlane.xlu0 %1038
        %v1040 = vsub.f32 %v1036, %v1039
        %v1041 = vmul.f32 %v1040, 1.442695
        %v1042 = vpow.pop %v1041
        %v1043 = vsel %vm792, %v1042, 0.0
        %1044 = vadd.xlane.f32.xlu0 %v1043
        %v1045 = vpop.xlane.xlu0 %1044
        %v1046 = vrcp.pop %v1045
        %v1047 = vmul.f32 %v1042, %v1046
        %1048 = vrot.lane.b32.xlu0 %v786, 56
        %v1049 = vpop.permute.xlu0 %1048
        %v1052 = vsel %vm792, %v1047, 0
        %1054 = vmatprep.subr.mxu0 0.0
        %1055 = vmatpush1.msra.mxu0 %v1049
        %1056 = vmatprep.subr.mxu0 0.0
        %1057 = vmatpush1.msra.mxu0 0.0
        %1058 = vmatprep.subr.mxu0 0.0
        %1059 = vmatpush1.msra.mxu0 0.0
        %1060 = vmatprep.subr.mxu0 0.0
        %1061 = vmatpush1.msra.mxu0 0.0
        %1062 = vmatprep.subr.mxu0 0.0
        %1063 = vmatpush1.msra.mxu0 0.0
        %1064 = vmatprep.subr.mxu0 0.0
        %1065 = vmatpush1.msra.mxu0 0.0
        %1066 = vmatprep.subr.mxu0 0.0
        %1067 = vmatpush1.msra.mxu0 0.0
        %1068 = vmatprep.subr.mxu0 0.0
        %1069 = vmatpush1.msra.mxu0 0.0
        %1070 = vmatprep.subr.mxu0 0.0
        %1071 = vmatpush1.msra.mxu0 0.0
        %1072 = vmatprep.subr.mxu0 0.0
        %1073 = vmatpush1.msra.mxu0 0.0
        %1074 = vmatprep.subr.mxu0 0.0
        %1075 = vmatpush1.msra.mxu0 0.0
        %1076 = vmatprep.subr.mxu0 0.0
        %1077 = vmatpush1.msra.mxu0 0.0
        %1078 = vmatprep.subr.mxu0 0.0
        %1079 = vmatpush1.msra.mxu0 0.0
        %1080 = vmatprep.subr.mxu0 0.0
        %1081 = vmatpush1.msra.mxu0 0.0
        %1082 = vmatprep.subr.mxu0 0.0
        %1083 = vmatpush1.msra.mxu0 0.0
        %1084 = vmatprep.subr.mxu0 0.0
        %1085 = vmatpush1.msra.mxu0 0.0
        %1086 = vmatprep.subr.mxu0 0.0
        %1087 = vmatpush1.msra.mxu0 0.0
        %1088 = vmatprep.subr.mxu0 0.0
        %1089 = vmatpush1.msra.mxu0 0.0
        %1090 = vmatprep.subr.mxu0 0.0
        %1091 = vmatpush1.msra.mxu0 0.0
        %1092 = vmatprep.subr.mxu0 0.0
        %1093 = vmatpush1.msra.mxu0 0.0
        %1094 = vmatprep.subr.mxu0 0.0
        %1095 = vmatpush1.msra.mxu0 0.0
        %1096 = vmatprep.subr.mxu0 0.0
        %1097 = vmatpush1.msra.mxu0 0.0
        %1098 = vmatprep.subr.mxu0 0.0
        %1099 = vmatpush1.msra.mxu0 0.0
        %1100 = vmatprep.subr.mxu0 0.0
        %1101 = vmatpush1.msra.mxu0 0.0
        %1102 = vmatprep.subr.mxu0 0.0
        %1103 = vmatpush1.msra.mxu0 0.0
        %1104 = vmatprep.subr.mxu0 0.0
        %1105 = vmatpush1.msra.mxu0 0.0
        %1106 = vmatprep.subr.mxu0 0.0
        %1107 = vmatpush1.msra.mxu0 0.0
        %1108 = vmatprep.subr.mxu0 0.0
        %1109 = vmatpush1.msra.mxu0 0.0
        %1110 = vmatprep.subr.mxu0 0.0
        %1111 = vmatpush1.msra.mxu0 0.0
        %1112 = vmatprep.subr.mxu0 0.0
        %1113 = vmatpush1.msra.mxu0 0.0
        %1114 = vmatprep.subr.mxu0 0.0
        %1115 = vmatpush1.msra.mxu0 0.0
        %1116 = vmatprep.subr.mxu0 0.0
        %1117 = vmatpush1.msra.mxu0 0.0
        %1118 = vmatprep.mubr.f32.mxu0 0.0
        %1119 = vmatmul.mubr.f32.gmra.mrb[0].mxu0 %v1052
        %v1120 = vpop.f32.mrb[0].mxu0
        %v1121 = vadd.f32 0.0, %v1120
        %v1122 = vpop.f32.mrb[0].mxu0
        %1123 = vdwg.mxu0
        %v1125 = vsel %vm792, %v1121, 0
        %1127 = vmatprep.subr.mxu0 0.0
        %1128 = vmatpush1.msra.mxu0 %v704
        %1129 = vmatprep.subr.mxu0 0.0
        %1130 = vmatpush1.msra.mxu0 0.0
        %1131 = vmatprep.subr.mxu0 0.0
        %1132 = vmatpush1.msra.mxu0 0.0
        %1133 = vmatprep.subr.mxu0 0.0
        %1134 = vmatpush1.msra.mxu0 0.0
        %1135 = vmatprep.subr.mxu0 0.0
        %1136 = vmatpush1.msra.mxu0 0.0
        %1137 = vmatprep.subr.mxu0 0.0
        %1138 = vmatpush1.msra.mxu0 0.0
        %1139 = vmatprep.subr.mxu0 0.0
        %1140 = vmatpush1.msra.mxu0 0.0
        %1141 = vmatprep.subr.mxu0 0.0
        %1142 = vmatpush1.msra.mxu0 0.0
        %1143 = vmatprep.subr.mxu0 0.0
        %1144 = vmatpush1.msra.mxu0 0.0
        %1145 = vmatprep.subr.mxu0 0.0
        %1146 = vmatpush1.msra.mxu0 0.0
        %1147 = vmatprep.subr.mxu0 0.0
        %1148 = vmatpush1.msra.mxu0 0.0
        %1149 = vmatprep.subr.mxu0 0.0
        %1150 = vmatpush1.msra.mxu0 0.0
        %1151 = vmatprep.subr.mxu0 0.0
        %1152 = vmatpush1.msra.mxu0 0.0
        %1153 = vmatprep.subr.mxu0 0.0
        %1154 = vmatpush1.msra.mxu0 0.0
        %1155 = vmatprep.subr.mxu0 0.0
        %1156 = vmatpush1.msra.mxu0 0.0
        %1157 = vmatprep.subr.mxu0 0.0
        %1158 = vmatpush1.msra.mxu0 0.0
        %1159 = vmatprep.subr.mxu0 0.0
        %1160 = vmatpush1.msra.mxu0 0.0
        %1161 = vmatprep.subr.mxu0 0.0
        %1162 = vmatpush1.msra.mxu0 0.0
        %1163 = vmatprep.subr.mxu0 0.0
        %1164 = vmatpush1.msra.mxu0 0.0
        %1165 = vmatprep.subr.mxu0 0.0
        %1166 = vmatpush1.msra.mxu0 0.0
        %1167 = vmatprep.subr.mxu0 0.0
        %1168 = vmatpush1.msra.mxu0 0.0
        %1169 = vmatprep.subr.mxu0 0.0
        %1170 = vmatpush1.msra.mxu0 0.0
        %1171 = vmatprep.subr.mxu0 0.0
        %1172 = vmatpush1.msra.mxu0 0.0
        %1173 = vmatprep.subr.mxu0 0.0
        %1174 = vmatpush1.msra.mxu0 0.0
        %1175 = vmatprep.subr.mxu0 0.0
        %1176 = vmatpush1.msra.mxu0 0.0
        %1177 = vmatprep.subr.mxu0 0.0
        %1178 = vmatpush1.msra.mxu0 0.0
        %1179 = vmatprep.subr.mxu0 0.0
        %1180 = vmatpush1.msra.mxu0 0.0
        %1181 = vmatprep.subr.mxu0 0.0
        %1182 = vmatpush1.msra.mxu0 0.0
        %1183 = vmatprep.subr.mxu0 0.0
        %1184 = vmatpush1.msra.mxu0 0.0
        %1185 = vmatprep.subr.mxu0 0.0
        %1186 = vmatpush1.msra.mxu0 0.0
        %1187 = vmatprep.subr.mxu0 0.0
        %1188 = vmatpush1.msra.mxu0 0.0
        %1189 = vmatprep.subr.mxu0 0.0
        %1190 = vmatpush1.msra.mxu0 0.0
        %1191 = vmatprep.mubr.f32.mxu0 0.0
        %1192 = vmatmul.mubr.f32.gmra.mrb[0].mxu0 %v1125
        %v1193 = vpop.f32.mrb[0].mxu0
        %v1194 = vadd.f32 0.0, %v1193
        %v1195 = vpop.f32.mrb[0].mxu0
        %1196 = vdwg.mxu0
        %v1198 = vsel %vm792, %v954, 0
        %1200 = vmatprep.subr.mxu0 0.0
        %1201 = vmatpush1.msra.mxu0 %v703
        %1202 = vmatprep.subr.mxu0 0.0
        %1203 = vmatpush1.msra.mxu0 0.0
        %1204 = vmatprep.subr.mxu0 0.0
        %1205 = vmatpush1.msra.mxu0 0.0
        %1206 = vmatprep.subr.mxu0 0.0
        %1207 = vmatpush1.msra.mxu0 0.0
        %1208 = vmatprep.subr.mxu0 0.0
        %1209 = vmatpush1.msra.mxu0 0.0
        %1210 = vmatprep.subr.mxu0 0.0
        %1211 = vmatpush1.msra.mxu0 0.0
        %1212 = vmatprep.subr.mxu0 0.0
        %1213 = vmatpush1.msra.mxu0 0.0
        %1214 = vmatprep.subr.mxu0 0.0
        %1215 = vmatpush1.msra.mxu0 0.0
        %1216 = vmatprep.subr.mxu0 0.0
        %1217 = vmatpush1.msra.mxu0 0.0
        %1218 = vmatprep.subr.mxu0 0.0
        %1219 = vmatpush1.msra.mxu0 0.0
        %1220 = vmatprep.subr.mxu0 0.0
        %1221 = vmatpush1.msra.mxu0 0.0
        %1222 = vmatprep.subr.mxu0 0.0
        %1223 = vmatpush1.msra.mxu0 0.0
        %1224 = vmatprep.subr.mxu0 0.0
        %1225 = vmatpush1.msra.mxu0 0.0
        %1226 = vmatprep.subr.mxu0 0.0
        %1227 = vmatpush1.msra.mxu0 0.0
        %1228 = vmatprep.subr.mxu0 0.0
        %1229 = vmatpush1.msra.mxu0 0.0
        %1230 = vmatprep.subr.mxu0 0.0
        %1231 = vmatpush1.msra.mxu0 0.0
        %1232 = vmatprep.subr.mxu0 0.0
        %1233 = vmatpush1.msra.mxu0 0.0
        %1234 = vmatprep.subr.mxu0 0.0
        %1235 = vmatpush1.msra.mxu0 0.0
        %1236 = vmatprep.subr.mxu0 0.0
        %1237 = vmatpush1.msra.mxu0 0.0
        %1238 = vmatprep.subr.mxu0 0.0
        %1239 = vmatpush1.msra.mxu0 0.0
        %1240 = vmatprep.subr.mxu0 0.0
        %1241 = vmatpush1.msra.mxu0 0.0
        %1242 = vmatprep.subr.mxu0 0.0
        %1243 = vmatpush1.msra.mxu0 0.0
        %1244 = vmatprep.subr.mxu0 0.0
        %1245 = vmatpush1.msra.mxu0 0.0
        %1246 = vmatprep.subr.mxu0 0.0
        %1247 = vmatpush1.msra.mxu0 0.0
        %1248 = vmatprep.subr.mxu0 0.0
        %1249 = vmatpush1.msra.mxu0 0.0
        %1250 = vmatprep.subr.mxu0 0.0
        %1251 = vmatpush1.msra.mxu0 0.0
        %1252 = vmatprep.subr.mxu0 0.0
        %1253 = vmatpush1.msra.mxu0 0.0
        %1254 = vmatprep.subr.mxu0 0.0
        %1255 = vmatpush1.msra.mxu0 0.0
        %1256 = vmatprep.subr.mxu0 0.0
        %1257 = vmatpush1.msra.mxu0 0.0
        %1258 = vmatprep.subr.mxu0 0.0
        %1259 = vmatpush1.msra.mxu0 0.0
        %1260 = vmatprep.subr.mxu0 0.0
        %1261 = vmatpush1.msra.mxu0 0.0
        %1262 = vmatprep.subr.mxu0 0.0
        %1263 = vmatpush1.msra.mxu0 0.0
        %1264 = vmatprep.mubr.f32.mxu0 0.0
        %1265 = vmatmul.mubr.f32.gmra.mrb[0].mxu0 %v1198
        %v1266 = vpop.f32.mrb[0].mxu0
        %v1267 = vadd.f32 %v1194, %v1266
        %v1268 = vpop.f32.mrb[0].mxu0
        %1269 = vdwg.mxu0
        %1270 = vrot.lane.b32.xlu0 %v786, 112
        %v1271 = vpop.permute.xlu0 %1270
        %1272 = vrot.lane.b32.xlu0 %v786, 80
        %v1273 = vpop.permute.xlu0 %1272
        %v1274 = vsel %vm792, %v1271, 0
        %v1276 = vsel %vm792, %v1273, 0
        %1278 = vmatprep.subr.mxu0 0.0
        %1279 = vmatpush1.xpose.msra.mxu0 %v1276
        %1280 = vmatprep.subr.mxu0 0.0
        %1281 = vmatpush1.xpose.msra.mxu0 0.0
        %1282 = vmatprep.subr.mxu0 0.0
        %1283 = vmatpush1.xpose.msra.mxu0 0.0
        %1284 = vmatprep.subr.mxu0 0.0
        %1285 = vmatpush1.xpose.msra.mxu0 0.0
        %1286 = vmatprep.subr.mxu0 0.0
        %1287 = vmatpush1.xpose.msra.mxu0 0.0
        %1288 = vmatprep.subr.mxu0 0.0
        %1289 = vmatpush1.xpose.msra.mxu0 0.0
        %1290 = vmatprep.subr.mxu0 0.0
        %1291 = vmatpush1.xpose.msra.mxu0 0.0
        %1292 = vmatprep.subr.mxu0 0.0
        %1293 = vmatpush1.xpose.msra.mxu0 0.0
        %1294 = vmatprep.subr.mxu0 0.0
        %1295 = vmatpush1.xpose.msra.mxu0 0.0
        %1296 = vmatprep.subr.mxu0 0.0
        %1297 = vmatpush1.xpose.msra.mxu0 0.0
        %1298 = vmatprep.subr.mxu0 0.0
        %1299 = vmatpush1.xpose.msra.mxu0 0.0
        %1300 = vmatprep.subr.mxu0 0.0
        %1301 = vmatpush1.xpose.msra.mxu0 0.0
        %1302 = vmatprep.subr.mxu0 0.0
        %1303 = vmatpush1.xpose.msra.mxu0 0.0
        %1304 = vmatprep.subr.mxu0 0.0
        %1305 = vmatpush1.xpose.msra.mxu0 0.0
        %1306 = vmatprep.subr.mxu0 0.0
        %1307 = vmatpush1.xpose.msra.mxu0 0.0
        %1308 = vmatprep.subr.mxu0 0.0
        %1309 = vmatpush1.xpose.msra.mxu0 0.0
        %1310 = vmatprep.subr.mxu0 0.0
        %1311 = vmatpush1.xpose.msra.mxu0 0.0
        %1312 = vmatprep.subr.mxu0 0.0
        %1313 = vmatpush1.xpose.msra.mxu0 0.0
        %1314 = vmatprep.subr.mxu0 0.0
        %1315 = vmatpush1.xpose.msra.mxu0 0.0
        %1316 = vmatprep.subr.mxu0 0.0
        %1317 = vmatpush1.xpose.msra.mxu0 0.0
        %1318 = vmatprep.subr.mxu0 0.0
        %1319 = vmatpush1.xpose.msra.mxu0 0.0
        %1320 = vmatprep.subr.mxu0 0.0
        %1321 = vmatpush1.xpose.msra.mxu0 0.0
        %1322 = vmatprep.subr.mxu0 0.0
        %1323 = vmatpush1.xpose.msra.mxu0 0.0
        %1324 = vmatprep.subr.mxu0 0.0
        %1325 = vmatpush1.xpose.msra.mxu0 0.0
        %1326 = vmatprep.subr.mxu0 0.0
        %1327 = vmatpush1.xpose.msra.mxu0 0.0
        %1328 = vmatprep.subr.mxu0 0.0
        %1329 = vmatpush1.xpose.msra.mxu0 0.0
        %1330 = vmatprep.subr.mxu0 0.0
        %1331 = vmatpush1.xpose.msra.mxu0 0.0
        %1332 = vmatprep.subr.mxu0 0.0
        %1333 = vmatpush1.xpose.msra.mxu0 0.0
        %1334 = vmatprep.subr.mxu0 0.0
        %1335 = vmatpush1.xpose.msra.mxu0 0.0
        %1336 = vmatprep.subr.mxu0 0.0
        %1337 = vmatpush1.xpose.msra.mxu0 0.0
        %1338 = vmatprep.subr.mxu0 0.0
        %1339 = vmatpush1.xpose.msra.mxu0 0.0
        %1340 = vmatprep.subr.mxu0 0.0
        %1341 = vmatpush1.xpose.msra.mxu0 0.0
        %1342 = vmatprep.mubr.f32.mxu0 0.0
        %1343 = vmatmul.mubr.f32.gmra.mrb[0].mxu0 %v1274
        %v1344 = vpop.f32.mrb[0].mxu0
        %v1345 = vadd.f32 0.0, %v1344
        %v1346 = vpop.f32.mrb[0].mxu0
        %1347 = vdwg.mxu0
        %v1348 = vmul.f32 %v1345, 0.17677669
        %v1349 = vsel %vm868, -1e+20, %v1348
        %v1350 = vsel %vm792, %v1349, -inf
        %1351 = vmax.xlane.f32.xlu0 %v1350
        %v1352 = vpop.xlane.xlu0 %1351
        %v1353 = vsub.f32 %v1349, %v1352
        %v1354 = vmul.f32 %v1353, 1.442695
        %v1355 = vpow.pop %v1354
        %v1356 = vsel %vm792, %v1355, 0.0
        %1357 = vadd.xlane.f32.xlu0 %v1356
        %v1358 = vpop.xlane.xlu0 %1357
        %v1359 = vrcp.pop %v1358
        %v1360 = vmul.f32 %v1355, %v1359
        %1361 = vrot.lane.b32.xlu0 %v786, 48
        %v1362 = vpop.permute.xlu0 %1361
        %v1365 = vsel %vm792, %v1360, 0
        %1367 = vmatprep.subr.mxu0 0.0
        %1368 = vmatpush1.msra.mxu0 %v1362
        %1369 = vmatprep.subr.mxu0 0.0
        %1370 = vmatpush1.msra.mxu0 0.0
        %1371 = vmatprep.subr.mxu0 0.0
        %1372 = vmatpush1.msra.mxu0 0.0
        %1373 = vmatprep.subr.mxu0 0.0
        %1374 = vmatpush1.msra.mxu0 0.0
        %1375 = vmatprep.subr.mxu0 0.0
        %1376 = vmatpush1.msra.mxu0 0.0
        %1377 = vmatprep.subr.mxu0 0.0
        %1378 = vmatpush1.msra.mxu0 0.0
        %1379 = vmatprep.subr.mxu0 0.0
        %1380 = vmatpush1.msra.mxu0 0.0
        %1381 = vmatprep.subr.mxu0 0.0
        %1382 = vmatpush1.msra.mxu0 0.0
        %1383 = vmatprep.subr.mxu0 0.0
        %1384 = vmatpush1.msra.mxu0 0.0
        %1385 = vmatprep.subr.mxu0 0.0
        %1386 = vmatpush1.msra.mxu0 0.0
        %1387 = vmatprep.subr.mxu0 0.0
        %1388 = vmatpush1.msra.mxu0 0.0
        %1389 = vmatprep.subr.mxu0 0.0
        %1390 = vmatpush1.msra.mxu0 0.0
        %1391 = vmatprep.subr.mxu0 0.0
        %1392 = vmatpush1.msra.mxu0 0.0
        %1393 = vmatprep.subr.mxu0 0.0
        %1394 = vmatpush1.msra.mxu0 0.0
        %1395 = vmatprep.subr.mxu0 0.0
        %1396 = vmatpush1.msra.mxu0 0.0
        %1397 = vmatprep.subr.mxu0 0.0
        %1398 = vmatpush1.msra.mxu0 0.0
        %1399 = vmatprep.subr.mxu0 0.0
        %1400 = vmatpush1.msra.mxu0 0.0
        %1401 = vmatprep.subr.mxu0 0.0
        %1402 = vmatpush1.msra.mxu0 0.0
        %1403 = vmatprep.subr.mxu0 0.0
        %1404 = vmatpush1.msra.mxu0 0.0
        %1405 = vmatprep.subr.mxu0 0.0
        %1406 = vmatpush1.msra.mxu0 0.0
        %1407 = vmatprep.subr.mxu0 0.0
        %1408 = vmatpush1.msra.mxu0 0.0
        %1409 = vmatprep.subr.mxu0 0.0
        %1410 = vmatpush1.msra.mxu0 0.0
        %1411 = vmatprep.subr.mxu0 0.0
        %1412 = vmatpush1.msra.mxu0 0.0
        %1413 = vmatprep.subr.mxu0 0.0
        %1414 = vmatpush1.msra.mxu0 0.0
        %1415 = vmatprep.subr.mxu0 0.0
        %1416 = vmatpush1.msra.mxu0 0.0
        %1417 = vmatprep.subr.mxu0 0.0
        %1418 = vmatpush1.msra.mxu0 0.0
        %1419 = vmatprep.subr.mxu0 0.0
        %1420 = vmatpush1.msra.mxu0 0.0
        %1421 = vmatprep.subr.mxu0 0.0
        %1422 = vmatpush1.msra.mxu0 0.0
        %1423 = vmatprep.subr.mxu0 0.0
        %1424 = vmatpush1.msra.mxu0 0.0
        %1425 = vmatprep.subr.mxu0 0.0
        %1426 = vmatpush1.msra.mxu0 0.0
        %1427 = vmatprep.subr.mxu0 0.0
        %1428 = vmatpush1.msra.mxu0 0.0
        %1429 = vmatprep.subr.mxu0 0.0
        %1430 = vmatpush1.msra.mxu0 0.0
        %1431 = vmatprep.mubr.f32.mxu0 0.0
        %1432 = vmatmul.mubr.f32.gmra.mrb[0].mxu0 %v1365
        %v1433 = vpop.f32.mrb[0].mxu0
        %v1434 = vadd.f32 0.0, %v1433
        %v1435 = vpop.f32.mrb[0].mxu0
        %1436 = vdwg.mxu0
        %v1438 = vsel %vm792, %v1434, 0
        %1440 = vmatprep.subr.mxu0 0.0
        %1441 = vmatpush1.msra.mxu0 %v705
        %1442 = vmatprep.subr.mxu0 0.0
        %1443 = vmatpush1.msra.mxu0 0.0
        %1444 = vmatprep.subr.mxu0 0.0
        %1445 = vmatpush1.msra.mxu0 0.0
        %1446 = vmatprep.subr.mxu0 0.0
        %1447 = vmatpush1.msra.mxu0 0.0
        %1448 = vmatprep.subr.mxu0 0.0
        %1449 = vmatpush1.msra.mxu0 0.0
        %1450 = vmatprep.subr.mxu0 0.0
        %1451 = vmatpush1.msra.mxu0 0.0
        %1452 = vmatprep.subr.mxu0 0.0
        %1453 = vmatpush1.msra.mxu0 0.0
        %1454 = vmatprep.subr.mxu0 0.0
        %1455 = vmatpush1.msra.mxu0 0.0
        %1456 = vmatprep.subr.mxu0 0.0
        %1457 = vmatpush1.msra.mxu0 0.0
        %1458 = vmatprep.subr.mxu0 0.0
        %1459 = vmatpush1.msra.mxu0 0.0
        %1460 = vmatprep.subr.mxu0 0.0
        %1461 = vmatpush1.msra.mxu0 0.0
        %1462 = vmatprep.subr.mxu0 0.0
        %1463 = vmatpush1.msra.mxu0 0.0
        %1464 = vmatprep.subr.mxu0 0.0
        %1465 = vmatpush1.msra.mxu0 0.0
        %1466 = vmatprep.subr.mxu0 0.0
        %1467 = vmatpush1.msra.mxu0 0.0
        %1468 = vmatprep.subr.mxu0 0.0
        %1469 = vmatpush1.msra.mxu0 0.0
        %1470 = vmatprep.subr.mxu0 0.0
        %1471 = vmatpush1.msra.mxu0 0.0
        %1472 = vmatprep.subr.mxu0 0.0
        %1473 = vmatpush1.msra.mxu0 0.0
        %1474 = vmatprep.subr.mxu0 0.0
        %1475 = vmatpush1.msra.mxu0 0.0
        %1476 = vmatprep.subr.mxu0 0.0
        %1477 = vmatpush1.msra.mxu0 0.0
        %1478 = vmatprep.subr.mxu0 0.0
        %1479 = vmatpush1.msra.mxu0 0.0
        %1480 = vmatprep.subr.mxu0 0.0
        %1481 = vmatpush1.msra.mxu0 0.0
        %1482 = vmatprep.subr.mxu0 0.0
        %1483 = vmatpush1.msra.mxu0 0.0
        %1484 = vmatprep.subr.mxu0 0.0
        %1485 = vmatpush1.msra.mxu0 0.0
        %1486 = vmatprep.subr.mxu0 0.0
        %1487 = vmatpush1.msra.mxu0 0.0
        %1488 = vmatprep.subr.mxu0 0.0
        %1489 = vmatpush1.msra.mxu0 0.0
        %1490 = vmatprep.subr.mxu0 0.0
        %1491 = vmatpush1.msra.mxu0 0.0
        %1492 = vmatprep.subr.mxu0 0.0
        %1493 = vmatpush1.msra.mxu0 0.0
        %1494 = vmatprep.subr.mxu0 0.0
        %1495 = vmatpush1.msra.mxu0 0.0
        %1496 = vmatprep.subr.mxu0 0.0
        %1497 = vmatpush1.msra.mxu0 0.0
        %1498 = vmatprep.subr.mxu0 0.0
        %1499 = vmatpush1.msra.mxu0 0.0
        %1500 = vmatprep.subr.mxu0 0.0
        %1501 = vmatpush1.msra.mxu0 0.0
        %1502 = vmatprep.subr.mxu0 0.0
        %1503 = vmatpush1.msra.mxu0 0.0
        %1504 = vmatprep.mubr.f32.mxu0 0.0
        %1505 = vmatmul.mubr.f32.gmra.mrb[0].mxu0 %v1438
        %v1506 = vpop.f32.mrb[0].mxu0
        %v1507 = vadd.f32 0.0, %v1506
        %v1508 = vpop.f32.mrb[0].mxu0
        %1509 = vdwg.mxu0
        %v1510 = vadd.f32 %v1267, %v1507
        %1511 = vrot.lane.b32.xlu0 %v786, 104
        %v1512 = vpop.permute.xlu0 %1511
        %1513 = vrot.lane.b32.xlu0 %v786, 72
        %v1514 = vpop.permute.xlu0 %1513
        %v1515 = vsel %vm792, %v1512, 0
        %v1517 = vsel %vm792, %v1514, 0
        %1519 = vmatprep.subr.mxu0 0.0
        %1520 = vmatpush1.xpose.msra.mxu0 %v1517
        %1521 = vmatprep.subr.mxu0 0.0
        %1522 = vmatpush1.xpose.msra.mxu0 0.0
        %1523 = vmatprep.subr.mxu0 0.0
        %1524 = vmatpush1.xpose.msra.mxu0 0.0
        %1525 = vmatprep.subr.mxu0 0.0
        %1526 = vmatpush1.xpose.msra.mxu0 0.0
        %1527 = vmatprep.subr.mxu0 0.0
        %1528 = vmatpush1.xpose.msra.mxu0 0.0
        %1529 = vmatprep.subr.mxu0 0.0
        %1530 = vmatpush1.xpose.msra.mxu0 0.0
        %1531 = vmatprep.subr.mxu0 0.0
        %1532 = vmatpush1.xpose.msra.mxu0 0.0
        %1533 = vmatprep.subr.mxu0 0.0
        %1534 = vmatpush1.xpose.msra.mxu0 0.0
        %1535 = vmatprep.subr.mxu0 0.0
        %1536 = vmatpush1.xpose.msra.mxu0 0.0
        %1537 = vmatprep.subr.mxu0 0.0
        %1538 = vmatpush1.xpose.msra.mxu0 0.0
        %1539 = vmatprep.subr.mxu0 0.0
        %1540 = vmatpush1.xpose.msra.mxu0 0.0
        %1541 = vmatprep.subr.mxu0 0.0
        %1542 = vmatpush1.xpose.msra.mxu0 0.0
        %1543 = vmatprep.subr.mxu0 0.0
        %1544 = vmatpush1.xpose.msra.mxu0 0.0
        %1545 = vmatprep.subr.mxu0 0.0
        %1546 = vmatpush1.xpose.msra.mxu0 0.0
        %1547 = vmatprep.subr.mxu0 0.0
        %1548 = vmatpush1.xpose.msra.mxu0 0.0
        %1549 = vmatprep.subr.mxu0 0.0
        %1550 = vmatpush1.xpose.msra.mxu0 0.0
        %1551 = vmatprep.subr.mxu0 0.0
        %1552 = vmatpush1.xpose.msra.mxu0 0.0
        %1553 = vmatprep.subr.mxu0 0.0
        %1554 = vmatpush1.xpose.msra.mxu0 0.0
        %1555 = vmatprep.subr.mxu0 0.0
        %1556 = vmatpush1.xpose.msra.mxu0 0.0
        %1557 = vmatprep.subr.mxu0 0.0
        %1558 = vmatpush1.xpose.msra.mxu0 0.0
        %1559 = vmatprep.subr.mxu0 0.0
        %1560 = vmatpush1.xpose.msra.mxu0 0.0
        %1561 = vmatprep.subr.mxu0 0.0
        %1562 = vmatpush1.xpose.msra.mxu0 0.0
        %1563 = vmatprep.subr.mxu0 0.0
        %1564 = vmatpush1.xpose.msra.mxu0 0.0
        %1565 = vmatprep.subr.mxu0 0.0
        %1566 = vmatpush1.xpose.msra.mxu0 0.0
        %1567 = vmatprep.subr.mxu0 0.0
        %1568 = vmatpush1.xpose.msra.mxu0 0.0
        %1569 = vmatprep.subr.mxu0 0.0
        %1570 = vmatpush1.xpose.msra.mxu0 0.0
        %1571 = vmatprep.subr.mxu0 0.0
        %1572 = vmatpush1.xpose.msra.mxu0 0.0
        %1573 = vmatprep.subr.mxu0 0.0
        %1574 = vmatpush1.xpose.msra.mxu0 0.0
        %1575 = vmatprep.subr.mxu0 0.0
        %1576 = vmatpush1.xpose.msra.mxu0 0.0
        %1577 = vmatprep.subr.mxu0 0.0
        %1578 = vmatpush1.xpose.msra.mxu0 0.0
        %1579 = vmatprep.subr.mxu0 0.0
        %1580 = vmatpush1.xpose.msra.mxu0 0.0
        %1581 = vmatprep.subr.mxu0 0.0
        %1582 = vmatpush1.xpose.msra.mxu0 0.0
        %1583 = vmatprep.mubr.f32.mxu0 0.0
        %1584 = vmatmul.mubr.f32.gmra.mrb[0].mxu0 %v1515
        %v1585 = vpop.f32.mrb[0].mxu0
        %v1586 = vadd.f32 0.0, %v1585
        %v1587 = vpop.f32.mrb[0].mxu0
        %1588 = vdwg.mxu0
        %v1589 = vmul.f32 %v1586, 0.17677669
        %v1590 = vsel %vm868, -1e+20, %v1589
        %v1591 = vsel %vm792, %v1590, -inf
        %1592 = vmax.xlane.f32.xlu0 %v1591
        %v1593 = vpop.xlane.xlu0 %1592
        %v1594 = vsub.f32 %v1590, %v1593
        %v1595 = vmul.f32 %v1594, 1.442695
        %v1596 = vpow.pop %v1595
        %v1597 = vsel %vm792, %v1596, 0.0
        %1598 = vadd.xlane.f32.xlu0 %v1597
        %v1599 = vpop.xlane.xlu0 %1598
        %v1600 = vrcp.pop %v1599
        %v1601 = vmul.f32 %v1596, %v1600
        %1602 = vrot.lane.b32.xlu0 %v786, 40
        %v1603 = vpop.permute.xlu0 %1602
        %v1606 = vsel %vm792, %v1601, 0
        %1608 = vmatprep.subr.mxu0 0.0
        %1609 = vmatpush1.msra.mxu0 %v1603
        %1610 = vmatprep.subr.mxu0 0.0
        %1611 = vmatpush1.msra.mxu0 0.0
        %1612 = vmatprep.subr.mxu0 0.0
        %1613 = vmatpush1.msra.mxu0 0.0
        %1614 = vmatprep.subr.mxu0 0.0
        %1615 = vmatpush1.msra.mxu0 0.0
        %1616 = vmatprep.subr.mxu0 0.0
        %1617 = vmatpush1.msra.mxu0 0.0
        %1618 = vmatprep.subr.mxu0 0.0
        %1619 = vmatpush1.msra.mxu0 0.0
        %1620 = vmatprep.subr.mxu0 0.0
        %1621 = vmatpush1.msra.mxu0 0.0
        %1622 = vmatprep.subr.mxu0 0.0
        %1623 = vmatpush1.msra.mxu0 0.0
        %1624 = vmatprep.subr.mxu0 0.0
        %1625 = vmatpush1.msra.mxu0 0.0
        %1626 = vmatprep.subr.mxu0 0.0
        %1627 = vmatpush1.msra.mxu0 0.0
        %1628 = vmatprep.subr.mxu0 0.0
        %1629 = vmatpush1.msra.mxu0 0.0
        %1630 = vmatprep.subr.mxu0 0.0
        %1631 = vmatpush1.msra.mxu0 0.0
        %1632 = vmatprep.subr.mxu0 0.0
        %1633 = vmatpush1.msra.mxu0 0.0
        %1634 = vmatprep.subr.mxu0 0.0
        %1635 = vmatpush1.msra.mxu0 0.0
        %1636 = vmatprep.subr.mxu0 0.0
        %1637 = vmatpush1.msra.mxu0 0.0
        %1638 = vmatprep.subr.mxu0 0.0
        %1639 = vmatpush1.msra.mxu0 0.0
        %1640 = vmatprep.subr.mxu0 0.0
        %1641 = vmatpush1.msra.mxu0 0.0
        %1642 = vmatprep.subr.mxu0 0.0
        %1643 = vmatpush1.msra.mxu0 0.0
        %1644 = vmatprep.subr.mxu0 0.0
        %1645 = vmatpush1.msra.mxu0 0.0
        %1646 = vmatprep.subr.mxu0 0.0
        %1647 = vmatpush1.msra.mxu0 0.0
        %1648 = vmatprep.subr.mxu0 0.0
        %1649 = vmatpush1.msra.mxu0 0.0
        %1650 = vmatprep.subr.mxu0 0.0
        %1651 = vmatpush1.msra.mxu0 0.0
        %1652 = vmatprep.subr.mxu0 0.0
        %1653 = vmatpush1.msra.mxu0 0.0
        %1654 = vmatprep.subr.mxu0 0.0
        %1655 = vmatpush1.msra.mxu0 0.0
        %1656 = vmatprep.subr.mxu0 0.0
        %1657 = vmatpush1.msra.mxu0 0.0
        %1658 = vmatprep.subr.mxu0 0.0
        %1659 = vmatpush1.msra.mxu0 0.0
        %1660 = vmatprep.subr.mxu0 0.0
        %1661 = vmatpush1.msra.mxu0 0.0
        %1662 = vmatprep.subr.mxu0 0.0
        %1663 = vmatpush1.msra.mxu0 0.0
        %1664 = vmatprep.subr.mxu0 0.0
        %1665 = vmatpush1.msra.mxu0 0.0
        %1666 = vmatprep.subr.mxu0 0.0
        %1667 = vmatpush1.msra.mxu0 0.0
        %1668 = vmatprep.subr.mxu0 0.0
        %1669 = vmatpush1.msra.mxu0 0.0
        %1670 = vmatprep.subr.mxu0 0.0
        %1671 = vmatpush1.msra.mxu0 0.0
        %1672 = vmatprep.mubr.f32.mxu0 0.0
        %1673 = vmatmul.mubr.f32.gmra.mrb[0].mxu0 %v1606
        %v1674 = vpop.f32.mrb[0].mxu0
        %v1675 = vadd.f32 0.0, %v1674
        %v1676 = vpop.f32.mrb[0].mxu0
        %1677 = vdwg.mxu0
        %v1679 = vsel %vm792, %v1675, 0
        %1681 = vmatprep.subr.mxu0 0.0
        %1682 = vmatpush1.msra.mxu0 %v706
        %1683 = vmatprep.subr.mxu0 0.0
        %1684 = vmatpush1.msra.mxu0 0.0
        %1685 = vmatprep.subr.mxu0 0.0
        %1686 = vmatpush1.msra.mxu0 0.0
        %1687 = vmatprep.subr.mxu0 0.0
        %1688 = vmatpush1.msra.mxu0 0.0
        %1689 = vmatprep.subr.mxu0 0.0
        %1690 = vmatpush1.msra.mxu0 0.0
        %1691 = vmatprep.subr.mxu0 0.0
        %1692 = vmatpush1.msra.mxu0 0.0
        %1693 = vmatprep.subr.mxu0 0.0
        %1694 = vmatpush1.msra.mxu0 0.0
        %1695 = vmatprep.subr.mxu0 0.0
        %1696 = vmatpush1.msra.mxu0 0.0
        %1697 = vmatprep.subr.mxu0 0.0
        %1698 = vmatpush1.msra.mxu0 0.0
        %1699 = vmatprep.subr.mxu0 0.0
        %1700 = vmatpush1.msra.mxu0 0.0
        %1701 = vmatprep.subr.mxu0 0.0
        %1702 = vmatpush1.msra.mxu0 0.0
        %1703 = vmatprep.subr.mxu0 0.0
        %1704 = vmatpush1.msra.mxu0 0.0
        %1705 = vmatprep.subr.mxu0 0.0
        %1706 = vmatpush1.msra.mxu0 0.0
        %1707 = vmatprep.subr.mxu0 0.0
        %1708 = vmatpush1.msra.mxu0 0.0
        %1709 = vmatprep.subr.mxu0 0.0
        %1710 = vmatpush1.msra.mxu0 0.0
        %1711 = vmatprep.subr.mxu0 0.0
        %1712 = vmatpush1.msra.mxu0 0.0
        %1713 = vmatprep.subr.mxu0 0.0
        %1714 = vmatpush1.msra.mxu0 0.0
        %1715 = vmatprep.subr.mxu0 0.0
        %1716 = vmatpush1.msra.mxu0 0.0
        %1717 = vmatprep.subr.mxu0 0.0
        %1718 = vmatpush1.msra.mxu0 0.0
        %1719 = vmatprep.subr.mxu0 0.0
        %1720 = vmatpush1.msra.mxu0 0.0
        %1721 = vmatprep.subr.mxu0 0.0
        %1722 = vmatpush1.msra.mxu0 0.0
        %1723 = vmatprep.subr.mxu0 0.0
        %1724 = vmatpush1.msra.mxu0 0.0
        %1725 = vmatprep.subr.mxu0 0.0
        %1726 = vmatpush1.msra.mxu0 0.0
        %1727 = vmatprep.subr.mxu0 0.0
        %1728 = vmatpush1.msra.mxu0 0.0
        %1729 = vmatprep.subr.mxu0 0.0
        %1730 = vmatpush1.msra.mxu0 0.0
        %1731 = vmatprep.subr.mxu0 0.0
        %1732 = vmatpush1.msra.mxu0 0.0
        %1733 = vmatprep.subr.mxu0 0.0
        %1734 = vmatpush1.msra.mxu0 0.0
        %1735 = vmatprep.subr.mxu0 0.0
        %1736 = vmatpush1.msra.mxu0 0.0
        %1737 = vmatprep.subr.mxu0 0.0
        %1738 = vmatpush1.msra.mxu0 0.0
        %1739 = vmatprep.subr.mxu0 0.0
        %1740 = vmatpush1.msra.mxu0 0.0
        %1741 = vmatprep.subr.mxu0 0.0
        %1742 = vmatpush1.msra.mxu0 0.0
        %1743 = vmatprep.subr.mxu0 0.0
        %1744 = vmatpush1.msra.mxu0 0.0
        %1745 = vmatprep.mubr.f32.mxu0 0.0
        %1746 = vmatmul.mubr.f32.gmra.mrb[0].mxu0 %v1679
        %v1747 = vpop.f32.mrb[0].mxu0
        %v1748 = vadd.f32 0.0, %v1747
        %v1749 = vpop.f32.mrb[0].mxu0
        %1750 = vdwg.mxu0
        %v1751 = vadd.f32 %v1510, %v1748
        %v1753 = vlaneseq
        %v1754 = vshrl.u32 %v1753, 7
        %v1755 = vsub.s32 0, %v1754
        %v1756 = vrot.slane %v707, %v1755
        %v1758 = vadd.f32 %v1751, %v1756
        %v1759 = vadd.f32 %v1758, %v697
        %v1760 = vld [vmem:[%s11] sm:$0x1]
        %v1761 = vld [vmem:[%s12] sm:$0x1]
        %v1762 = vsel %vm715, %v1759, 0.0
        %1763 = vadd.xlane.f32.xlu0 %v1762
        %v1764 = vpop.xlane.xlu0 %1763
        %v1765 = vrcp.pop 32.0
        %v1766 = vmul.f32 %v1764, %v1765
        %v1767 = vsub.f32 %v1759, %v1766
        %v1768 = vmul.f32 %v1767, %v1767
        %v1769 = vsel %vm715, %v1768, 0.0
        %1770 = vadd.xlane.f32.xlu0 %v1769
        %v1771 = vpop.xlane.xlu0 %1770
        %v1772 = vmul.f32 %v1771, %v1765
        %v1773 = vadd.f32 %v1772, 1e-05
        %v1774 = vrsqrt.pop %v1773
        %v1775 = vmul.f32 %v1767, %v1774
        %v1777 = vlaneseq
        %v1778 = vshrl.u32 %v1777, 7
        %v1779 = vsub.s32 0, %v1778
        %v1780 = vrot.slane %v1760, %v1779
        %v1782 = vmul.f32 %v1775, %v1780
        %v1784 = vlaneseq
        %v1785 = vshrl.u32 %v1784, 7
        %v1786 = vsub.s32 0, %v1785
        %v1787 = vrot.slane %v1761, %v1786
        %v1789 = vadd.f32 %v1782, %v1787
        %v1790 = vld [vmem:[%s7] sm:$0xff]
        %v1791 = vld [vmem:[%s7 + $0x8] sm:$0xff]
        %v1792 = vld [vmem:[%s7 + $0x10] sm:$0xff]
        %v1793 = vld [vmem:[%s7 + $0x18] sm:$0xff]
        %v1794 = vld [vmem:[%s8] sm:$0x1]
        %v1795 = vld [vmem:[%s9] sm:$0xff]
        %v1796 = vld [vmem:[%s9 + $0x8] sm:$0xff]
        %v1797 = vld [vmem:[%s9 + $0x10] sm:$0xff]
        %v1798 = vld [vmem:[%s9 + $0x18] sm:$0xff]
        %v1799 = vld [vmem:[%s10] sm:$0x1]
        %v1800 = vld [vmem:[#allocation7] sm:$0xff]
        %v1802 = vlaneseq
        %v1803 = vshrl.u32 %v1802, 7
        %v1804 = vsub.s32 0, %v1803
        %v1805 = vrot.slane %v1794, %v1804
        %v1808 = vsel %vm715, %v1789, 0
        %1810 = vmatprep.subr.mxu0 0.0
        %1811 = vmatpush1.msra.mxu0 %v1790
        %1812 = vmatprep.subr.mxu0 0.0
        %1813 = vmatpush1.msra.mxu0 %v1791
        %1814 = vmatprep.subr.mxu0 0.0
        %1815 = vmatpush1.msra.mxu0 %v1792
        %1816 = vmatprep.subr.mxu0 0.0
        %1817 = vmatpush1.msra.mxu0 %v1793
        %1818 = vmatprep.subr.mxu0 0.0
        %1819 = vmatpush1.msra.mxu0 0.0
        %1820 = vmatprep.subr.mxu0 0.0
        %1821 = vmatpush1.msra.mxu0 0.0
        %1822 = vmatprep.subr.mxu0 0.0
        %1823 = vmatpush1.msra.mxu0 0.0
        %1824 = vmatprep.subr.mxu0 0.0
        %1825 = vmatpush1.msra.mxu0 0.0
        %1826 = vmatprep.subr.mxu0 0.0
        %1827 = vmatpush1.msra.mxu0 0.0
        %1828 = vmatprep.subr.mxu0 0.0
        %1829 = vmatpush1.msra.mxu0 0.0
        %1830 = vmatprep.subr.mxu0 0.0
        %1831 = vmatpush1.msra.mxu0 0.0
        %1832 = vmatprep.subr.mxu0 0.0
        %1833 = vmatpush1.msra.mxu0 0.0
        %1834 = vmatprep.subr.mxu0 0.0
        %1835 = vmatpush1.msra.mxu0 0.0
        %1836 = vmatprep.subr.mxu0 0.0
        %1837 = vmatpush1.msra.mxu0 0.0
        %1838 = vmatprep.subr.mxu0 0.0
        %1839 = vmatpush1.msra.mxu0 0.0
        %1840 = vmatprep.subr.mxu0 0.0
        %1841 = vmatpush1.msra.mxu0 0.0
        %1842 = vmatprep.subr.mxu0 0.0
        %1843 = vmatpush1.msra.mxu0 0.0
        %1844 = vmatprep.subr.mxu0 0.0
        %1845 = vmatpush1.msra.mxu0 0.0
        %1846 = vmatprep.subr.mxu0 0.0
        %1847 = vmatpush1.msra.mxu0 0.0
        %1848 = vmatprep.subr.mxu0 0.0
        %1849 = vmatpush1.msra.mxu0 0.0
        %1850 = vmatprep.subr.mxu0 0.0
        %1851 = vmatpush1.msra.mxu0 0.0
        %1852 = vmatprep.subr.mxu0 0.0
        %1853 = vmatpush1.msra.mxu0 0.0
        %1854 = vmatprep.subr.mxu0 0.0
        %1855 = vmatpush1.msra.mxu0 0.0
        %1856 = vmatprep.subr.mxu0 0.0
        %1857 = vmatpush1.msra.mxu0 0.0
        %1858 = vmatprep.subr.mxu0 0.0
        %1859 = vmatpush1.msra.mxu0 0.0
        %1860 = vmatprep.subr.mxu0 0.0
        %1861 = vmatpush1.msra.mxu0 0.0
        %1862 = vmatprep.subr.mxu0 0.0
        %1863 = vmatpush1.msra.mxu0 0.0
        %1864 = vmatprep.subr.mxu0 0.0
        %1865 = vmatpush1.msra.mxu0 0.0
        %1866 = vmatprep.subr.mxu0 0.0
        %1867 = vmatpush1.msra.mxu0 0.0
        %1868 = vmatprep.subr.mxu0 0.0
        %1869 = vmatpush1.msra.mxu0 0.0
        %1870 = vmatprep.subr.mxu0 0.0
        %1871 = vmatpush1.msra.mxu0 0.0
        %1872 = vmatprep.subr.mxu0 0.0
        %1873 = vmatpush1.msra.mxu0 0.0
        %1874 = vmatprep.mubr.f32.mxu0 0.0
        %1875 = vmatmul.mubr.f32.gmra.mrb[0].mxu0 %v1808
        %v1876 = vpop.f32.mrb[0].mxu0
        %v1877 = vadd.f32 %v1805, %v1876
        %v1878 = vpop.f32.mrb[0].mxu0
        %1879 = vdwg.mxu0
        %1881 = vrot.lane.b32.xlu0 %v1877, 96
        %v1882 = vpop.permute.xlu0 %1881
        %v1883 = vsel %vm792, %v1877, 0
        %v1885 = vsel %vm792, %v1882, 0
        %1887 = vmatprep.subr.mxu0 0.0
        %1888 = vmatpush1.xpose.msra.mxu0 %v1885
        %1889 = vmatprep.subr.mxu0 0.0
        %1890 = vmatpush1.xpose.msra.mxu0 0.0
        %1891 = vmatprep.subr.mxu0 0.0
        %1892 = vmatpush1.xpose.msra.mxu0 0.0
        %1893 = vmatprep.subr.mxu0 0.0
        %1894 = vmatpush1.xpose.msra.mxu0 0.0
        %1895 = vmatprep.subr.mxu0 0.0
        %1896 = vmatpush1.xpose.msra.mxu0 0.0
        %1897 = vmatprep.subr.mxu0 0.0
        %1898 = vmatpush1.xpose.msra.mxu0 0.0
        %1899 = vmatprep.subr.mxu0 0.0
        %1900 = vmatpush1.xpose.msra.mxu0 0.0
        %1901 = vmatprep.subr.mxu0 0.0
        %1902 = vmatpush1.xpose.msra.mxu0 0.0
        %1903 = vmatprep.subr.mxu0 0.0
        %1904 = vmatpush1.xpose.msra.mxu0 0.0
        %1905 = vmatprep.subr.mxu0 0.0
        %1906 = vmatpush1.xpose.msra.mxu0 0.0
        %1907 = vmatprep.subr.mxu0 0.0
        %1908 = vmatpush1.xpose.msra.mxu0 0.0
        %1909 = vmatprep.subr.mxu0 0.0
        %1910 = vmatpush1.xpose.msra.mxu0 0.0
        %1911 = vmatprep.subr.mxu0 0.0
        %1912 = vmatpush1.xpose.msra.mxu0 0.0
        %1913 = vmatprep.subr.mxu0 0.0
        %1914 = vmatpush1.xpose.msra.mxu0 0.0
        %1915 = vmatprep.subr.mxu0 0.0
        %1916 = vmatpush1.xpose.msra.mxu0 0.0
        %1917 = vmatprep.subr.mxu0 0.0
        %1918 = vmatpush1.xpose.msra.mxu0 0.0
        %1919 = vmatprep.subr.mxu0 0.0
        %1920 = vmatpush1.xpose.msra.mxu0 0.0
        %1921 = vmatprep.subr.mxu0 0.0
        %1922 = vmatpush1.xpose.msra.mxu0 0.0
        %1923 = vmatprep.subr.mxu0 0.0
        %1924 = vmatpush1.xpose.msra.mxu0 0.0
        %1925 = vmatprep.subr.mxu0 0.0
        %1926 = vmatpush1.xpose.msra.mxu0 0.0
        %1927 = vmatprep.subr.mxu0 0.0
        %1928 = vmatpush1.xpose.msra.mxu0 0.0
        %1929 = vmatprep.subr.mxu0 0.0
        %1930 = vmatpush1.xpose.msra.mxu0 0.0
        %1931 = vmatprep.subr.mxu0 0.0
        %1932 = vmatpush1.xpose.msra.mxu0 0.0
        %1933 = vmatprep.subr.mxu0 0.0
        %1934 = vmatpush1.xpose.msra.mxu0 0.0
        %1935 = vmatprep.subr.mxu0 0.0
        %1936 = vmatpush1.xpose.msra.mxu0 0.0
        %1937 = vmatprep.subr.mxu0 0.0
        %1938 = vmatpush1.xpose.msra.mxu0 0.0
        %1939 = vmatprep.subr.mxu0 0.0
        %1940 = vmatpush1.xpose.msra.mxu0 0.0
        %1941 = vmatprep.subr.mxu0 0.0
        %1942 = vmatpush1.xpose.msra.mxu0 0.0
        %1943 = vmatprep.subr.mxu0 0.0
        %1944 = vmatpush1.xpose.msra.mxu0 0.0
        %1945 = vmatprep.subr.mxu0 0.0
        %1946 = vmatpush1.xpose.msra.mxu0 0.0
        %1947 = vmatprep.subr.mxu0 0.0
        %1948 = vmatpush1.xpose.msra.mxu0 0.0
        %1949 = vmatprep.subr.mxu0 0.0
        %1950 = vmatpush1.xpose.msra.mxu0 0.0
        %1951 = vmatprep.mubr.f32.mxu0 0.0
        %1952 = vmatmul.mubr.f32.gmra.mrb[0].mxu0 %v1883
        %v1953 = vpop.f32.mrb[0].mxu0
        %v1954 = vadd.f32 0.0, %v1953
        %v1955 = vpop.f32.mrb[0].mxu0
        %1956 = vdwg.mxu0
        %v1957 = vmul.f32 %v1954, 0.17677669
        %vm1958 = vcmp.eq.f32.partialorder %v1800, 0.0
        %v1959 = vsel %vm1958, -1e+20, %v1957
        %v1960 = vsel %vm792, %v1959, -inf
        %1961 = vmax.xlane.f32.xlu0 %v1960
        %v1962 = vpop.xlane.xlu0 %1961
        %v1963 = vsub.f32 %v1959, %v1962
        %v1964 = vmul.f32 %v1963, 1.442695
        %v1965 = vpow.pop %v1964
        %v1966 = vsel %vm792, %v1965, 0.0
        %1967 = vadd.xlane.f32.xlu0 %v1966
        %v1968 = vpop.xlane.xlu0 %1967
        %v1969 = vrcp.pop %v1968
        %v1970 = vmul.f32 %v1965, %v1969
        %1971 = vrot.lane.b32.xlu0 %v1877, 64
        %v1972 = vpop.permute.xlu0 %1971
        %v1975 = vsel %vm792, %v1970, 0
        %1977 = vmatprep.subr.mxu0 0.0
        %1978 = vmatpush1.msra.mxu0 %v1972
        %1979 = vmatprep.subr.mxu0 0.0
        %1980 = vmatpush1.msra.mxu0 0.0
        %1981 = vmatprep.subr.mxu0 0.0
        %1982 = vmatpush1.msra.mxu0 0.0
        %1983 = vmatprep.subr.mxu0 0.0
        %1984 = vmatpush1.msra.mxu0 0.0
        %1985 = vmatprep.subr.mxu0 0.0
        %1986 = vmatpush1.msra.mxu0 0.0
        %1987 = vmatprep.subr.mxu0 0.0
        %1988 = vmatpush1.msra.mxu0 0.0
        %1989 = vmatprep.subr.mxu0 0.0
        %1990 = vmatpush1.msra.mxu0 0.0
        %1991 = vmatprep.subr.mxu0 0.0
        %1992 = vmatpush1.msra.mxu0 0.0
        %1993 = vmatprep.subr.mxu0 0.0
        %1994 = vmatpush1.msra.mxu0 0.0
        %1995 = vmatprep.subr.mxu0 0.0
        %1996 = vmatpush1.msra.mxu0 0.0
        %1997 = vmatprep.subr.mxu0 0.0
        %1998 = vmatpush1.msra.mxu0 0.0
        %1999 = vmatprep.subr.mxu0 0.0
        %2000 = vmatpush1.msra.mxu0 0.0
        %2001 = vmatprep.subr.mxu0 0.0
        %2002 = vmatpush1.msra.mxu0 0.0
        %2003 = vmatprep.subr.mxu0 0.0
        %2004 = vmatpush1.msra.mxu0 0.0
        %2005 = vmatprep.subr.mxu0 0.0
        %2006 = vmatpush1.msra.mxu0 0.0
        %2007 = vmatprep.subr.mxu0 0.0
        %2008 = vmatpush1.msra.mxu0 0.0
        %2009 = vmatprep.subr.mxu0 0.0
        %2010 = vmatpush1.msra.mxu0 0.0
        %2011 = vmatprep.subr.mxu0 0.0
        %2012 = vmatpush1.msra.mxu0 0.0
        %2013 = vmatprep.subr.mxu0 0.0
        %2014 = vmatpush1.msra.mxu0 0.0
        %2015 = vmatprep.subr.mxu0 0.0
        %2016 = vmatpush1.msra.mxu0 0.0
        %2017 = vmatprep.subr.mxu0 0.0
        %2018 = vmatpush1.msra.mxu0 0.0
        %2019 = vmatprep.subr.mxu0 0.0
        %2020 = vmatpush1.msra.mxu0 0.0
        %2021 = vmatprep.subr.mxu0 0.0
        %2022 = vmatpush1.msra.mxu0 0.0
        %2023 = vmatprep.subr.mxu0 0.0
        %2024 = vmatpush1.msra.mxu0 0.0
        %2025 = vmatprep.subr.mxu0 0.0
        %2026 = vmatpush1.msra.mxu0 0.0
        %2027 = vmatprep.subr.mxu0 0.0
        %2028 = vmatpush1.msra.mxu0 0.0
        %2029 = vmatprep.subr.mxu0 0.0
        %2030 = vmatpush1.msra.mxu0 0.0
        %2031 = vmatprep.subr.mxu0 0.0
        %2032 = vmatpush1.msra.mxu0 0.0
        %2033 = vmatprep.subr.mxu0 0.0
        %2034 = vmatpush1.msra.mxu0 0.0
        %2035 = vmatprep.subr.mxu0 0.0
        %2036 = vmatpush1.msra.mxu0 0.0
        %2037 = vmatprep.subr.mxu0 0.0
        %2038 = vmatpush1.msra.mxu0 0.0
        %2039 = vmatprep.subr.mxu0 0.0
        %2040 = vmatpush1.msra.mxu0 0.0
        %2041 = vmatprep.mubr.f32.mxu0 0.0
        %2042 = vmatmul.mubr.f32.gmra.mrb[0].mxu0 %v1975
        %v2043 = vpop.f32.mrb[0].mxu0
        %v2044 = vadd.f32 0.0, %v2043
        %v2045 = vpop.f32.mrb[0].mxu0
        %2046 = vdwg.mxu0
        %2047 = vrot.lane.b32.xlu0 %v1877, 120
        %v2048 = vpop.permute.xlu0 %2047
        %2049 = vrot.lane.b32.xlu0 %v1877, 88
        %v2050 = vpop.permute.xlu0 %2049
        %v2051 = vsel %vm792, %v2048, 0
        %v2053 = vsel %vm792, %v2050, 0
        %2055 = vmatprep.subr.mxu0 0.0
        %2056 = vmatpush1.xpose.msra.mxu0 %v2053
        %2057 = vmatprep.subr.mxu0 0.0
        %2058 = vmatpush1.xpose.msra.mxu0 0.0
        %2059 = vmatprep.subr.mxu0 0.0
        %2060 = vmatpush1.xpose.msra.mxu0 0.0
        %2061 = vmatprep.subr.mxu0 0.0
        %2062 = vmatpush1.xpose.msra.mxu0 0.0
        %2063 = vmatprep.subr.mxu0 0.0
        %2064 = vmatpush1.xpose.msra.mxu0 0.0
        %2065 = vmatprep.subr.mxu0 0.0
        %2066 = vmatpush1.xpose.msra.mxu0 0.0
        %2067 = vmatprep.subr.mxu0 0.0
        %2068 = vmatpush1.xpose.msra.mxu0 0.0
        %2069 = vmatprep.subr.mxu0 0.0
        %2070 = vmatpush1.xpose.msra.mxu0 0.0
        %2071 = vmatprep.subr.mxu0 0.0
        %2072 = vmatpush1.xpose.msra.mxu0 0.0
        %2073 = vmatprep.subr.mxu0 0.0
        %2074 = vmatpush1.xpose.msra.mxu0 0.0
        %2075 = vmatprep.subr.mxu0 0.0
        %2076 = vmatpush1.xpose.msra.mxu0 0.0
        %2077 = vmatprep.subr.mxu0 0.0
        %2078 = vmatpush1.xpose.msra.mxu0 0.0
        %2079 = vmatprep.subr.mxu0 0.0
        %2080 = vmatpush1.xpose.msra.mxu0 0.0
        %2081 = vmatprep.subr.mxu0 0.0
        %2082 = vmatpush1.xpose.msra.mxu0 0.0
        %2083 = vmatprep.subr.mxu0 0.0
        %2084 = vmatpush1.xpose.msra.mxu0 0.0
        %2085 = vmatprep.subr.mxu0 0.0
        %2086 = vmatpush1.xpose.msra.mxu0 0.0
        %2087 = vmatprep.subr.mxu0 0.0
        %2088 = vmatpush1.xpose.msra.mxu0 0.0
        %2089 = vmatprep.subr.mxu0 0.0
        %2090 = vmatpush1.xpose.msra.mxu0 0.0
        %2091 = vmatprep.subr.mxu0 0.0
        %2092 = vmatpush1.xpose.msra.mxu0 0.0
        %2093 = vmatprep.subr.mxu0 0.0
        %2094 = vmatpush1.xpose.msra.mxu0 0.0
        %2095 = vmatprep.subr.mxu0 0.0
        %2096 = vmatpush1.xpose.msra.mxu0 0.0
        %2097 = vmatprep.subr.mxu0 0.0
        %2098 = vmatpush1.xpose.msra.mxu0 0.0
        %2099 = vmatprep.subr.mxu0 0.0
        %2100 = vmatpush1.xpose.msra.mxu0 0.0
        %2101 = vmatprep.subr.mxu0 0.0
        %2102 = vmatpush1.xpose.msra.mxu0 0.0
        %2103 = vmatprep.subr.mxu0 0.0
        %2104 = vmatpush1.xpose.msra.mxu0 0.0
        %2105 = vmatprep.subr.mxu0 0.0
        %2106 = vmatpush1.xpose.msra.mxu0 0.0
        %2107 = vmatprep.subr.mxu0 0.0
        %2108 = vmatpush1.xpose.msra.mxu0 0.0
        %2109 = vmatprep.subr.mxu0 0.0
        %2110 = vmatpush1.xpose.msra.mxu0 0.0
        %2111 = vmatprep.subr.mxu0 0.0
        %2112 = vmatpush1.xpose.msra.mxu0 0.0
        %2113 = vmatprep.subr.mxu0 0.0
        %2114 = vmatpush1.xpose.msra.mxu0 0.0
        %2115 = vmatprep.subr.mxu0 0.0
        %2116 = vmatpush1.xpose.msra.mxu0 0.0
        %2117 = vmatprep.subr.mxu0 0.0
        %2118 = vmatpush1.xpose.msra.mxu0 0.0
        %2119 = vmatprep.mubr.f32.mxu0 0.0
        %2120 = vmatmul.mubr.f32.gmra.mrb[0].mxu0 %v2051
        %v2121 = vpop.f32.mrb[0].mxu0
        %v2122 = vadd.f32 0.0, %v2121
        %v2123 = vpop.f32.mrb[0].mxu0
        %2124 = vdwg.mxu0
        %v2125 = vmul.f32 %v2122, 0.17677669
        %v2126 = vsel %vm1958, -1e+20, %v2125
        %v2127 = vsel %vm792, %v2126, -inf
        %2128 = vmax.xlane.f32.xlu0 %v2127
        %v2129 = vpop.xlane.xlu0 %2128
        %v2130 = vsub.f32 %v2126, %v2129
        %v2131 = vmul.f32 %v2130, 1.442695
        %v2132 = vpow.pop %v2131
        %v2133 = vsel %vm792, %v2132, 0.0
        %2134 = vadd.xlane.f32.xlu0 %v2133
        %v2135 = vpop.xlane.xlu0 %2134
        %v2136 = vrcp.pop %v2135
        %v2137 = vmul.f32 %v2132, %v2136
        %2138 = vrot.lane.b32.xlu0 %v1877, 56
        %v2139 = vpop.permute.xlu0 %2138
        %v2142 = vsel %vm792, %v2137, 0
        %2144 = vmatprep.subr.mxu0 0.0
        %2145 = vmatpush1.msra.mxu0 %v2139
        %2146 = vmatprep.subr.mxu0 0.0
        %2147 = vmatpush1.msra.mxu0 0.0
        %2148 = vmatprep.subr.mxu0 0.0
        %2149 = vmatpush1.msra.mxu0 0.0
        %2150 = vmatprep.subr.mxu0 0.0
        %2151 = vmatpush1.msra.mxu0 0.0
        %2152 = vmatprep.subr.mxu0 0.0
        %2153 = vmatpush1.msra.mxu0 0.0
        %2154 = vmatprep.subr.mxu0 0.0
        %2155 = vmatpush1.msra.mxu0 0.0
        %2156 = vmatprep.subr.mxu0 0.0
        %2157 = vmatpush1.msra.mxu0 0.0
        %2158 = vmatprep.subr.mxu0 0.0
        %2159 = vmatpush1.msra.mxu0 0.0
        %2160 = vmatprep.subr.mxu0 0.0
        %2161 = vmatpush1.msra.mxu0 0.0
        %2162 = vmatprep.subr.mxu0 0.0
        %2163 = vmatpush1.msra.mxu0 0.0
        %2164 = vmatprep.subr.mxu0 0.0
        %2165 = vmatpush1.msra.mxu0 0.0
        %2166 = vmatprep.subr.mxu0 0.0
        %2167 = vmatpush1.msra.mxu0 0.0
        %2168 = vmatprep.subr.mxu0 0.0
        %2169 = vmatpush1.msra.mxu0 0.0
        %2170 = vmatprep.subr.mxu0 0.0
        %2171 = vmatpush1.msra.mxu0 0.0
        %2172 = vmatprep.subr.mxu0 0.0
        %2173 = vmatpush1.msra.mxu0 0.0
        %2174 = vmatprep.subr.mxu0 0.0
        %2175 = vmatpush1.msra.mxu0 0.0
        %2176 = vmatprep.subr.mxu0 0.0
        %2177 = vmatpush1.msra.mxu0 0.0
        %2178 = vmatprep.subr.mxu0 0.0
        %2179 = vmatpush1.msra.mxu0 0.0
        %2180 = vmatprep.subr.mxu0 0.0
        %2181 = vmatpush1.msra.mxu0 0.0
        %2182 = vmatprep.subr.mxu0 0.0
        %2183 = vmatpush1.msra.mxu0 0.0
        %2184 = vmatprep.subr.mxu0 0.0
        %2185 = vmatpush1.msra.mxu0 0.0
        %2186 = vmatprep.subr.mxu0 0.0
        %2187 = vmatpush1.msra.mxu0 0.0
        %2188 = vmatprep.subr.mxu0 0.0
        %2189 = vmatpush1.msra.mxu0 0.0
        %2190 = vmatprep.subr.mxu0 0.0
        %2191 = vmatpush1.msra.mxu0 0.0
        %2192 = vmatprep.subr.mxu0 0.0
        %2193 = vmatpush1.msra.mxu0 0.0
        %2194 = vmatprep.subr.mxu0 0.0
        %2195 = vmatpush1.msra.mxu0 0.0
        %2196 = vmatprep.subr.mxu0 0.0
        %2197 = vmatpush1.msra.mxu0 0.0
        %2198 = vmatprep.subr.mxu0 0.0
        %2199 = vmatpush1.msra.mxu0 0.0
        %2200 = vmatprep.subr.mxu0 0.0
        %2201 = vmatpush1.msra.mxu0 0.0
        %2202 = vmatprep.subr.mxu0 0.0
        %2203 = vmatpush1.msra.mxu0 0.0
        %2204 = vmatprep.subr.mxu0 0.0
        %2205 = vmatpush1.msra.mxu0 0.0
        %2206 = vmatprep.subr.mxu0 0.0
        %2207 = vmatpush1.msra.mxu0 0.0
        %2208 = vmatprep.mubr.f32.mxu0 0.0
        %2209 = vmatmul.mubr.f32.gmra.mrb[0].mxu0 %v2142
        %v2210 = vpop.f32.mrb[0].mxu0
        %v2211 = vadd.f32 0.0, %v2210
        %v2212 = vpop.f32.mrb[0].mxu0
        %2213 = vdwg.mxu0
        %v2215 = vsel %vm792, %v2211, 0
        %2217 = vmatprep.subr.mxu0 0.0
        %2218 = vmatpush1.msra.mxu0 %v1796
        %2219 = vmatprep.subr.mxu0 0.0
        %2220 = vmatpush1.msra.mxu0 0.0
        %2221 = vmatprep.subr.mxu0 0.0
        %2222 = vmatpush1.msra.mxu0 0.0
        %2223 = vmatprep.subr.mxu0 0.0
        %2224 = vmatpush1.msra.mxu0 0.0
        %2225 = vmatprep.subr.mxu0 0.0
        %2226 = vmatpush1.msra.mxu0 0.0
        %2227 = vmatprep.subr.mxu0 0.0
        %2228 = vmatpush1.msra.mxu0 0.0
        %2229 = vmatprep.subr.mxu0 0.0
        %2230 = vmatpush1.msra.mxu0 0.0
        %2231 = vmatprep.subr.mxu0 0.0
        %2232 = vmatpush1.msra.mxu0 0.0
        %2233 = vmatprep.subr.mxu0 0.0
        %2234 = vmatpush1.msra.mxu0 0.0
        %2235 = vmatprep.subr.mxu0 0.0
        %2236 = vmatpush1.msra.mxu0 0.0
        %2237 = vmatprep.subr.mxu0 0.0
        %2238 = vmatpush1.msra.mxu0 0.0
        %2239 = vmatprep.subr.mxu0 0.0
        %2240 = vmatpush1.msra.mxu0 0.0
        %2241 = vmatprep.subr.mxu0 0.0
        %2242 = vmatpush1.msra.mxu0 0.0
        %2243 = vmatprep.subr.mxu0 0.0
        %2244 = vmatpush1.msra.mxu0 0.0
        %2245 = vmatprep.subr.mxu0 0.0
        %2246 = vmatpush1.msra.mxu0 0.0
        %2247 = vmatprep.subr.mxu0 0.0
        %2248 = vmatpush1.msra.mxu0 0.0
        %2249 = vmatprep.subr.mxu0 0.0
        %2250 = vmatpush1.msra.mxu0 0.0
        %2251 = vmatprep.subr.mxu0 0.0
        %2252 = vmatpush1.msra.mxu0 0.0
        %2253 = vmatprep.subr.mxu0 0.0
        %2254 = vmatpush1.msra.mxu0 0.0
        %2255 = vmatprep.subr.mxu0 0.0
        %2256 = vmatpush1.msra.mxu0 0.0
        %2257 = vmatprep.subr.mxu0 0.0
        %2258 = vmatpush1.msra.mxu0 0.0
        %2259 = vmatprep.subr.mxu0 0.0
        %2260 = vmatpush1.msra.mxu0 0.0
        %2261 = vmatprep.subr.mxu0 0.0
        %2262 = vmatpush1.msra.mxu0 0.0
        %2263 = vmatprep.subr.mxu0 0.0
        %2264 = vmatpush1.msra.mxu0 0.0
        %2265 = vmatprep.subr.mxu0 0.0
        %2266 = vmatpush1.msra.mxu0 0.0
        %2267 = vmatprep.subr.mxu0 0.0
        %2268 = vmatpush1.msra.mxu0 0.0
        %2269 = vmatprep.subr.mxu0 0.0
        %2270 = vmatpush1.msra.mxu0 0.0
        %2271 = vmatprep.subr.mxu0 0.0
        %2272 = vmatpush1.msra.mxu0 0.0
        %2273 = vmatprep.subr.mxu0 0.0
        %2274 = vmatpush1.msra.mxu0 0.0
        %2275 = vmatprep.subr.mxu0 0.0
        %2276 = vmatpush1.msra.mxu0 0.0
        %2277 = vmatprep.subr.mxu0 0.0
        %2278 = vmatpush1.msra.mxu0 0.0
        %2279 = vmatprep.subr.mxu0 0.0
        %2280 = vmatpush1.msra.mxu0 0.0
        %2281 = vmatprep.mubr.f32.mxu0 0.0
        %2282 = vmatmul.mubr.f32.gmra.mrb[0].mxu0 %v2215
        %v2283 = vpop.f32.mrb[0].mxu0
        %v2284 = vadd.f32 0.0, %v2283
        %v2285 = vpop.f32.mrb[0].mxu0
        %2286 = vdwg.mxu0
        %v2288 = vsel %vm792, %v2044, 0
        %2290 = vmatprep.subr.mxu0 0.0
        %2291 = vmatpush1.msra.mxu0 %v1795
        %2292 = vmatprep.subr.mxu0 0.0
        %2293 = vmatpush1.msra.mxu0 0.0
        %2294 = vmatprep.subr.mxu0 0.0
        %2295 = vmatpush1.msra.mxu0 0.0
        %2296 = vmatprep.subr.mxu0 0.0
        %2297 = vmatpush1.msra.mxu0 0.0
        %2298 = vmatprep.subr.mxu0 0.0
        %2299 = vmatpush1.msra.mxu0 0.0
        %2300 = vmatprep.subr.mxu0 0.0
        %2301 = vmatpush1.msra.mxu0 0.0
        %2302 = vmatprep.subr.mxu0 0.0
        %2303 = vmatpush1.msra.mxu0 0.0
        %2304 = vmatprep.subr.mxu0 0.0
        %2305 = vmatpush1.msra.mxu0 0.0
        %2306 = vmatprep.subr.mxu0 0.0
        %2307 = vmatpush1.msra.mxu0 0.0
        %2308 = vmatprep.subr.mxu0 0.0
        %2309 = vmatpush1.msra.mxu0 0.0
        %2310 = vmatprep.subr.mxu0 0.0
        %2311 = vmatpush1.msra.mxu0 0.0
        %2312 = vmatprep.subr.mxu0 0.0
        %2313 = vmatpush1.msra.mxu0 0.0
        %2314 = vmatprep.subr.mxu0 0.0
        %2315 = vmatpush1.msra.mxu0 0.0
        %2316 = vmatprep.subr.mxu0 0.0
        %2317 = vmatpush1.msra.mxu0 0.0
        %2318 = vmatprep.subr.mxu0 0.0
        %2319 = vmatpush1.msra.mxu0 0.0
        %2320 = vmatprep.subr.mxu0 0.0
        %2321 = vmatpush1.msra.mxu0 0.0
        %2322 = vmatprep.subr.mxu0 0.0
        %2323 = vmatpush1.msra.mxu0 0.0
        %2324 = vmatprep.subr.mxu0 0.0
        %2325 = vmatpush1.msra.mxu0 0.0
        %2326 = vmatprep.subr.mxu0 0.0
        %2327 = vmatpush1.msra.mxu0 0.0
        %2328 = vmatprep.subr.mxu0 0.0
        %2329 = vmatpush1.msra.mxu0 0.0
        %2330 = vmatprep.subr.mxu0 0.0
        %2331 = vmatpush1.msra.mxu0 0.0
        %2332 = vmatprep.subr.mxu0 0.0
        %2333 = vmatpush1.msra.mxu0 0.0
        %2334 = vmatprep.subr.mxu0 0.0
        %2335 = vmatpush1.msra.mxu0 0.0
        %2336 = vmatprep.subr.mxu0 0.0
        %2337 = vmatpush1.msra.mxu0 0.0
        %2338 = vmatprep.subr.mxu0 0.0
        %2339 = vmatpush1.msra.mxu0 0.0
        %2340 = vmatprep.subr.mxu0 0.0
        %2341 = vmatpush1.msra.mxu0 0.0
        %2342 = vmatprep.subr.mxu0 0.0
        %2343 = vmatpush1.msra.mxu0 0.0
        %2344 = vmatprep.subr.mxu0 0.0
        %2345 = vmatpush1.msra.mxu0 0.0
        %2346 = vmatprep.subr.mxu0 0.0
        %2347 = vmatpush1.msra.mxu0 0.0
        %2348 = vmatprep.subr.mxu0 0.0
        %2349 = vmatpush1.msra.mxu0 0.0
        %2350 = vmatprep.subr.mxu0 0.0
        %2351 = vmatpush1.msra.mxu0 0.0
        %2352 = vmatprep.subr.mxu0 0.0
        %2353 = vmatpush1.msra.mxu0 0.0
        %2354 = vmatprep.mubr.f32.mxu0 0.0
        %2355 = vmatmul.mubr.f32.gmra.mrb[0].mxu0 %v2288
        %v2356 = vpop.f32.mrb[0].mxu0
        %v2357 = vadd.f32 %v2284, %v2356
        %v2358 = vpop.f32.mrb[0].mxu0
        %2359 = vdwg.mxu0
        %2360 = vrot.lane.b32.xlu0 %v1877, 112
        %v2361 = vpop.permute.xlu0 %2360
        %2362 = vrot.lane.b32.xlu0 %v1877, 80
        %v2363 = vpop.permute.xlu0 %2362
        %v2364 = vsel %vm792, %v2361, 0
        %v2366 = vsel %vm792, %v2363, 0
        %2368 = vmatprep.subr.mxu0 0.0
        %2369 = vmatpush1.xpose.msra.mxu0 %v2366
        %2370 = vmatprep.subr.mxu0 0.0
        %2371 = vmatpush1.xpose.msra.mxu0 0.0
        %2372 = vmatprep.subr.mxu0 0.0
        %2373 = vmatpush1.xpose.msra.mxu0 0.0
        %2374 = vmatprep.subr.mxu0 0.0
        %2375 = vmatpush1.xpose.msra.mxu0 0.0
        %2376 = vmatprep.subr.mxu0 0.0
        %2377 = vmatpush1.xpose.msra.mxu0 0.0
        %2378 = vmatprep.subr.mxu0 0.0
        %2379 = vmatpush1.xpose.msra.mxu0 0.0
        %2380 = vmatprep.subr.mxu0 0.0
        %2381 = vmatpush1.xpose.msra.mxu0 0.0
        %2382 = vmatprep.subr.mxu0 0.0
        %2383 = vmatpush1.xpose.msra.mxu0 0.0
        %2384 = vmatprep.subr.mxu0 0.0
        %2385 = vmatpush1.xpose.msra.mxu0 0.0
        %2386 = vmatprep.subr.mxu0 0.0
        %2387 = vmatpush1.xpose.msra.mxu0 0.0
        %2388 = vmatprep.subr.mxu0 0.0
        %2389 = vmatpush1.xpose.msra.mxu0 0.0
        %2390 = vmatprep.subr.mxu0 0.0
        %2391 = vmatpush1.xpose.msra.mxu0 0.0
        %2392 = vmatprep.subr.mxu0 0.0
        %2393 = vmatpush1.xpose.msra.mxu0 0.0
        %2394 = vmatprep.subr.mxu0 0.0
        %2395 = vmatpush1.xpose.msra.mxu0 0.0
        %2396 = vmatprep.subr.mxu0 0.0
        %2397 = vmatpush1.xpose.msra.mxu0 0.0
        %2398 = vmatprep.subr.mxu0 0.0
        %2399 = vmatpush1.xpose.msra.mxu0 0.0
        %2400 = vmatprep.subr.mxu0 0.0
        %2401 = vmatpush1.xpose.msra.mxu0 0.0
        %2402 = vmatprep.subr.mxu0 0.0
        %2403 = vmatpush1.xpose.msra.mxu0 0.0
        %2404 = vmatprep.subr.mxu0 0.0
        %2405 = vmatpush1.xpose.msra.mxu0 0.0
        %2406 = vmatprep.subr.mxu0 0.0
        %2407 = vmatpush1.xpose.msra.mxu0 0.0
        %2408 = vmatprep.subr.mxu0 0.0
        %2409 = vmatpush1.xpose.msra.mxu0 0.0
        %2410 = vmatprep.subr.mxu0 0.0
        %2411 = vmatpush1.xpose.msra.mxu0 0.0
        %2412 = vmatprep.subr.mxu0 0.0
        %2413 = vmatpush1.xpose.msra.mxu0 0.0
        %2414 = vmatprep.subr.mxu0 0.0
        %2415 = vmatpush1.xpose.msra.mxu0 0.0
        %2416 = vmatprep.subr.mxu0 0.0
        %2417 = vmatpush1.xpose.msra.mxu0 0.0
        %2418 = vmatprep.subr.mxu0 0.0
        %2419 = vmatpush1.xpose.msra.mxu0 0.0
        %2420 = vmatprep.subr.mxu0 0.0
        %2421 = vmatpush1.xpose.msra.mxu0 0.0
        %2422 = vmatprep.subr.mxu0 0.0
        %2423 = vmatpush1.xpose.msra.mxu0 0.0
        %2424 = vmatprep.subr.mxu0 0.0
        %2425 = vmatpush1.xpose.msra.mxu0 0.0
        %2426 = vmatprep.subr.mxu0 0.0
        %2427 = vmatpush1.xpose.msra.mxu0 0.0
        %2428 = vmatprep.subr.mxu0 0.0
        %2429 = vmatpush1.xpose.msra.mxu0 0.0
        %2430 = vmatprep.subr.mxu0 0.0
        %2431 = vmatpush1.xpose.msra.mxu0 0.0
        %2432 = vmatprep.mubr.f32.mxu0 0.0
        %2433 = vmatmul.mubr.f32.gmra.mrb[0].mxu0 %v2364
        %v2434 = vpop.f32.mrb[0].mxu0
        %v2435 = vadd.f32 0.0, %v2434
        %v2436 = vpop.f32.mrb[0].mxu0
        %2437 = vdwg.mxu0
        %v2438 = vmul.f32 %v2435, 0.17677669
        %v2439 = vsel %vm1958, -1e+20, %v2438
        %v2440 = vsel %vm792, %v2439, -inf
        %2441 = vmax.xlane.f32.xlu0 %v2440
        %v2442 = vpop.xlane.xlu0 %2441
        %v2443 = vsub.f32 %v2439, %v2442
        %v2444 = vmul.f32 %v2443, 1.442695
        %v2445 = vpow.pop %v2444
        %v2446 = vsel %vm792, %v2445, 0.0
        %2447 = vadd.xlane.f32.xlu0 %v2446
        %v2448 = vpop.xlane.xlu0 %2447
        %v2449 = vrcp.pop %v2448
        %v2450 = vmul.f32 %v2445, %v2449
        %2451 = vrot.lane.b32.xlu0 %v1877, 48
        %v2452 = vpop.permute.xlu0 %2451
        %v2455 = vsel %vm792, %v2450, 0
        %2457 = vmatprep.subr.mxu0 0.0
        %2458 = vmatpush1.msra.mxu0 %v2452
        %2459 = vmatprep.subr.mxu0 0.0
        %2460 = vmatpush1.msra.mxu0 0.0
        %2461 = vmatprep.subr.mxu0 0.0
        %2462 = vmatpush1.msra.mxu0 0.0
        %2463 = vmatprep.subr.mxu0 0.0
        %2464 = vmatpush1.msra.mxu0 0.0
        %2465 = vmatprep.subr.mxu0 0.0
        %2466 = vmatpush1.msra.mxu0 0.0
        %2467 = vmatprep.subr.mxu0 0.0
        %2468 = vmatpush1.msra.mxu0 0.0
        %2469 = vmatprep.subr.mxu0 0.0
        %2470 = vmatpush1.msra.mxu0 0.0
        %2471 = vmatprep.subr.mxu0 0.0
        %2472 = vmatpush1.msra.mxu0 0.0
        %2473 = vmatprep.subr.mxu0 0.0
        %2474 = vmatpush1.msra.mxu0 0.0
        %2475 = vmatprep.subr.mxu0 0.0
        %2476 = vmatpush1.msra.mxu0 0.0
        %2477 = vmatprep.subr.mxu0 0.0
        %2478 = vmatpush1.msra.mxu0 0.0
        %2479 = vmatprep.subr.mxu0 0.0
        %2480 = vmatpush1.msra.mxu0 0.0
        %2481 = vmatprep.subr.mxu0 0.0
        %2482 = vmatpush1.msra.mxu0 0.0
        %2483 = vmatprep.subr.mxu0 0.0
        %2484 = vmatpush1.msra.mxu0 0.0
        %2485 = vmatprep.subr.mxu0 0.0
        %2486 = vmatpush1.msra.mxu0 0.0
        %2487 = vmatprep.subr.mxu0 0.0
        %2488 = vmatpush1.msra.mxu0 0.0
        %2489 = vmatprep.subr.mxu0 0.0
        %2490 = vmatpush1.msra.mxu0 0.0
        %2491 = vmatprep.subr.mxu0 0.0
        %2492 = vmatpush1.msra.mxu0 0.0
        %2493 = vmatprep.subr.mxu0 0.0
        %2494 = vmatpush1.msra.mxu0 0.0
        %2495 = vmatprep.subr.mxu0 0.0
        %2496 = vmatpush1.msra.mxu0 0.0
        %2497 = vmatprep.subr.mxu0 0.0
        %2498 = vmatpush1.msra.mxu0 0.0
        %2499 = vmatprep.subr.mxu0 0.0
        %2500 = vmatpush1.msra.mxu0 0.0
        %2501 = vmatprep.subr.mxu0 0.0
        %2502 = vmatpush1.msra.mxu0 0.0
        %2503 = vmatprep.subr.mxu0 0.0
        %2504 = vmatpush1.msra.mxu0 0.0
        %2505 = vmatprep.subr.mxu0 0.0
        %2506 = vmatpush1.msra.mxu0 0.0
        %2507 = vmatprep.subr.mxu0 0.0
        %2508 = vmatpush1.msra.mxu0 0.0
        %2509 = vmatprep.subr.mxu0 0.0
        %2510 = vmatpush1.msra.mxu0 0.0
        %2511 = vmatprep.subr.mxu0 0.0
        %2512 = vmatpush1.msra.mxu0 0.0
        %2513 = vmatprep.subr.mxu0 0.0
        %2514 = vmatpush1.msra.mxu0 0.0
        %2515 = vmatprep.subr.mxu0 0.0
        %2516 = vmatpush1.msra.mxu0 0.0
        %2517 = vmatprep.subr.mxu0 0.0
        %2518 = vmatpush1.msra.mxu0 0.0
        %2519 = vmatprep.subr.mxu0 0.0
        %2520 = vmatpush1.msra.mxu0 0.0
        %2521 = vmatprep.mubr.f32.mxu0 0.0
        %2522 = vmatmul.mubr.f32.gmra.mrb[0].mxu0 %v2455
        %v2523 = vpop.f32.mrb[0].mxu0
        %v2524 = vadd.f32 0.0, %v2523
        %v2525 = vpop.f32.mrb[0].mxu0
        %2526 = vdwg.mxu0
        %v2528 = vsel %vm792, %v2524, 0
        %2530 = vmatprep.subr.mxu0 0.0
        %2531 = vmatpush1.msra.mxu0 %v1797
        %2532 = vmatprep.subr.mxu0 0.0
        %2533 = vmatpush1.msra.mxu0 0.0
        %2534 = vmatprep.subr.mxu0 0.0
        %2535 = vmatpush1.msra.mxu0 0.0
        %2536 = vmatprep.subr.mxu0 0.0
        %2537 = vmatpush1.msra.mxu0 0.0
        %2538 = vmatprep.subr.mxu0 0.0
        %2539 = vmatpush1.msra.mxu0 0.0
        %2540 = vmatprep.subr.mxu0 0.0
        %2541 = vmatpush1.msra.mxu0 0.0
        %2542 = vmatprep.subr.mxu0 0.0
        %2543 = vmatpush1.msra.mxu0 0.0
        %2544 = vmatprep.subr.mxu0 0.0
        %2545 = vmatpush1.msra.mxu0 0.0
        %2546 = vmatprep.subr.mxu0 0.0
        %2547 = vmatpush1.msra.mxu0 0.0
        %2548 = vmatprep.subr.mxu0 0.0
        %2549 = vmatpush1.msra.mxu0 0.0
        %2550 = vmatprep.subr.mxu0 0.0
        %2551 = vmatpush1.msra.mxu0 0.0
        %2552 = vmatprep.subr.mxu0 0.0
        %2553 = vmatpush1.msra.mxu0 0.0
        %2554 = vmatprep.subr.mxu0 0.0
        %2555 = vmatpush1.msra.mxu0 0.0
        %2556 = vmatprep.subr.mxu0 0.0
        %2557 = vmatpush1.msra.mxu0 0.0
        %2558 = vmatprep.subr.mxu0 0.0
        %2559 = vmatpush1.msra.mxu0 0.0
        %2560 = vmatprep.subr.mxu0 0.0
        %2561 = vmatpush1.msra.mxu0 0.0
        %2562 = vmatprep.subr.mxu0 0.0
        %2563 = vmatpush1.msra.mxu0 0.0
        %2564 = vmatprep.subr.mxu0 0.0
        %2565 = vmatpush1.msra.mxu0 0.0
        %2566 = vmatprep.subr.mxu0 0.0
        %2567 = vmatpush1.msra.mxu0 0.0
        %2568 = vmatprep.subr.mxu0 0.0
        %2569 = vmatpush1.msra.mxu0 0.0
        %2570 = vmatprep.subr.mxu0 0.0
        %2571 = vmatpush1.msra.mxu0 0.0
        %2572 = vmatprep.subr.mxu0 0.0
        %2573 = vmatpush1.msra.mxu0 0.0
        %2574 = vmatprep.subr.mxu0 0.0
        %2575 = vmatpush1.msra.mxu0 0.0
        %2576 = vmatprep.subr.mxu0 0.0
        %2577 = vmatpush1.msra.mxu0 0.0
        %2578 = vmatprep.subr.mxu0 0.0
        %2579 = vmatpush1.msra.mxu0 0.0
        %2580 = vmatprep.subr.mxu0 0.0
        %2581 = vmatpush1.msra.mxu0 0.0
        %2582 = vmatprep.subr.mxu0 0.0
        %2583 = vmatpush1.msra.mxu0 0.0
        %2584 = vmatprep.subr.mxu0 0.0
        %2585 = vmatpush1.msra.mxu0 0.0
        %2586 = vmatprep.subr.mxu0 0.0
        %2587 = vmatpush1.msra.mxu0 0.0
        %2588 = vmatprep.subr.mxu0 0.0
        %2589 = vmatpush1.msra.mxu0 0.0
        %2590 = vmatprep.subr.mxu0 0.0
        %2591 = vmatpush1.msra.mxu0 0.0
        %2592 = vmatprep.subr.mxu0 0.0
        %2593 = vmatpush1.msra.mxu0 0.0
        %2594 = vmatprep.mubr.f32.mxu0 0.0
        %2595 = vmatmul.mubr.f32.gmra.mrb[0].mxu0 %v2528
        %v2596 = vpop.f32.mrb[0].mxu0
        %v2597 = vadd.f32 0.0, %v2596
        %v2598 = vpop.f32.mrb[0].mxu0
        %2599 = vdwg.mxu0
        %v2600 = vadd.f32 %v2357, %v2597
        %2601 = vrot.lane.b32.xlu0 %v1877, 104
        %v2602 = vpop.permute.xlu0 %2601
        %2603 = vrot.lane.b32.xlu0 %v1877, 72
        %v2604 = vpop.permute.xlu0 %2603
        %v2605 = vsel %vm792, %v2602, 0
        %v2607 = vsel %vm792, %v2604, 0
        %2609 = vmatprep.subr.mxu0 0.0
        %2610 = vmatpush1.xpose.msra.mxu0 %v2607
        %2611 = vmatprep.subr.mxu0 0.0
        %2612 = vmatpush1.xpose.msra.mxu0 0.0
        %2613 = vmatprep.subr.mxu0 0.0
        %2614 = vmatpush1.xpose.msra.mxu0 0.0
        %2615 = vmatprep.subr.mxu0 0.0
        %2616 = vmatpush1.xpose.msra.mxu0 0.0
        %2617 = vmatprep.subr.mxu0 0.0
        %2618 = vmatpush1.xpose.msra.mxu0 0.0
        %2619 = vmatprep.subr.mxu0 0.0
        %2620 = vmatpush1.xpose.msra.mxu0 0.0
        %2621 = vmatprep.subr.mxu0 0.0
        %2622 = vmatpush1.xpose.msra.mxu0 0.0
        %2623 = vmatprep.subr.mxu0 0.0
        %2624 = vmatpush1.xpose.msra.mxu0 0.0
        %2625 = vmatprep.subr.mxu0 0.0
        %2626 = vmatpush1.xpose.msra.mxu0 0.0
        %2627 = vmatprep.subr.mxu0 0.0
        %2628 = vmatpush1.xpose.msra.mxu0 0.0
        %2629 = vmatprep.subr.mxu0 0.0
        %2630 = vmatpush1.xpose.msra.mxu0 0.0
        %2631 = vmatprep.subr.mxu0 0.0
        %2632 = vmatpush1.xpose.msra.mxu0 0.0
        %2633 = vmatprep.subr.mxu0 0.0
        %2634 = vmatpush1.xpose.msra.mxu0 0.0
        %2635 = vmatprep.subr.mxu0 0.0
        %2636 = vmatpush1.xpose.msra.mxu0 0.0
        %2637 = vmatprep.subr.mxu0 0.0
        %2638 = vmatpush1.xpose.msra.mxu0 0.0
        %2639 = vmatprep.subr.mxu0 0.0
        %2640 = vmatpush1.xpose.msra.mxu0 0.0
        %2641 = vmatprep.subr.mxu0 0.0
        %2642 = vmatpush1.xpose.msra.mxu0 0.0
        %2643 = vmatprep.subr.mxu0 0.0
        %2644 = vmatpush1.xpose.msra.mxu0 0.0
        %2645 = vmatprep.subr.mxu0 0.0
        %2646 = vmatpush1.xpose.msra.mxu0 0.0
        %2647 = vmatprep.subr.mxu0 0.0
        %2648 = vmatpush1.xpose.msra.mxu0 0.0
        %2649 = vmatprep.subr.mxu0 0.0
        %2650 = vmatpush1.xpose.msra.mxu0 0.0
        %2651 = vmatprep.subr.mxu0 0.0
        %2652 = vmatpush1.xpose.msra.mxu0 0.0
        %2653 = vmatprep.subr.mxu0 0.0
        %2654 = vmatpush1.xpose.msra.mxu0 0.0
        %2655 = vmatprep.subr.mxu0 0.0
        %2656 = vmatpush1.xpose.msra.mxu0 0.0
        %2657 = vmatprep.subr.mxu0 0.0
        %2658 = vmatpush1.xpose.msra.mxu0 0.0
        %2659 = vmatprep.subr.mxu0 0.0
        %2660 = vmatpush1.xpose.msra.mxu0 0.0
        %2661 = vmatprep.subr.mxu0 0.0
        %2662 = vmatpush1.xpose.msra.mxu0 0.0
        %2663 = vmatprep.subr.mxu0 0.0
        %2664 = vmatpush1.xpose.msra.mxu0 0.0
        %2665 = vmatprep.subr.mxu0 0.0
        %2666 = vmatpush1.xpose.msra.mxu0 0.0
        %2667 = vmatprep.subr.mxu0 0.0
        %2668 = vmatpush1.xpose.msra.mxu0 0.0
        %2669 = vmatprep.subr.mxu0 0.0
        %2670 = vmatpush1.xpose.msra.mxu0 0.0
        %2671 = vmatprep.subr.mxu0 0.0
        %2672 = vmatpush1.xpose.msra.mxu0 0.0
        %2673 = vmatprep.mubr.f32.mxu0 0.0
        %2674 = vmatmul.mubr.f32.gmra.mrb[0].mxu0 %v2605
        %v2675 = vpop.f32.mrb[0].mxu0
        %v2676 = vadd.f32 0.0, %v2675
        %v2677 = vpop.f32.mrb[0].mxu0
        %2678 = vdwg.mxu0
        %v2679 = vmul.f32 %v2676, 0.17677669
        %v2680 = vsel %vm1958, -1e+20, %v2679
        %v2681 = vsel %vm792, %v2680, -inf
        %2682 = vmax.xlane.f32.xlu0 %v2681
        %v2683 = vpop.xlane.xlu0 %2682
        %v2684 = vsub.f32 %v2680, %v2683
        %v2685 = vmul.f32 %v2684, 1.442695
        %v2686 = vpow.pop %v2685
        %v2687 = vsel %vm792, %v2686, 0.0
        %2688 = vadd.xlane.f32.xlu0 %v2687
        %v2689 = vpop.xlane.xlu0 %2688
        %v2690 = vrcp.pop %v2689
        %v2691 = vmul.f32 %v2686, %v2690
        %2692 = vrot.lane.b32.xlu0 %v1877, 40
        %v2693 = vpop.permute.xlu0 %2692
        %v2696 = vsel %vm792, %v2691, 0
        %2698 = vmatprep.subr.mxu0 0.0
        %2699 = vmatpush1.msra.mxu0 %v2693
        %2700 = vmatprep.subr.mxu0 0.0
        %2701 = vmatpush1.msra.mxu0 0.0
        %2702 = vmatprep.subr.mxu0 0.0
        %2703 = vmatpush1.msra.mxu0 0.0
        %2704 = vmatprep.subr.mxu0 0.0
        %2705 = vmatpush1.msra.mxu0 0.0
        %2706 = vmatprep.subr.mxu0 0.0
        %2707 = vmatpush1.msra.mxu0 0.0
        %2708 = vmatprep.subr.mxu0 0.0
        %2709 = vmatpush1.msra.mxu0 0.0
        %2710 = vmatprep.subr.mxu0 0.0
        %2711 = vmatpush1.msra.mxu0 0.0
        %2712 = vmatprep.subr.mxu0 0.0
        %2713 = vmatpush1.msra.mxu0 0.0
        %2714 = vmatprep.subr.mxu0 0.0
        %2715 = vmatpush1.msra.mxu0 0.0
        %2716 = vmatprep.subr.mxu0 0.0
        %2717 = vmatpush1.msra.mxu0 0.0
        %2718 = vmatprep.subr.mxu0 0.0
        %2719 = vmatpush1.msra.mxu0 0.0
        %2720 = vmatprep.subr.mxu0 0.0
        %2721 = vmatpush1.msra.mxu0 0.0
        %2722 = vmatprep.subr.mxu0 0.0
        %2723 = vmatpush1.msra.mxu0 0.0
        %2724 = vmatprep.subr.mxu0 0.0
        %2725 = vmatpush1.msra.mxu0 0.0
        %2726 = vmatprep.subr.mxu0 0.0
        %2727 = vmatpush1.msra.mxu0 0.0
        %2728 = vmatprep.subr.mxu0 0.0
        %2729 = vmatpush1.msra.mxu0 0.0
        %2730 = vmatprep.subr.mxu0 0.0
        %2731 = vmatpush1.msra.mxu0 0.0
        %2732 = vmatprep.subr.mxu0 0.0
        %2733 = vmatpush1.msra.mxu0 0.0
        %2734 = vmatprep.subr.mxu0 0.0
        %2735 = vmatpush1.msra.mxu0 0.0
        %2736 = vmatprep.subr.mxu0 0.0
        %2737 = vmatpush1.msra.mxu0 0.0
        %2738 = vmatprep.subr.mxu0 0.0
        %2739 = vmatpush1.msra.mxu0 0.0
        %2740 = vmatprep.subr.mxu0 0.0
        %2741 = vmatpush1.msra.mxu0 0.0
        %2742 = vmatprep.subr.mxu0 0.0
        %2743 = vmatpush1.msra.mxu0 0.0
        %2744 = vmatprep.subr.mxu0 0.0
        %2745 = vmatpush1.msra.mxu0 0.0
        %2746 = vmatprep.subr.mxu0 0.0
        %2747 = vmatpush1.msra.mxu0 0.0
        %2748 = vmatprep.subr.mxu0 0.0
        %2749 = vmatpush1.msra.mxu0 0.0
        %2750 = vmatprep.subr.mxu0 0.0
        %2751 = vmatpush1.msra.mxu0 0.0
        %2752 = vmatprep.subr.mxu0 0.0
        %2753 = vmatpush1.msra.mxu0 0.0
        %2754 = vmatprep.subr.mxu0 0.0
        %2755 = vmatpush1.msra.mxu0 0.0
        %2756 = vmatprep.subr.mxu0 0.0
        %2757 = vmatpush1.msra.mxu0 0.0
        %2758 = vmatprep.subr.mxu0 0.0
        %2759 = vmatpush1.msra.mxu0 0.0
        %2760 = vmatprep.subr.mxu0 0.0
        %2761 = vmatpush1.msra.mxu0 0.0
        %2762 = vmatprep.mubr.f32.mxu0 0.0
        %2763 = vmatmul.mubr.f32.gmra.mrb[0].mxu0 %v2696
        %v2764 = vpop.f32.mrb[0].mxu0
        %v2765 = vadd.f32 0.0, %v2764
        %v2766 = vpop.f32.mrb[0].mxu0
        %2767 = vdwg.mxu0
        %v2769 = vsel %vm792, %v2765, 0
        %2771 = vmatprep.subr.mxu0 0.0
        %2772 = vmatpush1.msra.mxu0 %v1798
        %2773 = vmatprep.subr.mxu0 0.0
        %2774 = vmatpush1.msra.mxu0 0.0
        %2775 = vmatprep.subr.mxu0 0.0
        %2776 = vmatpush1.msra.mxu0 0.0
        %2777 = vmatprep.subr.mxu0 0.0
        %2778 = vmatpush1.msra.mxu0 0.0
        %2779 = vmatprep.subr.mxu0 0.0
        %2780 = vmatpush1.msra.mxu0 0.0
        %2781 = vmatprep.subr.mxu0 0.0
        %2782 = vmatpush1.msra.mxu0 0.0
        %2783 = vmatprep.subr.mxu0 0.0
        %2784 = vmatpush1.msra.mxu0 0.0
        %2785 = vmatprep.subr.mxu0 0.0
        %2786 = vmatpush1.msra.mxu0 0.0
        %2787 = vmatprep.subr.mxu0 0.0
        %2788 = vmatpush1.msra.mxu0 0.0
        %2789 = vmatprep.subr.mxu0 0.0
        %2790 = vmatpush1.msra.mxu0 0.0
        %2791 = vmatprep.subr.mxu0 0.0
        %2792 = vmatpush1.msra.mxu0 0.0
        %2793 = vmatprep.subr.mxu0 0.0
        %2794 = vmatpush1.msra.mxu0 0.0
        %2795 = vmatprep.subr.mxu0 0.0
        %2796 = vmatpush1.msra.mxu0 0.0
        %2797 = vmatprep.subr.mxu0 0.0
        %2798 = vmatpush1.msra.mxu0 0.0
        %2799 = vmatprep.subr.mxu0 0.0
        %2800 = vmatpush1.msra.mxu0 0.0
        %2801 = vmatprep.subr.mxu0 0.0
        %2802 = vmatpush1.msra.mxu0 0.0
        %2803 = vmatprep.subr.mxu0 0.0
        %2804 = vmatpush1.msra.mxu0 0.0
        %2805 = vmatprep.subr.mxu0 0.0
        %2806 = vmatpush1.msra.mxu0 0.0
        %2807 = vmatprep.subr.mxu0 0.0
        %2808 = vmatpush1.msra.mxu0 0.0
        %2809 = vmatprep.subr.mxu0 0.0
        %2810 = vmatpush1.msra.mxu0 0.0
        %2811 = vmatprep.subr.mxu0 0.0
        %2812 = vmatpush1.msra.mxu0 0.0
        %2813 = vmatprep.subr.mxu0 0.0
        %2814 = vmatpush1.msra.mxu0 0.0
        %2815 = vmatprep.subr.mxu0 0.0
        %2816 = vmatpush1.msra.mxu0 0.0
        %2817 = vmatprep.subr.mxu0 0.0
        %2818 = vmatpush1.msra.mxu0 0.0
        %2819 = vmatprep.subr.mxu0 0.0
        %2820 = vmatpush1.msra.mxu0 0.0
        %2821 = vmatprep.subr.mxu0 0.0
        %2822 = vmatpush1.msra.mxu0 0.0
        %2823 = vmatprep.subr.mxu0 0.0
        %2824 = vmatpush1.msra.mxu0 0.0
        %2825 = vmatprep.subr.mxu0 0.0
        %2826 = vmatpush1.msra.mxu0 0.0
        %2827 = vmatprep.subr.mxu0 0.0
        %2828 = vmatpush1.msra.mxu0 0.0
        %2829 = vmatprep.subr.mxu0 0.0
        %2830 = vmatpush1.msra.mxu0 0.0
        %2831 = vmatprep.subr.mxu0 0.0
        %2832 = vmatpush1.msra.mxu0 0.0
        %2833 = vmatprep.subr.mxu0 0.0
        %2834 = vmatpush1.msra.mxu0 0.0
        %2835 = vmatprep.mubr.f32.mxu0 0.0
        %2836 = vmatmul.mubr.f32.gmra.mrb[0].mxu0 %v2769
        %v2837 = vpop.f32.mrb[0].mxu0
        %v2838 = vadd.f32 0.0, %v2837
        %v2839 = vpop.f32.mrb[0].mxu0
        %2840 = vdwg.mxu0
        %v2841 = vadd.f32 %v2600, %v2838
        %v2843 = vlaneseq
        %v2844 = vshrl.u32 %v2843, 7
        %v2845 = vsub.s32 0, %v2844
        %v2846 = vrot.slane %v1799, %v2845
        %v2848 = vadd.f32 %v2841, %v2846
        %v2849 = vadd.f32 %v2848, %v1789
        %v2850 = vld [vmem:[%s13] sm:$0x1]
        %v2851 = vld [vmem:[%s14] sm:$0x1]
        %v2852 = vsel %vm715, %v2849, 0.0
        %2853 = vadd.xlane.f32.xlu0 %v2852
        %v2854 = vpop.xlane.xlu0 %2853
        %v2855 = vmul.f32 %v2854, %v1765
        %v2856 = vsub.f32 %v2849, %v2855
        %v2857 = vmul.f32 %v2856, %v2856
        %v2858 = vsel %vm715, %v2857, 0.0
        %2859 = vadd.xlane.f32.xlu0 %v2858
        %v2860 = vpop.xlane.xlu0 %2859
        %v2861 = vmul.f32 %v2860, %v1765
        %v2862 = vadd.f32 %v2861, 1e-05
        %v2863 = vrsqrt.pop %v2862
        %v2864 = vmul.f32 %v2856, %v2863
        %v2866 = vlaneseq
        %v2867 = vshrl.u32 %v2866, 7
        %v2868 = vsub.s32 0, %v2867
        %v2869 = vrot.slane %v2850, %v2868
        %v2871 = vmul.f32 %v2864, %v2869
        %v2873 = vlaneseq
        %v2874 = vshrl.u32 %v2873, 7
        %v2875 = vsub.s32 0, %v2874
        %v2876 = vrot.slane %v2851, %v2875
        %v2878 = vadd.f32 %v2871, %v2876
        %v2879 = vld [vmem:[%s17] sm:$0xff]
        %v2880 = vld [vmem:[%s17 + $0x8] sm:$0xff]
        %v2881 = vld [vmem:[%s17 + $0x10] sm:$0xff]
        %v2882 = vld [vmem:[%s17 + $0x18] sm:$0xff]
        %v2883 = vld [vmem:[%s18] sm:$0x1]
        %v2885 = vlaneseq
        %v2886 = vshrl.u32 %v2885, 7
        %v2887 = vsub.s32 0, %v2886
        %v2888 = vrot.slane %v2883, %v2887
        %v2891 = vsel %vm715, %v2878, 0
        %2893 = vmatprep.subr.mxu0 0.0
        %2894 = vmatpush1.msra.mxu0 %v2879
        %2895 = vmatprep.subr.mxu0 0.0
        %2896 = vmatpush1.msra.mxu0 %v2880
        %2897 = vmatprep.subr.mxu0 0.0
        %2898 = vmatpush1.msra.mxu0 %v2881
        %2899 = vmatprep.subr.mxu0 0.0
        %2900 = vmatpush1.msra.mxu0 %v2882
        %2901 = vmatprep.subr.mxu0 0.0
        %2902 = vmatpush1.msra.mxu0 0.0
        %2903 = vmatprep.subr.mxu0 0.0
        %2904 = vmatpush1.msra.mxu0 0.0
        %2905 = vmatprep.subr.mxu0 0.0
        %2906 = vmatpush1.msra.mxu0 0.0
        %2907 = vmatprep.subr.mxu0 0.0
        %2908 = vmatpush1.msra.mxu0 0.0
        %2909 = vmatprep.subr.mxu0 0.0
        %2910 = vmatpush1.msra.mxu0 0.0
        %2911 = vmatprep.subr.mxu0 0.0
        %2912 = vmatpush1.msra.mxu0 0.0
        %2913 = vmatprep.subr.mxu0 0.0
        %2914 = vmatpush1.msra.mxu0 0.0
        %2915 = vmatprep.subr.mxu0 0.0
        %2916 = vmatpush1.msra.mxu0 0.0
        %2917 = vmatprep.subr.mxu0 0.0
        %2918 = vmatpush1.msra.mxu0 0.0
        %2919 = vmatprep.subr.mxu0 0.0
        %2920 = vmatpush1.msra.mxu0 0.0
        %2921 = vmatprep.subr.mxu0 0.0
        %2922 = vmatpush1.msra.mxu0 0.0
        %2923 = vmatprep.subr.mxu0 0.0
        %2924 = vmatpush1.msra.mxu0 0.0
        %2925 = vmatprep.subr.mxu0 0.0
        %2926 = vmatpush1.msra.mxu0 0.0
        %2927 = vmatprep.subr.mxu0 0.0
        %2928 = vmatpush1.msra.mxu0 0.0
        %2929 = vmatprep.subr.mxu0 0.0
        %2930 = vmatpush1.msra.mxu0 0.0
        %2931 = vmatprep.subr.mxu0 0.0
        %2932 = vmatpush1.msra.mxu0 0.0
        %2933 = vmatprep.subr.mxu0 0.0
        %2934 = vmatpush1.msra.mxu0 0.0
        %2935 = vmatprep.subr.mxu0 0.0
        %2936 = vmatpush1.msra.mxu0 0.0
        %2937 = vmatprep.subr.mxu0 0.0
        %2938 = vmatpush1.msra.mxu0 0.0
        %2939 = vmatprep.subr.mxu0 0.0
        %2940 = vmatpush1.msra.mxu0 0.0
        %2941 = vmatprep.subr.mxu0 0.0
        %2942 = vmatpush1.msra.mxu0 0.0
        %2943 = vmatprep.subr.mxu0 0.0
        %2944 = vmatpush1.msra.mxu0 0.0
        %2945 = vmatprep.subr.mxu0 0.0
        %2946 = vmatpush1.msra.mxu0 0.0
        %2947 = vmatprep.subr.mxu0 0.0
        %2948 = vmatpush1.msra.mxu0 0.0
        %2949 = vmatprep.subr.mxu0 0.0
        %2950 = vmatpush1.msra.mxu0 0.0
        %2951 = vmatprep.subr.mxu0 0.0
        %2952 = vmatpush1.msra.mxu0 0.0
        %2953 = vmatprep.subr.mxu0 0.0
        %2954 = vmatpush1.msra.mxu0 0.0
        %2955 = vmatprep.subr.mxu0 0.0
        %2956 = vmatpush1.msra.mxu0 0.0
        %2957 = vmatprep.mubr.f32.mxu0 0.0
        %2958 = vmatmul.mubr.f32.gmra.mrb[0].mxu0 %v2891
        %v2959 = vpop.f32.mrb[0].mxu0
        %v2960 = vadd.f32 %v2888, %v2959
        %v2961 = vpop.f32.mrb[0].mxu0
        %2962 = vdwg.mxu0
        %v2963 = vmax.f32 %v2960, 0.0
        %v2964 = vld [vmem:[%s19] sm:$0xff]
        %v2965 = vld [vmem:[%s19 + $0x8] sm:$0xff]
        %v2966 = vld [vmem:[%s19 + $0x10] sm:$0xff]
        %v2967 = vld [vmem:[%s19 + $0x18] sm:$0xff]
        %v2968 = vld [vmem:[%s19 + $0x20] sm:$0xff]
        %v2969 = vld [vmem:[%s19 + $0x28] sm:$0xff]
        %v2970 = vld [vmem:[%s19 + $0x30] sm:$0xff]
        %v2971 = vld [vmem:[%s19 + $0x38] sm:$0xff]
        %v2972 = vld [vmem:[%s19 + $0x40] sm:$0xff]
        %v2973 = vld [vmem:[%s19 + $0x48] sm:$0xff]
        %v2974 = vld [vmem:[%s19 + $0x50] sm:$0xff]
        %v2975 = vld [vmem:[%s19 + $0x58] sm:$0xff]
        %v2976 = vld [vmem:[%s19 + $0x60] sm:$0xff]
        %v2977 = vld [vmem:[%s19 + $0x68] sm:$0xff]
        %v2978 = vld [vmem:[%s19 + $0x70] sm:$0xff]
        %v2979 = vld [vmem:[%s19 + $0x78] sm:$0xff]
        %v2980 = vld [vmem:[%s20] sm:$0x1]
        %v2982 = vlaneseq
        %v2983 = vshrl.u32 %v2982, 7
        %v2984 = vsub.s32 0, %v2983
        %v2985 = vrot.slane %v2980, %v2984
        %2987 = vmatprep.subr.mxu0 0.0
        %2988 = vmatpush1.msra.mxu0 %v2964
        %2989 = vmatprep.subr.mxu0 0.0
        %2990 = vmatpush1.msra.mxu0 %v2965
        %2991 = vmatprep.subr.mxu0 0.0
        %2992 = vmatpush1.msra.mxu0 %v2966
        %2993 = vmatprep.subr.mxu0 0.0
        %2994 = vmatpush1.msra.mxu0 %v2967
        %2995 = vmatprep.subr.mxu0 0.0
        %2996 = vmatpush1.msra.mxu0 %v2968
        %2997 = vmatprep.subr.mxu0 0.0
        %2998 = vmatpush1.msra.mxu0 %v2969
        %2999 = vmatprep.subr.mxu0 0.0
        %3000 = vmatpush1.msra.mxu0 %v2970
        %3001 = vmatprep.subr.mxu0 0.0
        %3002 = vmatpush1.msra.mxu0 %v2971
        %3003 = vmatprep.subr.mxu0 0.0
        %3004 = vmatpush1.msra.mxu0 %v2972
        %3005 = vmatprep.subr.mxu0 0.0
        %3006 = vmatpush1.msra.mxu0 %v2973
        %3007 = vmatprep.subr.mxu0 0.0
        %3008 = vmatpush1.msra.mxu0 %v2974
        %3009 = vmatprep.subr.mxu0 0.0
        %3010 = vmatpush1.msra.mxu0 %v2975
        %3011 = vmatprep.subr.mxu0 0.0
        %3012 = vmatpush1.msra.mxu0 %v2976
        %3013 = vmatprep.subr.mxu0 0.0
        %3014 = vmatpush1.msra.mxu0 %v2977
        %3015 = vmatprep.subr.mxu0 0.0
        %3016 = vmatpush1.msra.mxu0 %v2978
        %3017 = vmatprep.subr.mxu0 0.0
        %3018 = vmatpush1.msra.mxu0 %v2979
        %3019 = vmatprep.subr.mxu0 0.0
        %3020 = vmatpush1.msra.mxu0 0.0
        %3021 = vmatprep.subr.mxu0 0.0
        %3022 = vmatpush1.msra.mxu0 0.0
        %3023 = vmatprep.subr.mxu0 0.0
        %3024 = vmatpush1.msra.mxu0 0.0
        %3025 = vmatprep.subr.mxu0 0.0
        %3026 = vmatpush1.msra.mxu0 0.0
        %3027 = vmatprep.subr.mxu0 0.0
        %3028 = vmatpush1.msra.mxu0 0.0
        %3029 = vmatprep.subr.mxu0 0.0
        %3030 = vmatpush1.msra.mxu0 0.0
        %3031 = vmatprep.subr.mxu0 0.0
        %3032 = vmatpush1.msra.mxu0 0.0
        %3033 = vmatprep.subr.mxu0 0.0
        %3034 = vmatpush1.msra.mxu0 0.0
        %3035 = vmatprep.subr.mxu0 0.0
        %3036 = vmatpush1.msra.mxu0 0.0
        %3037 = vmatprep.subr.mxu0 0.0
        %3038 = vmatpush1.msra.mxu0 0.0
        %3039 = vmatprep.subr.mxu0 0.0
        %3040 = vmatpush1.msra.mxu0 0.0
        %3041 = vmatprep.subr.mxu0 0.0
        %3042 = vmatpush1.msra.mxu0 0.0
        %3043 = vmatprep.subr.mxu0 0.0
        %3044 = vmatpush1.msra.mxu0 0.0
        %3045 = vmatprep.subr.mxu0 0.0
        %3046 = vmatpush1.msra.mxu0 0.0
        %3047 = vmatprep.subr.mxu0 0.0
        %3048 = vmatpush1.msra.mxu0 0.0
        %3049 = vmatprep.subr.mxu0 0.0
        %3050 = vmatpush1.msra.mxu0 0.0
        %3051 = vmatprep.mubr.f32.mxu0 0.0
        %3052 = vmatmul.mubr.f32.gmra.mrb[0].mxu0 %v2963
        %v3053 = vpop.f32.mrb[0].mxu0
        %v3054 = vadd.f32 %v2985, %v3053
        %v3055 = vpop.f32.mrb[0].mxu0
        %3056 = vdwg.mxu0
        %v3057 = vadd.f32 %v3054, %v2878
        %v3058 = vld [vmem:[%s15] sm:$0x1]
        %v3059 = vld [vmem:[%s16] sm:$0x1]
        %v3060 = vsel %vm715, %v3057, 0.0
        %3061 = vadd.xlane.f32.xlu0 %v3060
        %v3062 = vpop.xlane.xlu0 %3061
        %v3063 = vmul.f32 %v3062, %v1765
        %v3064 = vsub.f32 %v3057, %v3063
        %v3065 = vmul.f32 %v3064, %v3064
        %v3066 = vsel %vm715, %v3065, 0.0
        %3067 = vadd.xlane.f32.xlu0 %v3066
        %v3068 = vpop.xlane.xlu0 %3067
        %v3069 = vmul.f32 %v3068, %v1765
        %v3070 = vadd.f32 %v3069, 1e-05
        %v3071 = vrsqrt.pop %v3070
        %v3072 = vmul.f32 %v3064, %v3071
        %v3074 = vlaneseq
        %v3075 = vshrl.u32 %v3074, 7
        %v3076 = vsub.s32 0, %v3075
        %v3077 = vrot.slane %v3058, %v3076
        %v3079 = vmul.f32 %v3072, %v3077
        %v3081 = vlaneseq
        %v3082 = vshrl.u32 %v3081, 7
        %v3083 = vsub.s32 0, %v3082
        %v3084 = vrot.slane %v3059, %v3083
        %v3086 = vadd.f32 %v3079, %v3084
        %3087 = vst.msk [vmem:[%s696] sm:$0xff] %vm715, %v3086
        %s3088 = sand.u32 %s493, 1
        %s3089 = scalar_lea.sflag [#allocation4], %s3088
        %s3090 = sand.u32 %s493, 1
        %s3091 = smul.addr %s3090, 8
        %s3092 = scalar_lea.vmem [#allocation8], %s3091
        // Predicated region
        $region117: #{tpu_custom_call.1} parent=103 // pred_check
          %p3093 = pneg %p503
        $region118: #{tpu_custom_call.1} parent=103 // pred_check_branch
          %3095 = sbr.rel (%p3093) target = $region120
        $region119: #{tpu_custom_call.1} parent=103 // pred_region
          %s3097 = ssub.s32 128, 128
          %3098 = vsyncadd %s3089, %s3097
          %s3099 = smul.addr %s39, 128
          %s3100 = scalar_lea.hbm %s21, %s3099
          %s3102 = sshll.u32 %s3092, 4
          %s3103 = int_to_ptr.vmem [resolvable:$true] %s3102
          %3105 = dma.vmem_to_hbm [thread:$0]  %s3103, 128, %s3100, %s3089
        $region120: #{tpu_custom_call.1} parent=103 // pred_fallthru
          _
      $region104: #{tpu_custom_call.1} parent=5 // pred_fallthru
        _
      %p3106 = scmp.le.s32.totalorder 2, %s34
      // Predicated region
      $region121: #{tpu_custom_call.1} parent=5 // pred_check
        %p3107 = pneg %p3106
      $region122: #{tpu_custom_call.1} parent=5 // pred_check_branch
        %3109 = sbr.rel (%p3107) target = $region124
      $region123: #{tpu_custom_call.1} parent=5 // pred_region
        %s3110 = ssub.s32 %s34, 2
        // Predicated region
        $region125: #{tpu_custom_call.1} parent=123 // pred_check
          %p3111 = pneg %p509
        $region126: #{tpu_custom_call.1} parent=123 // pred_check_branch
          %3113 = sbr.rel (%p3111) target = $region128
        $region127: #{tpu_custom_call.1} parent=123 // pred_region
          %s3114 = sand.u32 %s494, 1
          %s3115 = scalar_lea.sflag [#allocation4], %s3114
          %s3116 = sand.u32 %s494, 1
          %s3117 = smul.addr %s3116, 8
          %s3118 = scalar_lea.vmem [#allocation8], %s3117
          %3119 = dma.done %s3115, 128
        $region128: #{tpu_custom_call.1} parent=123 // pred_fallthru
          _
      $region124: #{tpu_custom_call.1} parent=5 // pred_fallthru
        _
    $region6: #{tpu_custom_call.1} parent=1 // loop_footer
      %s38 = sadd.s32 1, %s34
    $region7: #{tpu_custom_call.1} parent=1 // loop_footer_branch
      %33 = sbr.rel target = $region3
    $region8: #{tpu_custom_call.1} parent=1 // loop_exit
      _
    %3120 = vsyncpa [#allocation3], 1
    %s3121 = scalar_lea.sflag [#allocation3], 1
    %3122 = vsyncpa %s3121, 1
    %3123 = vsyncpa [#allocation6], 1
    %3124 = vsyncpa [#allocation4], 1
    %s3125 = scalar_lea.sflag [#allocation4], 1
    %3126 = vsyncpa %s3125, 1

</llo_original>
